<compile_context>
chip_gen: v7x
topology: tpu7x:2x2x1
jax: 0.10.0
libtpu: 0.0.40
codegen_flags: <defaults>
</compile_context>

<pallas_src>
import functools

import jax
import jax.numpy as jnp
from jax import lax
from jax.experimental import pallas as pl
from jax.experimental.pallas import tpu as pltpu  # noqa: F401  (TPU backend)

# LocalResponseNorm hyper-parameters as set explicitly in FF_gauss_VAE
LRN_SIZE, LRN_ALPHA, LRN_BETA, LRN_K = 5, 1e-3, 0.5, 1.0


# ---------------------------------------------------------------------------
# Pallas kernels
# ---------------------------------------------------------------------------
def _lrn_rows(x, size, alpha, k):
    """PyTorch LocalResponseNorm (beta=0.5) over axis 0 (channels) of (C, M):
       out_c = x_c * rsqrt(k + alpha/size * sum_{|c'-c|<=size//2} x_{c'}^2),
       zero-padded channel window, divisor always `size`."""
    C = x.shape[0]
    sq = x * x
    acc = sq
    for d in range(1, size // 2 + 1):
        zero = jnp.zeros_like(sq[:d, :])
        acc = acc + jnp.concatenate([sq[d:, :], zero], axis=0)       # c' = c + d
        acc = acc + jnp.concatenate([zero, sq[:C - d, :]], axis=0)   # c' = c - d
    return x * lax.rsqrt(k + (alpha / size) * acc)                   # beta=0.5 -> rsqrt (EUP)


def _conv_gemm_kernel(w_ref, pt_ref, b_ref, o_ref, *, relu, lrn, n_blocks):
    """Fused conv-as-GEMM: (N,K) @ (K,M) + bias [+ ReLU] [+ LRN].
       N = C_out (or n_blocks*C_out phase blocks for conv-transpose),
       M = B*OH*OW (lane-dense output)."""
    acc = jnp.dot(w_ref[...], pt_ref[...], preferred_element_type=jnp.float32)
    acc = acc + b_ref[...]                                   # (N,1) broadcast over lanes
    if relu:
        acc = jnp.maximum(acc, 0.0)
    if lrn:
        N = acc.shape[0]
        C = N // n_blocks
        if n_blocks == 1:
            acc = _lrn_rows(acc, LRN_SIZE, LRN_ALPHA, LRN_K)
        else:
            # phase-blocked conv-transpose output: each block is one spatial
            # phase, so the channel window never crosses block boundaries.
            acc = jnp.concatenate(
                [_lrn_rows(acc[i * C:(i + 1) * C, :], LRN_SIZE, LRN_ALPHA, LRN_K)
                 for i in range(n_blocks)],
                axis=0)
    o_ref[...] = acc.astype(o_ref.dtype)


def conv_gemm(w, pt, b, *, relu, lrn, n_blocks=1):
    """One fused conv(-transpose) layer: GEMM + bias + ReLU + LRN epilogue."""
    N, K = w.shape
    K2, M = pt.shape
    assert K == K2 and b.shape == (N, 1)
    cost = pl.CostEstimate(
        flops=2 * N * K * M + 8 * N * M,
        transcendentals=(N * M) if lrn else 0,
        bytes_accessed=4 * (N * K + K * M + 2 * N * M),
    )
    return pl.pallas_call(
        functools.partial(_conv_gemm_kernel, relu=relu, lrn=lrn, n_blocks=n_blocks),
        out_shape=jax.ShapeDtypeStruct((N, M), jnp.float32),
        cost_estimate=cost,
    )(w, pt, b)


def _mlp_reparam_kernel(x_ref, eps_ref,
                        w1e_ref, b1e_ref, w2e_ref, b2e_ref, w3e_ref, b3e_ref,
                        w1d_ref, b1d_ref, w2d_ref, b2d_ref, w3d_ref, b3d_ref,
                        mu_ref, logvar_ref, dec_ref, *, z_dim):
    """enc_l1..l3 -> split mu/logvar -> reparametrize -> dec_l1..l3, fully in VMEM."""
    def lin(h, w_ref, b_ref, relu):
        y = jnp.dot(h, w_ref[...], preferred_element_type=jnp.float32) + b_ref[...]
        return jnp.maximum(y, 0.0) if relu else y

    h = lin(x_ref[...], w1e_ref, b1e_ref, True)
    h = lin(h, w2e_ref, b2e_ref, True)
    dist = lin(h, w3e_ref, b3e_ref, False)
    mu = dist[:, :z_dim]
    logvar = dist[:, z_dim:]
    z = mu + jnp.exp(0.5 * logvar) * eps_ref[...]            # reparametrize_gaussian
    d = lin(z, w1d_ref, b1d_ref, True)
    d = lin(d, w2d_ref, b2d_ref, True)
    d = lin(d, w3d_ref, b3d_ref, True)
    mu_ref[...] = mu
    logvar_ref[...] = logvar
    dec_ref[...] = d


def mlp_reparam(pp, x_flat, eps):
    B = x_flat.shape[0]
    z_dim = eps.shape[1]
    feat = pp["dec_l3_w"].shape[1]
    outs = (jax.ShapeDtypeStruct((B, z_dim), jnp.float32),
            jax.ShapeDtypeStruct((B, z_dim), jnp.float32),
            jax.ShapeDtypeStruct((B, feat), jnp.float32))
    return pl.pallas_call(
        functools.partial(_mlp_reparam_kernel, z_dim=z_dim),
        out_shape=outs,
    )(x_flat, eps,
      pp["enc_l1_w"], pp["enc_l1_b"], pp["enc_l2_w"], pp["enc_l2_b"],
      pp["enc_l3_w"], pp["enc_l3_b"],
      pp["dec_l1_w"], pp["dec_l1_b"], pp["dec_l2_w"], pp["dec_l2_b"],
      pp["dec_l3_w"], pp["dec_l3_b"])


# ---------------------------------------------------------------------------
# Plain-JAX glue (index shuffling only, no compute)
# ---------------------------------------------------------------------------
def _im2col_t(x, kh, kw, stride, pad):
    """x: (B,C,H,W) -> transposed patch matrix (C*kh*kw, B*OH*OW)."""
    B, C, H, W = x.shape
    xp = jnp.pad(x, ((0, 0), (0, 0), (pad, pad), (pad, pad)))
    OH = (H + 2 * pad - kh) // stride + 1
    OW = (W + 2 * pad - kw) // stride + 1
    cols = []
    for i in range(kh):
        for j in range(kw):
            cols.append(xp[:, :, i:i + stride * OH:stride, j:j + stride * OW:stride])
    p = jnp.stack(cols, axis=0)              # (kh*kw, B, C, OH, OW)
    p = p.transpose(2, 0, 1, 3, 4)           # (C, kh*kw, B, OH, OW)
    return p.reshape(C * kh * kw, B * OH * OW)


def _rows_to_image(o, B, OH, OW):
    """(C, B*OH*OW) kernel output -> NCHW image."""
    C = o.shape[0]
    return o.reshape(C, B, OH, OW).transpose(1, 0, 2, 3)


def _phases_to_image(o, c_out, B, H, W):
    """(4*c_out, B*H*W) phase-blocked conv-transpose output -> (B,c_out,2H,2W).
       Row (r*2+c)*c_out+co at column b*H*W+m*W+n holds out[b, co, 2m+r, 2n+c]."""
    o = o.reshape(2, 2, c_out, B, H, W)      # (r, c, co, b, m, n)
    o = o.transpose(3, 2, 4, 0, 5, 1)        # (b, co, m, r, n, c)
    return o.reshape(B, c_out, 2 * H, 2 * W)


# ---------------------------------------------------------------------------
# Parameters: synthetic init in PyTorch layout + one-time GEMM-layout prep
# ---------------------------------------------------------------------------
def init_params(key, z_dim, n_filter, nc):
    keys = iter(jax.random.split(key, 32))

    def conv_w(cout, cin, k):           # torch Conv2d weight (kaiming-ish)
        fan_in = cin * k * k
        return jax.random.normal(next(keys), (cout, cin, k, k), jnp.float32) * jnp.sqrt(2.0 / fan_in)

    def convt_w(cin, cout, k):          # torch ConvTranspose2d weight (default-ish)
        fan = cin * k * k
        return jax.random.normal(next(keys), (cin, cout, k, k), jnp.float32) * jnp.sqrt(1.0 / fan)

    def lin_w(fout, fin):               # torch nn.Linear layout (out, in)
        return jax.random.normal(next(keys), (fout, fin), jnp.float32) * jnp.sqrt(2.0 / fin)

    def bias(n):                        # small random biases so the bias path is exercised
        return 0.05 * jax.random.normal(next(keys), (n,), jnp.float32)

    nf = n_filter
    return {
        "enc_c1_w": conv_w(nf, nc, 4), "enc_c1_b": bias(nf),
        "enc_c2_w": conv_w(nf, nf, 4), "enc_c2_b": bias(nf),
        "enc_c3_w": conv_w(nf, nf, 4), "enc_c3_b": bias(nf),
        "enc_l1_w": lin_w(256, nf * 16), "enc_l1_b": bias(256),
        "enc_l2_w": lin_w(256, 256), "enc_l2_b": bias(256),
        "enc_l3_w": lin_w(2 * z_dim, 256), "enc_l3_b": bias(2 * z_dim),
        "dec_l1_w": lin_w(256, z_dim), "dec_l1_b": bias(256),
        "dec_l2_w": lin_w(256, 256), "dec_l2_b": bias(256),
        "dec_l3_w": lin_w(nf * 16, 256), "dec_l3_b": bias(nf * 16),
        "dec_ct1_w": convt_w(nf, nf, 4), "dec_ct1_b": bias(nf),
        "dec_ct2_w": convt_w(nf, nf, 4), "dec_ct2_b": bias(nf),
        "dec_ct3_w": convt_w(nf, nc, 4), "dec_ct3_b": bias(nc),
    }


def _subpixel_weight(wt):
    """torch ConvTranspose2d weight (Cin,Cout,4,4), stride=2, pad=1 ->
       phase GEMM weight (4*Cout, Cin*9) over 3x3 patches of the (pad=1) input:
       row (r*2+c)*Cout+co, col ci*9+a*3+b = wt[ci, co, r+3-2a, c+3-2b]
       (0 when the tap falls outside the 4x4 kernel)."""
    cin, cout, KH, KW = wt.shape
    blocks = []
    for r in range(2):
        for c in range(2):
            taps = []
            for a in range(3):
                for b in range(3):
                    kh, kw = r + 3 - 2 * a, c + 3 - 2 * b
                    if 0 <= kh < KH and 0 <= kw < KW:
                        taps.append(wt[:, :, kh, kw])           # (Cin, Cout)
                    else:
                        taps.append(jnp.zeros((cin, cout), wt.dtype))
            tap = jnp.stack(taps, axis=0).reshape(3, 3, cin, cout)
            blocks.append(tap.transpose(3, 2, 0, 1).reshape(cout, cin * 9))
    return jnp.concatenate(blocks, axis=0)


def prepare_params(p):
    """One-time re-layout so no weight transpose/flip runs inside the forward."""
    pp = {}
    for name in ("enc_c1", "enc_c2", "enc_c3"):
        w = p[name + "_w"]
        pp[name + "_w"] = w.reshape(w.shape[0], -1)             # (Cout, Cin*16)
        pp[name + "_b"] = p[name + "_b"].reshape(-1, 1)
    for name in ("dec_ct1", "dec_ct2", "dec_ct3"):
        pp[name + "_w"] = _subpixel_weight(p[name + "_w"])      # (4*Cout, Cin*9)
        pp[name + "_b"] = jnp.tile(p[name + "_b"], 4).reshape(-1, 1)
    for name in ("enc_l1", "enc_l2", "enc_l3", "dec_l1", "dec_l2", "dec_l3"):
        pp[name + "_w"] = p[name + "_w"].T                      # (in, out) for x @ W
        pp[name + "_b"] = p[name + "_b"].reshape(1, -1)
    return pp


# ---------------------------------------------------------------------------
# Forward pass: FF_gauss_VAE(z_dim, n_filter, nc, sbd=False), train=True
# ---------------------------------------------------------------------------
def ff_gauss_vae_forward(pp, x, eps):
    B, nc, H, W = x.shape
    nf = pp["enc_c1_w"].shape[0]
    h3, w3 = H // 8, W // 8                                     # 4x4 for 32x32 inputs

    # --- encoder: 3x fused [conv(4,2,1) + ReLU + LRN], lane-dense (Cout, B*OH*OW)
    o = conv_gemm(pp["enc_c1_w"], _im2col_t(x, 4, 4, 2, 1), pp["enc_c1_b"],
                  relu=True, lrn=True)                          # (nf, B*16*16)
    img = _rows_to_image(o, B, H // 2, W // 2)
    o = conv_gemm(pp["enc_c2_w"], _im2col_t(img, 4, 4, 2, 1), pp["enc_c2_b"],
                  relu=True, lrn=True)                          # (nf, B*8*8)
    img = _rows_to_image(o, B, H // 4, W // 4)
    o = conv_gemm(pp["enc_c3_w"], _im2col_t(img, 4, 4, 2, 1), pp["enc_c3_b"],
                  relu=True, lrn=True)                          # (nf, B*4*4)

    # View((-1, nf*4*4)) in NCHW order
    x_flat = o.reshape(nf, B, h3 * w3).transpose(1, 0, 2).reshape(B, nf * h3 * w3)

    # --- fused MLP middle: enc linears -> reparametrize -> dec linears
    mu, logvar, d = mlp_reparam(pp, x_flat, eps)

    # View((-1, nf, 4, 4))
    img = d.reshape(B, nf, h3, w3)

    # --- decoder: 3x fused sub-pixel ConvTranspose(4,2,1) [+ ReLU + LRN]
    o = conv_gemm(pp["dec_ct1_w"], _im2col_t(img, 3, 3, 1, 1), pp["dec_ct1_b"],
                  relu=True, lrn=True, n_blocks=4)              # (4*nf, B*4*4)
    img = _phases_to_image(o, nf, B, h3, w3)                    # (B, nf, 8, 8)
    o = conv_gemm(pp["dec_ct2_w"], _im2col_t(img, 3, 3, 1, 1), pp["dec_ct2_b"],
                  relu=True, lrn=True, n_blocks=4)              # (4*nf, B*8*8)
    img = _phases_to_image(o, nf, B, 2 * h3, 2 * w3)            # (B, nf, 16, 16)
    o = conv_gemm(pp["dec_ct3_w"], _im2col_t(img, 3, 3, 1, 1), pp["dec_ct3_b"],
                  relu=False, lrn=False, n_blocks=4)            # (4*nc, B*16*16)
    x_recon = _phases_to_image(o, nc, B, 4 * h3, 4 * w3)        # (B, nc, 32, 32)

    return x_recon.reshape(x.shape), mu, logvar


# ---------------------------------------------------------------------------
# Pure-JAX/XLA reference of the same module (for validation)
# ---------------------------------------------------------------------------
def reference_forward(p, x, eps):
    z_dim = eps.shape[1]
    nf = p["enc_c1_w"].shape[0]
    P = lax.Precision.HIGHEST

    def lrn(h):
        C = h.shape[1]
        sq = h * h
        acc = sq
        for d in range(1, LRN_SIZE // 2 + 1):
            zero = jnp.zeros_like(sq[:, :d])
            acc = acc + jnp.concatenate([sq[:, d:], zero], axis=1)
            acc = acc + jnp.concatenate([zero, sq[:, :C - d]], axis=1)
        return h * lax.rsqrt(LRN_K + (LRN_ALPHA / LRN_SIZE) * acc)

    def conv(h, w, b, s, pad):
        y = lax.conv_general_dilated(h, w, (s, s), ((pad, pad), (pad, pad)),
                                     dimension_numbers=("NCHW", "OIHW", "NCHW"),
                                     precision=P)
        return y + b.reshape(1, -1, 1, 1)

    def convT(h, wt, b, s, pad):
        k = wt.shape[2]
        w = jnp.flip(wt, (2, 3)).transpose(1, 0, 2, 3)
        y = lax.conv_general_dilated(h, w, (1, 1), ((k - 1 - pad,) * 2,) * 2,
                                     lhs_dilation=(s, s),
                                     dimension_numbers=("NCHW", "OIHW", "NCHW"),
                                     precision=P)
        return y + b.reshape(1, -1, 1, 1)

    def lin(h, w, b, relu):
        y = jnp.dot(h, w.T, precision=P) + b
        return jax.nn.relu(y) if relu else y

    B = x.shape[0]
    h = lrn(jax.nn.relu(conv(x, p["enc_c1_w"], p["enc_c1_b"], 2, 1)))
    h = lrn(jax.nn.relu(conv(h, p["enc_c2_w"], p["enc_c2_b"], 2, 1)))
    h = lrn(jax.nn.relu(conv(h, p["enc_c3_w"], p["enc_c3_b"], 2, 1)))
    h = h.reshape(B, -1)
    h = lin(h, p["enc_l1_w"], p["enc_l1_b"], True)
    h = lin(h, p["enc_l2_w"], p["enc_l2_b"], True)
    dist = lin(h, p["enc_l3_w"], p["enc_l3_b"], False)
    mu, logvar = dist[:, :z_dim], dist[:, z_dim:]
    z = mu + jnp.exp(0.5 * logvar) * eps
    d = lin(z, p["dec_l1_w"], p["dec_l1_b"], True)
    d = lin(d, p["dec_l2_w"], p["dec_l2_b"], True)
    d = lin(d, p["dec_l3_w"], p["dec_l3_b"], True)
    d = d.reshape(B, nf, 4, 4)
    d = lrn(jax.nn.relu(convT(d, p["dec_ct1_w"], p["dec_ct1_b"], 2, 1)))
    d = lrn(jax.nn.relu(convT(d, p["dec_ct2_w"], p["dec_ct2_b"], 2, 1)))
    xr = convT(d, p["dec_ct3_w"], p["dec_ct3_b"], 2, 1)
    return xr.reshape(x.shape), mu, logvar


if __name__ == "__main__":
    key = jax.random.PRNGKey(0)
    pkey, xkey, ekey = jax.random.split(key, 3)

    # encoder topology (3x stride-2 conv -> 4x4, View(nf*4*4)) implies 32x32 inputs
    z_dim, n_filter, nc, B = 8, 32, 1, 2
    params = init_params(pkey, z_dim, n_filter, nc)    # torch-layout synthetic weights
    pparams = prepare_params(params)                   # GEMM-ready layouts, built once

    x = jax.random.normal(xkey, (B, nc, 32, 32), jnp.float32)
    eps = jax.random.normal(ekey, (B, z_dim), jnp.float32)   # reparametrization noise

    fwd = jax.jit(ff_gauss_vae_forward)
    x_recon, mu, logvar = fwd(pparams, x, eps)
    jax.block_until_ready((x_recon, mu, logvar))

    assert x_recon.shape == x.shape
    assert mu.shape == (B, z_dim) and logvar.shape == (B, z_dim)
    assert bool(jnp.all(jnp.isfinite(x_recon)) & jnp.all(jnp.isfinite(mu))
                & jnp.all(jnp.isfinite(logvar)))

    # structural / semantic check against a pure-XLA f32 reference of the module
    xr_ref, mu_ref, lv_ref = jax.jit(reference_forward)(params, x, eps)
    jax.block_until_ready((xr_ref, mu_ref, lv_ref))
    for name, got, ref in (("x_recon", x_recon, xr_ref), ("mu", mu, mu_ref),
                           ("logvar", logvar, lv_ref)):
        err = float(jnp.max(jnp.abs(got - ref)))
        assert err < 5e-2, f"{name} mismatch vs reference: max abs err {err}"

    print("KERNEL_OK")
</pallas_src>

<mosaic_0001>
module attributes {stable_mosaic.version = 11 : i64} {
  func.func @_conv_gemm_kernel(%arg0: memref<32x16xf32, #tpu.memory_space<vmem>>, %arg1: memref<16x512xf32, #tpu.memory_space<vmem>>, %arg2: memref<32x1xf32, #tpu.memory_space<vmem>>, %arg3: memref<32x512xf32, #tpu.memory_space<vmem>>) attributes {dimension_semantics = [], scalar_prefetch = 0 : i64, scratch_operands = 0 : i64, tpu.core_type = #tpu.core_type<tc>} {
    %c0 = arith.constant 0 : index
    %c0_0 = arith.constant 0 : index
    %0 = vector.load %arg0[%c0, %c0_0] : memref<32x16xf32, #tpu.memory_space<vmem>>, vector<32x16xf32>
    %c0_1 = arith.constant 0 : index
    %c0_2 = arith.constant 0 : index
    %1 = vector.load %arg1[%c0_1, %c0_2] : memref<16x512xf32, #tpu.memory_space<vmem>>, vector<16x512xf32>
    %cst = arith.constant dense<0.000000e+00> : vector<32x512xf32>
    %2 = tpu.matmul %0, %1, %cst {dimension_numbers = #tpu.dot_dimension_numbers<[1], [0], [0], [1], [0, 0, 1, 1], [], []>} : vector<32x16xf32>, vector<16x512xf32>, vector<32x512xf32> -> vector<32x512xf32>
    %c0_3 = arith.constant 0 : index
    %c0_4 = arith.constant 0 : index
    %3 = vector.load %arg2[%c0_3, %c0_4] : memref<32x1xf32, #tpu.memory_space<vmem>>, vector<32x1xf32>
    %4 = vector.broadcast %3 : vector<32x1xf32> to vector<32x512xf32>
    %5 = arith.addf %2, %4 : vector<32x512xf32>
    %cst_5 = arith.constant 0.000000e+00 : f32
    %6 = vector.broadcast %cst_5 : f32 to vector<32x512xf32>
    %7 = arith.maximumf %5, %6 : vector<32x512xf32>
    %8 = arith.mulf %7, %7 : vector<32x512xf32>
    %cst_6 = arith.constant 0.000000e+00 : f32
    %9 = vector.broadcast %cst_6 : f32 to vector<1x512xf32>
    %10 = vector.extract_strided_slice %8 {offsets = [1, 0], sizes = [31, 512], strides = [1, 1]} : vector<32x512xf32> to vector<31x512xf32>
    %11 = tpu.concatenate %10, %9 in 0 : vector<31x512xf32>, vector<1x512xf32> -> vector<32x512xf32>
    %12 = arith.addf %8, %11 : vector<32x512xf32>
    %13 = vector.extract_strided_slice %8 {offsets = [0, 0], sizes = [31, 512], strides = [1, 1]} : vector<32x512xf32> to vector<31x512xf32>
    %14 = tpu.concatenate %9, %13 in 0 : vector<1x512xf32>, vector<31x512xf32> -> vector<32x512xf32>
    %15 = arith.addf %12, %14 : vector<32x512xf32>
    %cst_7 = arith.constant 0.000000e+00 : f32
    %16 = vector.broadcast %cst_7 : f32 to vector<2x512xf32>
    %17 = vector.extract_strided_slice %8 {offsets = [2, 0], sizes = [30, 512], strides = [1, 1]} : vector<32x512xf32> to vector<30x512xf32>
    %18 = tpu.concatenate %17, %16 in 0 : vector<30x512xf32>, vector<2x512xf32> -> vector<32x512xf32>
    %19 = arith.addf %15, %18 : vector<32x512xf32>
    %20 = vector.extract_strided_slice %8 {offsets = [0, 0], sizes = [30, 512], strides = [1, 1]} : vector<32x512xf32> to vector<30x512xf32>
    %21 = tpu.concatenate %16, %20 in 0 : vector<2x512xf32>, vector<30x512xf32> -> vector<32x512xf32>
    %22 = arith.addf %19, %21 : vector<32x512xf32>
    %cst_8 = arith.constant 2.000000e-04 : f32
    %23 = vector.broadcast %cst_8 : f32 to vector<32x512xf32>
    %24 = arith.mulf %23, %22 : vector<32x512xf32>
    %cst_9 = arith.constant 1.000000e+00 : f32
    %25 = vector.broadcast %cst_9 : f32 to vector<32x512xf32>
    %26 = arith.addf %25, %24 : vector<32x512xf32>
    %27 = math.rsqrt %26 : vector<32x512xf32>
    %28 = arith.mulf %7, %27 : vector<32x512xf32>
    %c0_10 = arith.constant 0 : index
    %c0_11 = arith.constant 0 : index
    %29 = vector.load %arg3[%c0_10, %c0_11] : memref<32x512xf32, #tpu.memory_space<vmem>>, vector<32x512xf32>
    tpu.vector_store %arg3[%c0_10, %c0_11], %28 {strides = array<i32>} : memref<32x512xf32, #tpu.memory_space<vmem>>, vector<32x512xf32>,
    return
  }
}

module attributes {stable_mosaic.version = 11 : i64} {
  func.func @_conv_gemm_kernel(%arg0: memref<32x512xf32, #tpu.memory_space<vmem>>, %arg1: memref<512x128xf32, #tpu.memory_space<vmem>>, %arg2: memref<32x1xf32, #tpu.memory_space<vmem>>, %arg3: memref<32x128xf32, #tpu.memory_space<vmem>>) attributes {dimension_semantics = [], scalar_prefetch = 0 : i64, scratch_operands = 0 : i64, tpu.core_type = #tpu.core_type<tc>} {
    %c0 = arith.constant 0 : index
    %c0_0 = arith.constant 0 : index
    %0 = vector.load %arg0[%c0, %c0_0] : memref<32x512xf32, #tpu.memory_space<vmem>>, vector<32x512xf32>
    %c0_1 = arith.constant 0 : index
    %c0_2 = arith.constant 0 : index
    %1 = vector.load %arg1[%c0_1, %c0_2] : memref<512x128xf32, #tpu.memory_space<vmem>>, vector<512x128xf32>
    %cst = arith.constant dense<0.000000e+00> : vector<32x128xf32>
    %2 = tpu.matmul %0, %1, %cst {dimension_numbers = #tpu.dot_dimension_numbers<[1], [0], [0], [1], [0, 0, 1, 1], [], []>} : vector<32x512xf32>, vector<512x128xf32>, vector<32x128xf32> -> vector<32x128xf32>
    %c0_3 = arith.constant 0 : index
    %c0_4 = arith.constant 0 : index
    %3 = vector.load %arg2[%c0_3, %c0_4] : memref<32x1xf32, #tpu.memory_space<vmem>>, vector<32x1xf32>
    %4 = vector.broadcast %3 : vector<32x1xf32> to vector<32x128xf32>
    %5 = arith.addf %2, %4 : vector<32x128xf32>
    %cst_5 = arith.constant 0.000000e+00 : f32
    %6 = vector.broadcast %cst_5 : f32 to vector<32x128xf32>
    %7 = arith.maximumf %5, %6 : vector<32x128xf32>
    %8 = arith.mulf %7, %7 : vector<32x128xf32>
    %cst_6 = arith.constant 0.000000e+00 : f32
    %9 = vector.broadcast %cst_6 : f32 to vector<1x128xf32>
    %10 = vector.extract_strided_slice %8 {offsets = [1, 0], sizes = [31, 128], strides = [1, 1]} : vector<32x128xf32> to vector<31x128xf32>
    %11 = tpu.concatenate %10, %9 in 0 : vector<31x128xf32>, vector<1x128xf32> -> vector<32x128xf32>
    %12 = arith.addf %8, %11 : vector<32x128xf32>
    %13 = vector.extract_strided_slice %8 {offsets = [0, 0], sizes = [31, 128], strides = [1, 1]} : vector<32x128xf32> to vector<31x128xf32>
    %14 = tpu.concatenate %9, %13 in 0 : vector<1x128xf32>, vector<31x128xf32> -> vector<32x128xf32>
    %15 = arith.addf %12, %14 : vector<32x128xf32>
    %cst_7 = arith.constant 0.000000e+00 : f32
    %16 = vector.broadcast %cst_7 : f32 to vector<2x128xf32>
    %17 = vector.extract_strided_slice %8 {offsets = [2, 0], sizes = [30, 128], strides = [1, 1]} : vector<32x128xf32> to vector<30x128xf32>
    %18 = tpu.concatenate %17, %16 in 0 : vector<30x128xf32>, vector<2x128xf32> -> vector<32x128xf32>
    %19 = arith.addf %15, %18 : vector<32x128xf32>
    %20 = vector.extract_strided_slice %8 {offsets = [0, 0], sizes = [30, 128], strides = [1, 1]} : vector<32x128xf32> to vector<30x128xf32>
    %21 = tpu.concatenate %16, %20 in 0 : vector<2x128xf32>, vector<30x128xf32> -> vector<32x128xf32>
    %22 = arith.addf %19, %21 : vector<32x128xf32>
    %cst_8 = arith.constant 2.000000e-04 : f32
    %23 = vector.broadcast %cst_8 : f32 to vector<32x128xf32>
    %24 = arith.mulf %23, %22 : vector<32x128xf32>
    %cst_9 = arith.constant 1.000000e+00 : f32
    %25 = vector.broadcast %cst_9 : f32 to vector<32x128xf32>
    %26 = arith.addf %25, %24 : vector<32x128xf32>
    %27 = math.rsqrt %26 : vector<32x128xf32>
    %28 = arith.mulf %7, %27 : vector<32x128xf32>
    %c0_10 = arith.constant 0 : index
    %c0_11 = arith.constant 0 : index
    %29 = vector.load %arg3[%c0_10, %c0_11] : memref<32x128xf32, #tpu.memory_space<vmem>>, vector<32x128xf32>
    tpu.vector_store %arg3[%c0_10, %c0_11], %28 {strides = array<i32>} : memref<32x128xf32, #tpu.memory_space<vmem>>, vector<32x128xf32>,
    return
  }
}

module attributes {stable_mosaic.version = 11 : i64} {
  func.func @_conv_gemm_kernel(%arg0: memref<32x512xf32, #tpu.memory_space<vmem>>, %arg1: memref<512x32xf32, #tpu.memory_space<vmem>>, %arg2: memref<32x1xf32, #tpu.memory_space<vmem>>, %arg3: memref<32x32xf32, #tpu.memory_space<vmem>>) attributes {dimension_semantics = [], scalar_prefetch = 0 : i64, scratch_operands = 0 : i64, tpu.core_type = #tpu.core_type<tc>} {
    %c0 = arith.constant 0 : index
    %c0_0 = arith.constant 0 : index
    %0 = vector.load %arg0[%c0, %c0_0] : memref<32x512xf32, #tpu.memory_space<vmem>>, vector<32x512xf32>
    %c0_1 = arith.constant 0 : index
    %c0_2 = arith.constant 0 : index
    %1 = vector.load %arg1[%c0_1, %c0_2] : memref<512x32xf32, #tpu.memory_space<vmem>>, vector<512x32xf32>
    %cst = arith.constant dense<0.000000e+00> : vector<32x32xf32>
    %2 = tpu.matmul %0, %1, %cst {dimension_numbers = #tpu.dot_dimension_numbers<[1], [0], [0], [1], [0, 0, 1, 1], [], []>} : vector<32x512xf32>, vector<512x32xf32>, vector<32x32xf32> -> vector<32x32xf32>
    %c0_3 = arith.constant 0 : index
    %c0_4 = arith.constant 0 : index
    %3 = vector.load %arg2[%c0_3, %c0_4] : memref<32x1xf32, #tpu.memory_space<vmem>>, vector<32x1xf32>
    %4 = vector.broadcast %3 : vector<32x1xf32> to vector<32x32xf32>
    %5 = arith.addf %2, %4 : vector<32x32xf32>
    %cst_5 = arith.constant 0.000000e+00 : f32
    %6 = vector.broadcast %cst_5 : f32 to vector<32x32xf32>
    %7 = arith.maximumf %5, %6 : vector<32x32xf32>
    %8 = arith.mulf %7, %7 : vector<32x32xf32>
    %cst_6 = arith.constant 0.000000e+00 : f32
    %9 = vector.broadcast %cst_6 : f32 to vector<1x32xf32>
    %10 = vector.extract_strided_slice %8 {offsets = [1, 0], sizes = [31, 32], strides = [1, 1]} : vector<32x32xf32> to vector<31x32xf32>
    %11 = tpu.concatenate %10, %9 in 0 : vector<31x32xf32>, vector<1x32xf32> -> vector<32x32xf32>
    %12 = arith.addf %8, %11 : vector<32x32xf32>
    %13 = vector.extract_strided_slice %8 {offsets = [0, 0], sizes = [31, 32], strides = [1, 1]} : vector<32x32xf32> to vector<31x32xf32>
    %14 = tpu.concatenate %9, %13 in 0 : vector<1x32xf32>, vector<31x32xf32> -> vector<32x32xf32>
    %15 = arith.addf %12, %14 : vector<32x32xf32>
    %cst_7 = arith.constant 0.000000e+00 : f32
    %16 = vector.broadcast %cst_7 : f32 to vector<2x32xf32>
    %17 = vector.extract_strided_slice %8 {offsets = [2, 0], sizes = [30, 32], strides = [1, 1]} : vector<32x32xf32> to vector<30x32xf32>
    %18 = tpu.concatenate %17, %16 in 0 : vector<30x32xf32>, vector<2x32xf32> -> vector<32x32xf32>
    %19 = arith.addf %15, %18 : vector<32x32xf32>
    %20 = vector.extract_strided_slice %8 {offsets = [0, 0], sizes = [30, 32], strides = [1, 1]} : vector<32x32xf32> to vector<30x32xf32>
    %21 = tpu.concatenate %16, %20 in 0 : vector<2x32xf32>, vector<30x32xf32> -> vector<32x32xf32>
    %22 = arith.addf %19, %21 : vector<32x32xf32>
    %cst_8 = arith.constant 2.000000e-04 : f32
    %23 = vector.broadcast %cst_8 : f32 to vector<32x32xf32>
    %24 = arith.mulf %23, %22 : vector<32x32xf32>
    %cst_9 = arith.constant 1.000000e+00 : f32
    %25 = vector.broadcast %cst_9 : f32 to vector<32x32xf32>
    %26 = arith.addf %25, %24 : vector<32x32xf32>
    %27 = math.rsqrt %26 : vector<32x32xf32>
    %28 = arith.mulf %7, %27 : vector<32x32xf32>
    %c0_10 = arith.constant 0 : index
    %c0_11 = arith.constant 0 : index
    %29 = vector.load %arg3[%c0_10, %c0_11] : memref<32x32xf32, #tpu.memory_space<vmem>>, vector<32x32xf32>
    tpu.vector_store %arg3[%c0_10, %c0_11], %28 {strides = array<i32>} : memref<32x32xf32, #tpu.memory_space<vmem>>, vector<32x32xf32>,
    return
  }
}

module attributes {stable_mosaic.version = 11 : i64} {
  func.func @_mlp_reparam_kernel(%arg0: memref<2x512xf32, #tpu.memory_space<vmem>>, %arg1: memref<2x8xf32, #tpu.memory_space<vmem>>, %arg2: memref<512x256xf32, #tpu.memory_space<vmem>>, %arg3: memref<1x256xf32, #tpu.memory_space<vmem>>, %arg4: memref<256x256xf32, #tpu.memory_space<vmem>>, %arg5: memref<1x256xf32, #tpu.memory_space<vmem>>, %arg6: memref<256x16xf32, #tpu.memory_space<vmem>>, %arg7: memref<1x16xf32, #tpu.memory_space<vmem>>, %arg8: memref<8x256xf32, #tpu.memory_space<vmem>>, %arg9: memref<1x256xf32, #tpu.memory_space<vmem>>, %arg10: memref<256x256xf32, #tpu.memory_space<vmem>>, %arg11: memref<1x256xf32, #tpu.memory_space<vmem>>, %arg12: memref<256x512xf32, #tpu.memory_space<vmem>>, %arg13: memref<1x512xf32, #tpu.memory_space<vmem>>, %arg14: memref<2x8xf32, #tpu.memory_space<vmem>>, %arg15: memref<2x8xf32, #tpu.memory_space<vmem>>, %arg16: memref<2x512xf32, #tpu.memory_space<vmem>>) attributes {dimension_semantics = [], scalar_prefetch = 0 : i64, scratch_operands = 0 : i64, tpu.core_type = #tpu.core_type<tc>} {
    %c0 = arith.constant 0 : index
    %c0_0 = arith.constant 0 : index
    %0 = vector.load %arg0[%c0, %c0_0] : memref<2x512xf32, #tpu.memory_space<vmem>>, vector<2x512xf32>
    %c0_1 = arith.constant 0 : index
    %c0_2 = arith.constant 0 : index
    %1 = vector.load %arg2[%c0_1, %c0_2] : memref<512x256xf32, #tpu.memory_space<vmem>>, vector<512x256xf32>
    %cst = arith.constant dense<0.000000e+00> : vector<2x256xf32>
    %2 = tpu.matmul %0, %1, %cst {dimension_numbers = #tpu.dot_dimension_numbers<[1], [0], [0], [1], [0, 0, 1, 1], [], []>} : vector<2x512xf32>, vector<512x256xf32>, vector<2x256xf32> -> vector<2x256xf32>
    %c0_3 = arith.constant 0 : index
    %c0_4 = arith.constant 0 : index
    %3 = vector.load %arg3[%c0_3, %c0_4] : memref<1x256xf32, #tpu.memory_space<vmem>>, vector<1x256xf32>
    %4 = vector.broadcast %3 : vector<1x256xf32> to vector<2x256xf32>
    %5 = arith.addf %2, %4 : vector<2x256xf32>
    %cst_5 = arith.constant 0.000000e+00 : f32
    %6 = vector.broadcast %cst_5 : f32 to vector<2x256xf32>
    %7 = arith.maximumf %5, %6 : vector<2x256xf32>
    %c0_6 = arith.constant 0 : index
    %c0_7 = arith.constant 0 : index
    %8 = vector.load %arg4[%c0_6, %c0_7] : memref<256x256xf32, #tpu.memory_space<vmem>>, vector<256x256xf32>
    %cst_8 = arith.constant dense<0.000000e+00> : vector<2x256xf32>
    %9 = tpu.matmul %7, %8, %cst_8 {dimension_numbers = #tpu.dot_dimension_numbers<[1], [0], [0], [1], [0, 0, 1, 1], [], []>} : vector<2x256xf32>, vector<256x256xf32>, vector<2x256xf32> -> vector<2x256xf32>
    %c0_9 = arith.constant 0 : index
    %c0_10 = arith.constant 0 : index
    %10 = vector.load %arg5[%c0_9, %c0_10] : memref<1x256xf32, #tpu.memory_space<vmem>>, vector<1x256xf32>
    %11 = vector.broadcast %10 : vector<1x256xf32> to vector<2x256xf32>
    %12 = arith.addf %9, %11 : vector<2x256xf32>
    %cst_11 = arith.constant 0.000000e+00 : f32
    %13 = vector.broadcast %cst_11 : f32 to vector<2x256xf32>
    %14 = arith.maximumf %12, %13 : vector<2x256xf32>
    %c0_12 = arith.constant 0 : index
    %c0_13 = arith.constant 0 : index
    %15 = vector.load %arg6[%c0_12, %c0_13] : memref<256x16xf32, #tpu.memory_space<vmem>>, vector<256x16xf32>
    %cst_14 = arith.constant dense<0.000000e+00> : vector<2x16xf32>
    %16 = tpu.matmul %14, %15, %cst_14 {dimension_numbers = #tpu.dot_dimension_numbers<[1], [0], [0], [1], [0, 0, 1, 1], [], []>} : vector<2x256xf32>, vector<256x16xf32>, vector<2x16xf32> -> vector<2x16xf32>
    %c0_15 = arith.constant 0 : index
    %c0_16 = arith.constant 0 : index
    %17 = vector.load %arg7[%c0_15, %c0_16] : memref<1x16xf32, #tpu.memory_space<vmem>>, vector<1x16xf32>
    %18 = vector.broadcast %17 : vector<1x16xf32> to vector<2x16xf32>
    %19 = arith.addf %16, %18 : vector<2x16xf32>
    %20 = vector.extract_strided_slice %19 {offsets = [0, 0], sizes = [2, 8], strides = [1, 1]} : vector<2x16xf32> to vector<2x8xf32>
    %21 = vector.extract_strided_slice %19 {offsets = [0, 8], sizes = [2, 8], strides = [1, 1]} : vector<2x16xf32> to vector<2x8xf32>
    %cst_17 = arith.constant 5.000000e-01 : f32
    %22 = vector.broadcast %cst_17 : f32 to vector<2x8xf32>
    %23 = arith.mulf %22, %21 : vector<2x8xf32>
    %24 = math.exp %23 : vector<2x8xf32>
    %c0_18 = arith.constant 0 : index
    %c0_19 = arith.constant 0 : index
    %25 = vector.load %arg1[%c0_18, %c0_19] : memref<2x8xf32, #tpu.memory_space<vmem>>, vector<2x8xf32>
    %26 = arith.mulf %24, %25 : vector<2x8xf32>
    %27 = arith.addf %20, %26 : vector<2x8xf32>
    %c0_20 = arith.constant 0 : index
    %c0_21 = arith.constant 0 : index
    %28 = vector.load %arg8[%c0_20, %c0_21] : memref<8x256xf32, #tpu.memory_space<vmem>>, vector<8x256xf32>
    %cst_22 = arith.constant dense<0.000000e+00> : vector<2x256xf32>
    %29 = tpu.matmul %27, %28, %cst_22 {dimension_numbers = #tpu.dot_dimension_numbers<[1], [0], [0], [1], [0, 0, 1, 1], [], []>} : vector<2x8xf32>, vector<8x256xf32>, vector<2x256xf32> -> vector<2x256xf32>
    %c0_23 = arith.constant 0 : index
    %c0_24 = arith.constant 0 : index
    %30 = vector.load %arg9[%c0_23, %c0_24] : memref<1x256xf32, #tpu.memory_space<vmem>>, vector<1x256xf32>
    %31 = vector.broadcast %30 : vector<1x256xf32> to vector<2x256xf32>
    %32 = arith.addf %29, %31 : vector<2x256xf32>
    %cst_25 = arith.constant 0.000000e+00 : f32
    %33 = vector.broadcast %cst_25 : f32 to vector<2x256xf32>
    %34 = arith.maximumf %32, %33 : vector<2x256xf32>
    %c0_26 = arith.constant 0 : index
    %c0_27 = arith.constant 0 : index
    %35 = vector.load %arg10[%c0_26, %c0_27] : memref<256x256xf32, #tpu.memory_space<vmem>>, vector<256x256xf32>
    %cst_28 = arith.constant dense<0.000000e+00> : vector<2x256xf32>
    %36 = tpu.matmul %34, %35, %cst_28 {dimension_numbers = #tpu.dot_dimension_numbers<[1], [0], [0], [1], [0, 0, 1, 1], [], []>} : vector<2x256xf32>, vector<256x256xf32>, vector<2x256xf32> -> vector<2x256xf32>
    %c0_29 = arith.constant 0 : index
    %c0_30 = arith.constant 0 : index
    %37 = vector.load %arg11[%c0_29, %c0_30] : memref<1x256xf32, #tpu.memory_space<vmem>>, vector<1x256xf32>
    %38 = vector.broadcast %37 : vector<1x256xf32> to vector<2x256xf32>
    %39 = arith.addf %36, %38 : vector<2x256xf32>
    %cst_31 = arith.constant 0.000000e+00 : f32
    %40 = vector.broadcast %cst_31 : f32 to vector<2x256xf32>
    %41 = arith.maximumf %39, %40 : vector<2x256xf32>
    %c0_32 = arith.constant 0 : index
    %c0_33 = arith.constant 0 : index
    %42 = vector.load %arg12[%c0_32, %c0_33] : memref<256x512xf32, #tpu.memory_space<vmem>>, vector<256x512xf32>
    %cst_34 = arith.constant dense<0.000000e+00> : vector<2x512xf32>
    %43 = tpu.matmul %41, %42, %cst_34 {dimension_numbers = #tpu.dot_dimension_numbers<[1], [0], [0], [1], [0, 0, 1, 1], [], []>} : vector<2x256xf32>, vector<256x512xf32>, vector<2x512xf32> -> vector<2x512xf32>
    %c0_35 = arith.constant 0 : index
    %c0_36 = arith.constant 0 : index
    %44 = vector.load %arg13[%c0_35, %c0_36] : memref<1x512xf32, #tpu.memory_space<vmem>>, vector<1x512xf32>
    %45 = vector.broadcast %44 : vector<1x512xf32> to vector<2x512xf32>
    %46 = arith.addf %43, %45 : vector<2x512xf32>
    %cst_37 = arith.constant 0.000000e+00 : f32
    %47 = vector.broadcast %cst_37 : f32 to vector<2x512xf32>
    %48 = arith.maximumf %46, %47 : vector<2x512xf32>
    %c0_38 = arith.constant 0 : index
    %c0_39 = arith.constant 0 : index
    %49 = vector.load %arg14[%c0_38, %c0_39] : memref<2x8xf32, #tpu.memory_space<vmem>>, vector<2x8xf32>
    tpu.vector_store %arg14[%c0_38, %c0_39], %20 {strides = array<i32>} : memref<2x8xf32, #tpu.memory_space<vmem>>, vector<2x8xf32>,
    %c0_40 = arith.constant 0 : index
    %c0_41 = arith.constant 0 : index
    %50 = vector.load %arg15[%c0_40, %c0_41] : memref<2x8xf32, #tpu.memory_space<vmem>>, vector<2x8xf32>
    tpu.vector_store %arg15[%c0_40, %c0_41], %21 {strides = array<i32>} : memref<2x8xf32, #tpu.memory_space<vmem>>, vector<2x8xf32>,
    %c0_42 = arith.constant 0 : index
    %c0_43 = arith.constant 0 : index
    %51 = vector.load %arg16[%c0_42, %c0_43] : memref<2x512xf32, #tpu.memory_space<vmem>>, vector<2x512xf32>
    tpu.vector_store %arg16[%c0_42, %c0_43], %48 {strides = array<i32>} : memref<2x512xf32, #tpu.memory_space<vmem>>, vector<2x512xf32>,
    return
  }
}

module attributes {stable_mosaic.version = 11 : i64} {
  func.func @_conv_gemm_kernel(%arg0: memref<128x288xf32, #tpu.memory_space<vmem>>, %arg1: memref<288x32xf32, #tpu.memory_space<vmem>>, %arg2: memref<128x1xf32, #tpu.memory_space<vmem>>, %arg3: memref<128x32xf32, #tpu.memory_space<vmem>>) attributes {dimension_semantics = [], scalar_prefetch = 0 : i64, scratch_operands = 0 : i64, tpu.core_type = #tpu.core_type<tc>} {
    %c0 = arith.constant 0 : index
    %c0_0 = arith.constant 0 : index
    %0 = vector.load %arg0[%c0, %c0_0] : memref<128x288xf32, #tpu.memory_space<vmem>>, vector<128x288xf32>
    %c0_1 = arith.constant 0 : index
    %c0_2 = arith.constant 0 : index
    %1 = vector.load %arg1[%c0_1, %c0_2] : memref<288x32xf32, #tpu.memory_space<vmem>>, vector<288x32xf32>
    %cst = arith.constant dense<0.000000e+00> : vector<128x32xf32>
    %2 = tpu.matmul %0, %1, %cst {dimension_numbers = #tpu.dot_dimension_numbers<[1], [0], [0], [1], [0, 0, 1, 1], [], []>} : vector<128x288xf32>, vector<288x32xf32>, vector<128x32xf32> -> vector<128x32xf32>
    %c0_3 = arith.constant 0 : index
    %c0_4 = arith.constant 0 : index
    %3 = vector.load %arg2[%c0_3, %c0_4] : memref<128x1xf32, #tpu.memory_space<vmem>>, vector<128x1xf32>
    %4 = vector.broadcast %3 : vector<128x1xf32> to vector<128x32xf32>
    %5 = arith.addf %2, %4 : vector<128x32xf32>
    %cst_5 = arith.constant 0.000000e+00 : f32
    %6 = vector.broadcast %cst_5 : f32 to vector<128x32xf32>
    %7 = arith.maximumf %5, %6 : vector<128x32xf32>
    %8 = vector.extract_strided_slice %7 {offsets = [0, 0], sizes = [32, 32], strides = [1, 1]} : vector<128x32xf32> to vector<32x32xf32>
    %9 = arith.mulf %8, %8 : vector<32x32xf32>
    %cst_6 = arith.constant 0.000000e+00 : f32
    %10 = vector.broadcast %cst_6 : f32 to vector<1x32xf32>
    %11 = vector.extract_strided_slice %9 {offsets = [1, 0], sizes = [31, 32], strides = [1, 1]} : vector<32x32xf32> to vector<31x32xf32>
    %12 = tpu.concatenate %11, %10 in 0 : vector<31x32xf32>, vector<1x32xf32> -> vector<32x32xf32>
    %13 = arith.addf %9, %12 : vector<32x32xf32>
    %14 = vector.extract_strided_slice %9 {offsets = [0, 0], sizes = [31, 32], strides = [1, 1]} : vector<32x32xf32> to vector<31x32xf32>
    %15 = tpu.concatenate %10, %14 in 0 : vector<1x32xf32>, vector<31x32xf32> -> vector<32x32xf32>
    %16 = arith.addf %13, %15 : vector<32x32xf32>
    %cst_7 = arith.constant 0.000000e+00 : f32
    %17 = vector.broadcast %cst_7 : f32 to vector<2x32xf32>
    %18 = vector.extract_strided_slice %9 {offsets = [2, 0], sizes = [30, 32], strides = [1, 1]} : vector<32x32xf32> to vector<30x32xf32>
    %19 = tpu.concatenate %18, %17 in 0 : vector<30x32xf32>, vector<2x32xf32> -> vector<32x32xf32>
    %20 = arith.addf %16, %19 : vector<32x32xf32>
    %21 = vector.extract_strided_slice %9 {offsets = [0, 0], sizes = [30, 32], strides = [1, 1]} : vector<32x32xf32> to vector<30x32xf32>
    %22 = tpu.concatenate %17, %21 in 0 : vector<2x32xf32>, vector<30x32xf32> -> vector<32x32xf32>
    %23 = arith.addf %20, %22 : vector<32x32xf32>
    %cst_8 = arith.constant 2.000000e-04 : f32
    %24 = vector.broadcast %cst_8 : f32 to vector<32x32xf32>
    %25 = arith.mulf %24, %23 : vector<32x32xf32>
    %cst_9 = arith.constant 1.000000e+00 : f32
    %26 = vector.broadcast %cst_9 : f32 to vector<32x32xf32>
    %27 = arith.addf %26, %25 : vector<32x32xf32>
    %28 = math.rsqrt %27 : vector<32x32xf32>
    %29 = arith.mulf %8, %28 : vector<32x32xf32>
    %30 = vector.extract_strided_slice %7 {offsets = [32, 0], sizes = [32, 32], strides = [1, 1]} : vector<128x32xf32> to vector<32x32xf32>
    %31 = arith.mulf %30, %30 : vector<32x32xf32>
    %cst_10 = arith.constant 0.000000e+00 : f32
    %32 = vector.broadcast %cst_10 : f32 to vector<1x32xf32>
    %33 = vector.extract_strided_slice %31 {offsets = [1, 0], sizes = [31, 32], strides = [1, 1]} : vector<32x32xf32> to vector<31x32xf32>
    %34 = tpu.concatenate %33, %32 in 0 : vector<31x32xf32>, vector<1x32xf32> -> vector<32x32xf32>
    %35 = arith.addf %31, %34 : vector<32x32xf32>
    %36 = vector.extract_strided_slice %31 {offsets = [0, 0], sizes = [31, 32], strides = [1, 1]} : vector<32x32xf32> to vector<31x32xf32>
    %37 = tpu.concatenate %32, %36 in 0 : vector<1x32xf32>, vector<31x32xf32> -> vector<32x32xf32>
    %38 = arith.addf %35, %37 : vector<32x32xf32>
    %cst_11 = arith.constant 0.000000e+00 : f32
    %39 = vector.broadcast %cst_11 : f32 to vector<2x32xf32>
    %40 = vector.extract_strided_slice %31 {offsets = [2, 0], sizes = [30, 32], strides = [1, 1]} : vector<32x32xf32> to vector<30x32xf32>
    %41 = tpu.concatenate %40, %39 in 0 : vector<30x32xf32>, vector<2x32xf32> -> vector<32x32xf32>
    %42 = arith.addf %38, %41 : vector<32x32xf32>
    %43 = vector.extract_strided_slice %31 {offsets = [0, 0], sizes = [30, 32], strides = [1, 1]} : vector<32x32xf32> to vector<30x32xf32>
    %44 = tpu.concatenate %39, %43 in 0 : vector<2x32xf32>, vector<30x32xf32> -> vector<32x32xf32>
    %45 = arith.addf %42, %44 : vector<32x32xf32>
    %cst_12 = arith.constant 2.000000e-04 : f32
    %46 = vector.broadcast %cst_12 : f32 to vector<32x32xf32>
    %47 = arith.mulf %46, %45 : vector<32x32xf32>
    %cst_13 = arith.constant 1.000000e+00 : f32
    %48 = vector.broadcast %cst_13 : f32 to vector<32x32xf32>
    %49 = arith.addf %48, %47 : vector<32x32xf32>
    %50 = math.rsqrt %49 : vector<32x32xf32>
    %51 = arith.mulf %30, %50 : vector<32x32xf32>
    %52 = vector.extract_strided_slice %7 {offsets = [64, 0], sizes = [32, 32], strides = [1, 1]} : vector<128x32xf32> to vector<32x32xf32>
    %53 = arith.mulf %52, %52 : vector<32x32xf32>
    %cst_14 = arith.constant 0.000000e+00 : f32
    %54 = vector.broadcast %cst_14 : f32 to vector<1x32xf32>
    %55 = vector.extract_strided_slice %53 {offsets = [1, 0], sizes = [31, 32], strides = [1, 1]} : vector<32x32xf32> to vector<31x32xf32>
    %56 = tpu.concatenate %55, %54 in 0 : vector<31x32xf32>, vector<1x32xf32> -> vector<32x32xf32>
    %57 = arith.addf %53, %56 : vector<32x32xf32>
    %58 = vector.extract_strided_slice %53 {offsets = [0, 0], sizes = [31, 32], strides = [1, 1]} : vector<32x32xf32> to vector<31x32xf32>
    %59 = tpu.concatenate %54, %58 in 0 : vector<1x32xf32>, vector<31x32xf32> -> vector<32x32xf32>
    %60 = arith.addf %57, %59 : vector<32x32xf32>
    %cst_15 = arith.constant 0.000000e+00 : f32
    %61 = vector.broadcast %cst_15 : f32 to vector<2x32xf32>
    %62 = vector.extract_strided_slice %53 {offsets = [2, 0], sizes = [30, 32], strides = [1, 1]} : vector<32x32xf32> to vector<30x32xf32>
    %63 = tpu.concatenate %62, %61 in 0 : vector<30x32xf32>, vector<2x32xf32> -> vector<32x32xf32>
    %64 = arith.addf %60, %63 : vector<32x32xf32>
    %65 = vector.extract_strided_slice %53 {offsets = [0, 0], sizes = [30, 32], strides = [1, 1]} : vector<32x32xf32> to vector<30x32xf32>
    %66 = tpu.concatenate %61, %65 in 0 : vector<2x32xf32>, vector<30x32xf32> -> vector<32x32xf32>
    %67 = arith.addf %64, %66 : vector<32x32xf32>
    %cst_16 = arith.constant 2.000000e-04 : f32
    %68 = vector.broadcast %cst_16 : f32 to vector<32x32xf32>
    %69 = arith.mulf %68, %67 : vector<32x32xf32>
    %cst_17 = arith.constant 1.000000e+00 : f32
    %70 = vector.broadcast %cst_17 : f32 to vector<32x32xf32>
    %71 = arith.addf %70, %69 : vector<32x32xf32>
    %72 = math.rsqrt %71 : vector<32x32xf32>
    %73 = arith.mulf %52, %72 : vector<32x32xf32>
    %74 = vector.extract_strided_slice %7 {offsets = [96, 0], sizes = [32, 32], strides = [1, 1]} : vector<128x32xf32> to vector<32x32xf32>
    %75 = arith.mulf %74, %74 : vector<32x32xf32>
    %cst_18 = arith.constant 0.000000e+00 : f32
    %76 = vector.broadcast %cst_18 : f32 to vector<1x32xf32>
    %77 = vector.extract_strided_slice %75 {offsets = [1, 0], sizes = [31, 32], strides = [1, 1]} : vector<32x32xf32> to vector<31x32xf32>
    %78 = tpu.concatenate %77, %76 in 0 : vector<31x32xf32>, vector<1x32xf32> -> vector<32x32xf32>
    %79 = arith.addf %75, %78 : vector<32x32xf32>
    %80 = vector.extract_strided_slice %75 {offsets = [0, 0], sizes = [31, 32], strides = [1, 1]} : vector<32x32xf32> to vector<31x32xf32>
    %81 = tpu.concatenate %76, %80 in 0 : vector<1x32xf32>, vector<31x32xf32> -> vector<32x32xf32>
    %82 = arith.addf %79, %81 : vector<32x32xf32>
    %cst_19 = arith.constant 0.000000e+00 : f32
    %83 = vector.broadcast %cst_19 : f32 to vector<2x32xf32>
    %84 = vector.extract_strided_slice %75 {offsets = [2, 0], sizes = [30, 32], strides = [1, 1]} : vector<32x32xf32> to vector<30x32xf32>
    %85 = tpu.concatenate %84, %83 in 0 : vector<30x32xf32>, vector<2x32xf32> -> vector<32x32xf32>
    %86 = arith.addf %82, %85 : vector<32x32xf32>
    %87 = vector.extract_strided_slice %75 {offsets = [0, 0], sizes = [30, 32], strides = [1, 1]} : vector<32x32xf32> to vector<30x32xf32>
    %88 = tpu.concatenate %83, %87 in 0 : vector<2x32xf32>, vector<30x32xf32> -> vector<32x32xf32>
    %89 = arith.addf %86, %88 : vector<32x32xf32>
    %cst_20 = arith.constant 2.000000e-04 : f32
    %90 = vector.broadcast %cst_20 : f32 to vector<32x32xf32>
    %91 = arith.mulf %90, %89 : vector<32x32xf32>
    %cst_21 = arith.constant 1.000000e+00 : f32
    %92 = vector.broadcast %cst_21 : f32 to vector<32x32xf32>
    %93 = arith.addf %92, %91 : vector<32x32xf32>
    %94 = math.rsqrt %93 : vector<32x32xf32>
    %95 = arith.mulf %74, %94 : vector<32x32xf32>
    %96 = tpu.concatenate %29, %51, %73, %95 in 0 : vector<32x32xf32>, vector<32x32xf32>, vector<32x32xf32>, vector<32x32xf32> -> vector<128x32xf32>
    %c0_22 = arith.constant 0 : index
    %c0_23 = arith.constant 0 : index
    %97 = vector.load %arg3[%c0_22, %c0_23] : memref<128x32xf32, #tpu.memory_space<vmem>>, vector<128x32xf32>
    tpu.vector_store %arg3[%c0_22, %c0_23], %96 {strides = array<i32>} : memref<128x32xf32, #tpu.memory_space<vmem>>, vector<128x32xf32>,
    return
  }
}

module attributes {stable_mosaic.version = 11 : i64} {
  func.func @_conv_gemm_kernel(%arg0: memref<128x288xf32, #tpu.memory_space<vmem>>, %arg1: memref<288x128xf32, #tpu.memory_space<vmem>>, %arg2: memref<128x1xf32, #tpu.memory_space<vmem>>, %arg3: memref<128x128xf32, #tpu.memory_space<vmem>>) attributes {dimension_semantics = [], scalar_prefetch = 0 : i64, scratch_operands = 0 : i64, tpu.core_type = #tpu.core_type<tc>} {
    %c0 = arith.constant 0 : index
    %c0_0 = arith.constant 0 : index
    %0 = vector.load %arg0[%c0, %c0_0] : memref<128x288xf32, #tpu.memory_space<vmem>>, vector<128x288xf32>
    %c0_1 = arith.constant 0 : index
    %c0_2 = arith.constant 0 : index
    %1 = vector.load %arg1[%c0_1, %c0_2] : memref<288x128xf32, #tpu.memory_space<vmem>>, vector<288x128xf32>
    %cst = arith.constant dense<0.000000e+00> : vector<128x128xf32>
    %2 = tpu.matmul %0, %1, %cst {dimension_numbers = #tpu.dot_dimension_numbers<[1], [0], [0], [1], [0, 0, 1, 1], [], []>} : vector<128x288xf32>, vector<288x128xf32>, vector<128x128xf32> -> vector<128x128xf32>
    %c0_3 = arith.constant 0 : index
    %c0_4 = arith.constant 0 : index
    %3 = vector.load %arg2[%c0_3, %c0_4] : memref<128x1xf32, #tpu.memory_space<vmem>>, vector<128x1xf32>
    %4 = vector.broadcast %3 : vector<128x1xf32> to vector<128x128xf32>
    %5 = arith.addf %2, %4 : vector<128x128xf32>
    %cst_5 = arith.constant 0.000000e+00 : f32
    %6 = vector.broadcast %cst_5 : f32 to vector<128x128xf32>
    %7 = arith.maximumf %5, %6 : vector<128x128xf32>
    %8 = vector.extract_strided_slice %7 {offsets = [0, 0], sizes = [32, 128], strides = [1, 1]} : vector<128x128xf32> to vector<32x128xf32>
    %9 = arith.mulf %8, %8 : vector<32x128xf32>
    %cst_6 = arith.constant 0.000000e+00 : f32
    %10 = vector.broadcast %cst_6 : f32 to vector<1x128xf32>
    %11 = vector.extract_strided_slice %9 {offsets = [1, 0], sizes = [31, 128], strides = [1, 1]} : vector<32x128xf32> to vector<31x128xf32>
    %12 = tpu.concatenate %11, %10 in 0 : vector<31x128xf32>, vector<1x128xf32> -> vector<32x128xf32>
    %13 = arith.addf %9, %12 : vector<32x128xf32>
    %14 = vector.extract_strided_slice %9 {offsets = [0, 0], sizes = [31, 128], strides = [1, 1]} : vector<32x128xf32> to vector<31x128xf32>
    %15 = tpu.concatenate %10, %14 in 0 : vector<1x128xf32>, vector<31x128xf32> -> vector<32x128xf32>
    %16 = arith.addf %13, %15 : vector<32x128xf32>
    %cst_7 = arith.constant 0.000000e+00 : f32
    %17 = vector.broadcast %cst_7 : f32 to vector<2x128xf32>
    %18 = vector.extract_strided_slice %9 {offsets = [2, 0], sizes = [30, 128], strides = [1, 1]} : vector<32x128xf32> to vector<30x128xf32>
    %19 = tpu.concatenate %18, %17 in 0 : vector<30x128xf32>, vector<2x128xf32> -> vector<32x128xf32>
    %20 = arith.addf %16, %19 : vector<32x128xf32>
    %21 = vector.extract_strided_slice %9 {offsets = [0, 0], sizes = [30, 128], strides = [1, 1]} : vector<32x128xf32> to vector<30x128xf32>
    %22 = tpu.concatenate %17, %21 in 0 : vector<2x128xf32>, vector<30x128xf32> -> vector<32x128xf32>
    %23 = arith.addf %20, %22 : vector<32x128xf32>
    %cst_8 = arith.constant 2.000000e-04 : f32
    %24 = vector.broadcast %cst_8 : f32 to vector<32x128xf32>
    %25 = arith.mulf %24, %23 : vector<32x128xf32>
    %cst_9 = arith.constant 1.000000e+00 : f32
    %26 = vector.broadcast %cst_9 : f32 to vector<32x128xf32>
    %27 = arith.addf %26, %25 : vector<32x128xf32>
    %28 = math.rsqrt %27 : vector<32x128xf32>
    %29 = arith.mulf %8, %28 : vector<32x128xf32>
    %30 = vector.extract_strided_slice %7 {offsets = [32, 0], sizes = [32, 128], strides = [1, 1]} : vector<128x128xf32> to vector<32x128xf32>
    %31 = arith.mulf %30, %30 : vector<32x128xf32>
    %cst_10 = arith.constant 0.000000e+00 : f32
    %32 = vector.broadcast %cst_10 : f32 to vector<1x128xf32>
    %33 = vector.extract_strided_slice %31 {offsets = [1, 0], sizes = [31, 128], strides = [1, 1]} : vector<32x128xf32> to vector<31x128xf32>
    %34 = tpu.concatenate %33, %32 in 0 : vector<31x128xf32>, vector<1x128xf32> -> vector<32x128xf32>
    %35 = arith.addf %31, %34 : vector<32x128xf32>
    %36 = vector.extract_strided_slice %31 {offsets = [0, 0], sizes = [31, 128], strides = [1, 1]} : vector<32x128xf32> to vector<31x128xf32>
    %37 = tpu.concatenate %32, %36 in 0 : vector<1x128xf32>, vector<31x128xf32> -> vector<32x128xf32>
    %38 = arith.addf %35, %37 : vector<32x128xf32>
    %cst_11 = arith.constant 0.000000e+00 : f32
    %39 = vector.broadcast %cst_11 : f32 to vector<2x128xf32>
    %40 = vector.extract_strided_slice %31 {offsets = [2, 0], sizes = [30, 128], strides = [1, 1]} : vector<32x128xf32> to vector<30x128xf32>
    %41 = tpu.concatenate %40, %39 in 0 : vector<30x128xf32>, vector<2x128xf32> -> vector<32x128xf32>
    %42 = arith.addf %38, %41 : vector<32x128xf32>
    %43 = vector.extract_strided_slice %31 {offsets = [0, 0], sizes = [30, 128], strides = [1, 1]} : vector<32x128xf32> to vector<30x128xf32>
    %44 = tpu.concatenate %39, %43 in 0 : vector<2x128xf32>, vector<30x128xf32> -> vector<32x128xf32>
    %45 = arith.addf %42, %44 : vector<32x128xf32>
    %cst_12 = arith.constant 2.000000e-04 : f32
    %46 = vector.broadcast %cst_12 : f32 to vector<32x128xf32>
    %47 = arith.mulf %46, %45 : vector<32x128xf32>
    %cst_13 = arith.constant 1.000000e+00 : f32
    %48 = vector.broadcast %cst_13 : f32 to vector<32x128xf32>
    %49 = arith.addf %48, %47 : vector<32x128xf32>
    %50 = math.rsqrt %49 : vector<32x128xf32>
    %51 = arith.mulf %30, %50 : vector<32x128xf32>
    %52 = vector.extract_strided_slice %7 {offsets = [64, 0], sizes = [32, 128], strides = [1, 1]} : vector<128x128xf32> to vector<32x128xf32>
    %53 = arith.mulf %52, %52 : vector<32x128xf32>
    %cst_14 = arith.constant 0.000000e+00 : f32
    %54 = vector.broadcast %cst_14 : f32 to vector<1x128xf32>
    %55 = vector.extract_strided_slice %53 {offsets = [1, 0], sizes = [31, 128], strides = [1, 1]} : vector<32x128xf32> to vector<31x128xf32>
    %56 = tpu.concatenate %55, %54 in 0 : vector<31x128xf32>, vector<1x128xf32> -> vector<32x128xf32>
    %57 = arith.addf %53, %56 : vector<32x128xf32>
    %58 = vector.extract_strided_slice %53 {offsets = [0, 0], sizes = [31, 128], strides = [1, 1]} : vector<32x128xf32> to vector<31x128xf32>
    %59 = tpu.concatenate %54, %58 in 0 : vector<1x128xf32>, vector<31x128xf32> -> vector<32x128xf32>
    %60 = arith.addf %57, %59 : vector<32x128xf32>
    %cst_15 = arith.constant 0.000000e+00 : f32
    %61 = vector.broadcast %cst_15 : f32 to vector<2x128xf32>
    %62 = vector.extract_strided_slice %53 {offsets = [2, 0], sizes = [30, 128], strides = [1, 1]} : vector<32x128xf32> to vector<30x128xf32>
    %63 = tpu.concatenate %62, %61 in 0 : vector<30x128xf32>, vector<2x128xf32> -> vector<32x128xf32>
    %64 = arith.addf %60, %63 : vector<32x128xf32>
    %65 = vector.extract_strided_slice %53 {offsets = [0, 0], sizes = [30, 128], strides = [1, 1]} : vector<32x128xf32> to vector<30x128xf32>
    %66 = tpu.concatenate %61, %65 in 0 : vector<2x128xf32>, vector<30x128xf32> -> vector<32x128xf32>
    %67 = arith.addf %64, %66 : vector<32x128xf32>
    %cst_16 = arith.constant 2.000000e-04 : f32
    %68 = vector.broadcast %cst_16 : f32 to vector<32x128xf32>
    %69 = arith.mulf %68, %67 : vector<32x128xf32>
    %cst_17 = arith.constant 1.000000e+00 : f32
    %70 = vector.broadcast %cst_17 : f32 to vector<32x128xf32>
    %71 = arith.addf %70, %69 : vector<32x128xf32>
    %72 = math.rsqrt %71 : vector<32x128xf32>
    %73 = arith.mulf %52, %72 : vector<32x128xf32>
    %74 = vector.extract_strided_slice %7 {offsets = [96, 0], sizes = [32, 128], strides = [1, 1]} : vector<128x128xf32> to vector<32x128xf32>
    %75 = arith.mulf %74, %74 : vector<32x128xf32>
    %cst_18 = arith.constant 0.000000e+00 : f32
    %76 = vector.broadcast %cst_18 : f32 to vector<1x128xf32>
    %77 = vector.extract_strided_slice %75 {offsets = [1, 0], sizes = [31, 128], strides = [1, 1]} : vector<32x128xf32> to vector<31x128xf32>
    %78 = tpu.concatenate %77, %76 in 0 : vector<31x128xf32>, vector<1x128xf32> -> vector<32x128xf32>
    %79 = arith.addf %75, %78 : vector<32x128xf32>
    %80 = vector.extract_strided_slice %75 {offsets = [0, 0], sizes = [31, 128], strides = [1, 1]} : vector<32x128xf32> to vector<31x128xf32>
    %81 = tpu.concatenate %76, %80 in 0 : vector<1x128xf32>, vector<31x128xf32> -> vector<32x128xf32>
    %82 = arith.addf %79, %81 : vector<32x128xf32>
    %cst_19 = arith.constant 0.000000e+00 : f32
    %83 = vector.broadcast %cst_19 : f32 to vector<2x128xf32>
    %84 = vector.extract_strided_slice %75 {offsets = [2, 0], sizes = [30, 128], strides = [1, 1]} : vector<32x128xf32> to vector<30x128xf32>
    %85 = tpu.concatenate %84, %83 in 0 : vector<30x128xf32>, vector<2x128xf32> -> vector<32x128xf32>
    %86 = arith.addf %82, %85 : vector<32x128xf32>
    %87 = vector.extract_strided_slice %75 {offsets = [0, 0], sizes = [30, 128], strides = [1, 1]} : vector<32x128xf32> to vector<30x128xf32>
    %88 = tpu.concatenate %83, %87 in 0 : vector<2x128xf32>, vector<30x128xf32> -> vector<32x128xf32>
    %89 = arith.addf %86, %88 : vector<32x128xf32>
    %cst_20 = arith.constant 2.000000e-04 : f32
    %90 = vector.broadcast %cst_20 : f32 to vector<32x128xf32>
    %91 = arith.mulf %90, %89 : vector<32x128xf32>
    %cst_21 = arith.constant 1.000000e+00 : f32
    %92 = vector.broadcast %cst_21 : f32 to vector<32x128xf32>
    %93 = arith.addf %92, %91 : vector<32x128xf32>
    %94 = math.rsqrt %93 : vector<32x128xf32>
    %95 = arith.mulf %74, %94 : vector<32x128xf32>
    %96 = tpu.concatenate %29, %51, %73, %95 in 0 : vector<32x128xf32>, vector<32x128xf32>, vector<32x128xf32>, vector<32x128xf32> -> vector<128x128xf32>
    %c0_22 = arith.constant 0 : index
    %c0_23 = arith.constant 0 : index
    %97 = vector.load %arg3[%c0_22, %c0_23] : memref<128x128xf32, #tpu.memory_space<vmem>>, vector<128x128xf32>
    tpu.vector_store %arg3[%c0_22, %c0_23], %96 {strides = array<i32>} : memref<128x128xf32, #tpu.memory_space<vmem>>, vector<128x128xf32>,
    return
  }
}

module attributes {stable_mosaic.version = 11 : i64} {
  func.func @_conv_gemm_kernel(%arg0: memref<4x288xf32, #tpu.memory_space<vmem>>, %arg1: memref<288x512xf32, #tpu.memory_space<vmem>>, %arg2: memref<4x1xf32, #tpu.memory_space<vmem>>, %arg3: memref<4x512xf32, #tpu.memory_space<vmem>>) attributes {dimension_semantics = [], scalar_prefetch = 0 : i64, scratch_operands = 0 : i64, tpu.core_type = #tpu.core_type<tc>} {
    %c0 = arith.constant 0 : index
    %c0_0 = arith.constant 0 : index
    %0 = vector.load %arg0[%c0, %c0_0] : memref<4x288xf32, #tpu.memory_space<vmem>>, vector<4x288xf32>
    %c0_1 = arith.constant 0 : index
    %c0_2 = arith.constant 0 : index
    %1 = vector.load %arg1[%c0_1, %c0_2] : memref<288x512xf32, #tpu.memory_space<vmem>>, vector<288x512xf32>
    %cst = arith.constant dense<0.000000e+00> : vector<4x512xf32>
    %2 = tpu.matmul %0, %1, %cst {dimension_numbers = #tpu.dot_dimension_numbers<[1], [0], [0], [1], [0, 0, 1, 1], [], []>} : vector<4x288xf32>, vector<288x512xf32>, vector<4x512xf32> -> vector<4x512xf32>
    %c0_3 = arith.constant 0 : index
    %c0_4 = arith.constant 0 : index
    %3 = vector.load %arg2[%c0_3, %c0_4] : memref<4x1xf32, #tpu.memory_space<vmem>>, vector<4x1xf32>
    %4 = vector.broadcast %3 : vector<4x1xf32> to vector<4x512xf32>
    %5 = arith.addf %2, %4 : vector<4x512xf32>
    %c0_5 = arith.constant 0 : index
    %c0_6 = arith.constant 0 : index
    %6 = vector.load %arg3[%c0_5, %c0_6] : memref<4x512xf32, #tpu.memory_space<vmem>>, vector<4x512xf32>
    tpu.vector_store %arg3[%c0_5, %c0_6], %5 {strides = array<i32>} : memref<4x512xf32, #tpu.memory_space<vmem>>, vector<4x512xf32>,
    return
  }
}

</mosaic_0001>

<llo_original>
// kernel: ff_gauss_vae_forward.7
$region0: #{ff_gauss_vae_forward.7}
  #allocation0 [shape = 'u32[]', space=smem, size = 0x4, offset = 0x4, fixed_abs, tag = 'smem constant byte address 0x4 - core index']
  #allocation1 [shape = 'u32[144,128]{1,0:T(1,128)}', space=vmem, size = 0x12000, scoped, tag = 'internal scratch']
  %s0 = inlined_call_operand.vmem [shape: f32[32,16], index: 0, kind: input, shape index: {}]
  %s1 = inlined_call_operand.vmem [shape: f32[16,512], index: 1, kind: input, shape index: {}]
  %s2 = inlined_call_operand.vmem [shape: f32[32,1], index: 2, kind: input, shape index: {}]
  %s3 = inlined_call_operand.vmem [shape: f32[32,512], index: 3, kind: output, shape index: {}]
  %s4 = sld [smem:[#allocation0]]
  $region22: #{ff_gauss_vae_forward.7} parent=0
    _
  %s6 = ssub.s32 1, %s4
  %s7 = scalar_select 0, %s6, %s4
  // Predicated region
  $region2: #{ff_gauss_vae_forward.7} parent=0 // pred_check
    _
  $region3: #{ff_gauss_vae_forward.7} parent=0 // pred_check_branch
    %9 = sbr.rel (0) target = $region5
  $region4: #{ff_gauss_vae_forward.7} parent=0 // pred_region
    _
  $region5: #{ff_gauss_vae_forward.7} parent=0 // pred_fallthru
    _
  // Predicated region
  $region6: #{ff_gauss_vae_forward.7} parent=0 // pred_check
    _
  $region7: #{ff_gauss_vae_forward.7} parent=0 // pred_check_branch
    %11 = sbr.rel (0) target = $region9
  $region8: #{ff_gauss_vae_forward.7} parent=0 // pred_region
    _
  $region9: #{ff_gauss_vae_forward.7} parent=0 // pred_fallthru
    _
  // Predicated region
  $region10: #{ff_gauss_vae_forward.7} parent=0 // pred_check
    _
  $region11: #{ff_gauss_vae_forward.7} parent=0 // pred_check_branch
    %13 = sbr.rel (0) target = $region13
  $region12: #{ff_gauss_vae_forward.7} parent=0 // pred_region
    _
  $region13: #{ff_gauss_vae_forward.7} parent=0 // pred_fallthru
    _
  %v14 = vld [vmem:[%s0] sm:$0xff]
  %v15 = vld [vmem:[%s0 + $0x8] sm:$0xff]
  %v16 = vld [vmem:[%s0 + $0x10] sm:$0xff]
  %v17 = vld [vmem:[%s0 + $0x18] sm:$0xff]
  %v18 = vld [vmem:[%s1] sm:$0xff]
  %v19 = vld [vmem:[%s1 + $0x8] sm:$0xff]
  %v20 = vld [vmem:[%s1 + $0x10] sm:$0xff]
  %v21 = vld [vmem:[%s1 + $0x18] sm:$0xff]
  %v22 = vld [vmem:[%s1 + $0x20] sm:$0xff]
  %v23 = vld [vmem:[%s1 + $0x28] sm:$0xff]
  %v24 = vld [vmem:[%s1 + $0x30] sm:$0xff]
  %v25 = vld [vmem:[%s1 + $0x38] sm:$0xff]
  %v26 = vld [vmem:[%s2] sm:$0xff]
  %v27 = vld [vmem:[%s2 + $0x8] sm:$0xff]
  %v28 = vld [vmem:[%s2 + $0x10] sm:$0xff]
  %v29 = vld [vmem:[%s2 + $0x18] sm:$0xff]
  %31 = vset.pattern.permute.xlu0 0
  %32 = vperm.xlu0 %31, %v26
  %v33 = vpop.permute.xlu0 %32
  %36 = vset.pattern.permute.xlu0 0
  %37 = vperm.xlu0 %36, %v27
  %v38 = vpop.permute.xlu0 %37
  %41 = vset.pattern.permute.xlu0 0
  %42 = vperm.xlu0 %41, %v28
  %v43 = vpop.permute.xlu0 %42
  %46 = vset.pattern.permute.xlu0 0
  %47 = vperm.xlu0 %46, %v29
  %v48 = vpop.permute.xlu0 %47
  %vm50 = vcmask 130048
  %v52 = vsel %vm50, %v14, 0
  %v55 = vsel %vm50, %v15, 0
  %v58 = vsel %vm50, %v16, 0
  %v61 = vsel %vm50, %v17, 0
  %63 = vmatprep.subr.mxu0 %v19
  %64 = vmatpush1.msra.mxu0 %v18
  %65 = vmatprep.subr.mxu0 %v23
  %66 = vmatpush1.msra.mxu0 %v22
  %67 = vmatprep.subr.mxu0 0.0
  %68 = vmatpush1.msra.mxu0 0.0
  %69 = vmatprep.subr.mxu0 0.0
  %70 = vmatpush1.msra.mxu0 0.0
  %71 = vmatprep.subr.mxu0 0.0
  %72 = vmatpush1.msra.mxu0 0.0
  %73 = vmatprep.subr.mxu0 0.0
  %74 = vmatpush1.msra.mxu0 0.0
  %75 = vmatprep.subr.mxu0 0.0
  %76 = vmatpush1.msra.mxu0 0.0
  %77 = vmatprep.subr.mxu0 0.0
  %78 = vmatpush1.msra.mxu0 0.0
  %79 = vmatprep.subr.mxu0 0.0
  %80 = vmatpush1.msra.mxu0 0.0
  %81 = vmatprep.subr.mxu0 0.0
  %82 = vmatpush1.msra.mxu0 0.0
  %83 = vmatprep.subr.mxu0 0.0
  %84 = vmatpush1.msra.mxu0 0.0
  %85 = vmatprep.subr.mxu0 0.0
  %86 = vmatpush1.msra.mxu0 0.0
  %87 = vmatprep.subr.mxu0 0.0
  %88 = vmatpush1.msra.mxu0 0.0
  %89 = vmatprep.subr.mxu0 0.0
  %90 = vmatpush1.msra.mxu0 0.0
  %91 = vmatprep.subr.mxu0 0.0
  %92 = vmatpush1.msra.mxu0 0.0
  %93 = vmatprep.subr.mxu0 0.0
  %94 = vmatpush1.msra.mxu0 0.0
  %95 = vmatprep.subr.mxu0 0.0
  %96 = vmatpush1.msra.mxu0 0.0
  %97 = vmatprep.subr.mxu0 0.0
  %98 = vmatpush1.msra.mxu0 0.0
  %99 = vmatprep.subr.mxu0 0.0
  %100 = vmatpush1.msra.mxu0 0.0
  %101 = vmatprep.subr.mxu0 0.0
  %102 = vmatpush1.msra.mxu0 0.0
  %103 = vmatprep.subr.mxu0 0.0
  %104 = vmatpush1.msra.mxu0 0.0
  %105 = vmatprep.subr.mxu0 0.0
  %106 = vmatpush1.msra.mxu0 0.0
  %107 = vmatprep.subr.mxu0 0.0
  %108 = vmatpush1.msra.mxu0 0.0
  %109 = vmatprep.subr.mxu0 0.0
  %110 = vmatpush1.msra.mxu0 0.0
  %111 = vmatprep.subr.mxu0 0.0
  %112 = vmatpush1.msra.mxu0 0.0
  %113 = vmatprep.subr.mxu0 0.0
  %114 = vmatpush1.msra.mxu0 0.0
  %115 = vmatprep.subr.mxu0 0.0
  %116 = vmatpush1.msra.mxu0 0.0
  %117 = vmatprep.subr.mxu0 0.0
  %118 = vmatpush1.msra.mxu0 0.0
  %119 = vmatprep.subr.mxu0 0.0
  %120 = vmatpush1.msra.mxu0 0.0
  %121 = vmatprep.subr.mxu0 0.0
  %122 = vmatpush1.msra.mxu0 0.0
  %123 = vmatprep.subr.mxu0 0.0
  %124 = vmatpush1.msra.mxu0 0.0
  %125 = vmatprep.subr.mxu0 0.0
  %126 = vmatpush1.msra.mxu0 0.0
  %127 = vmatprep.mubr.f32.mxu0 0.0
  %128 = vmatmul.mubr.f32.gmra.mrb[0].mxu0 %v52
  %v129 = vpop.f32.mrb[0].mxu0
  %v130 = vadd.f32 %v33, %v129
  %v131 = vpop.f32.mrb[0].mxu0
  %v132 = vadd.f32 %v33, %v131
  %133 = vmatprep.mubr.f32.mxu0 0.0
  %134 = vmatmul.mubr.f32.gmra.mrb[0].mxu0 %v55
  %v135 = vpop.f32.mrb[0].mxu0
  %v136 = vadd.f32 %v38, %v135
  %v137 = vpop.f32.mrb[0].mxu0
  %v138 = vadd.f32 %v38, %v137
  %139 = vmatprep.mubr.f32.mxu0 0.0
  %140 = vmatmul.mubr.f32.gmra.mrb[0].mxu0 %v58
  %v141 = vpop.f32.mrb[0].mxu0
  %v142 = vadd.f32 %v43, %v141
  %v143 = vpop.f32.mrb[0].mxu0
  %v144 = vadd.f32 %v43, %v143
  %145 = vmatprep.mubr.f32.mxu0 0.0
  %146 = vmatmul.mubr.f32.gmra.mrb[0].mxu0 %v61
  %v147 = vpop.f32.mrb[0].mxu0
  %v148 = vadd.f32 %v48, %v147
  %v149 = vpop.f32.mrb[0].mxu0
  %v150 = vadd.f32 %v48, %v149
  %151 = vdwg.mxu0
  %152 = vmatprep.subr.mxu0 %v21
  %153 = vmatpush1.msra.mxu0 %v20
  %154 = vmatprep.subr.mxu0 %v25
  %155 = vmatpush1.msra.mxu0 %v24
  %156 = vmatprep.subr.mxu0 0.0
  %157 = vmatpush1.msra.mxu0 0.0
  %158 = vmatprep.subr.mxu0 0.0
  %159 = vmatpush1.msra.mxu0 0.0
  %160 = vmatprep.subr.mxu0 0.0
  %161 = vmatpush1.msra.mxu0 0.0
  %162 = vmatprep.subr.mxu0 0.0
  %163 = vmatpush1.msra.mxu0 0.0
  %164 = vmatprep.subr.mxu0 0.0
  %165 = vmatpush1.msra.mxu0 0.0
  %166 = vmatprep.subr.mxu0 0.0
  %167 = vmatpush1.msra.mxu0 0.0
  %168 = vmatprep.subr.mxu0 0.0
  %169 = vmatpush1.msra.mxu0 0.0
  %170 = vmatprep.subr.mxu0 0.0
  %171 = vmatpush1.msra.mxu0 0.0
  %172 = vmatprep.subr.mxu0 0.0
  %173 = vmatpush1.msra.mxu0 0.0
  %174 = vmatprep.subr.mxu0 0.0
  %175 = vmatpush1.msra.mxu0 0.0
  %176 = vmatprep.subr.mxu0 0.0
  %177 = vmatpush1.msra.mxu0 0.0
  %178 = vmatprep.subr.mxu0 0.0
  %179 = vmatpush1.msra.mxu0 0.0
  %180 = vmatprep.subr.mxu0 0.0
  %181 = vmatpush1.msra.mxu0 0.0
  %182 = vmatprep.subr.mxu0 0.0
  %183 = vmatpush1.msra.mxu0 0.0
  %184 = vmatprep.subr.mxu0 0.0
  %185 = vmatpush1.msra.mxu0 0.0
  %186 = vmatprep.subr.mxu0 0.0
  %187 = vmatpush1.msra.mxu0 0.0
  %188 = vmatprep.subr.mxu0 0.0
  %189 = vmatpush1.msra.mxu0 0.0
  %190 = vmatprep.subr.mxu0 0.0
  %191 = vmatpush1.msra.mxu0 0.0
  %192 = vmatprep.subr.mxu0 0.0
  %193 = vmatpush1.msra.mxu0 0.0
  %194 = vmatprep.subr.mxu0 0.0
  %195 = vmatpush1.msra.mxu0 0.0
  %196 = vmatprep.subr.mxu0 0.0
  %197 = vmatpush1.msra.mxu0 0.0
  %198 = vmatprep.subr.mxu0 0.0
  %199 = vmatpush1.msra.mxu0 0.0
  %200 = vmatprep.subr.mxu0 0.0
  %201 = vmatpush1.msra.mxu0 0.0
  %202 = vmatprep.subr.mxu0 0.0
  %203 = vmatpush1.msra.mxu0 0.0
  %204 = vmatprep.subr.mxu0 0.0
  %205 = vmatpush1.msra.mxu0 0.0
  %206 = vmatprep.subr.mxu0 0.0
  %207 = vmatpush1.msra.mxu0 0.0
  %208 = vmatprep.subr.mxu0 0.0
  %209 = vmatpush1.msra.mxu0 0.0
  %210 = vmatprep.subr.mxu0 0.0
  %211 = vmatpush1.msra.mxu0 0.0
  %212 = vmatprep.subr.mxu0 0.0
  %213 = vmatpush1.msra.mxu0 0.0
  %214 = vmatprep.subr.mxu0 0.0
  %215 = vmatpush1.msra.mxu0 0.0
  %216 = vmatprep.mubr.f32.mxu0 0.0
  %217 = vmatmul.mubr.f32.gmra.mrb[0].mxu0 %v52
  %v218 = vpop.f32.mrb[0].mxu0
  %v219 = vadd.f32 %v33, %v218
  %v220 = vpop.f32.mrb[0].mxu0
  %v221 = vadd.f32 %v33, %v220
  %222 = vmatprep.mubr.f32.mxu0 0.0
  %223 = vmatmul.mubr.f32.gmra.mrb[0].mxu0 %v55
  %v224 = vpop.f32.mrb[0].mxu0
  %v225 = vadd.f32 %v38, %v224
  %v226 = vpop.f32.mrb[0].mxu0
  %v227 = vadd.f32 %v38, %v226
  %228 = vmatprep.mubr.f32.mxu0 0.0
  %229 = vmatmul.mubr.f32.gmra.mrb[0].mxu0 %v58
  %v230 = vpop.f32.mrb[0].mxu0
  %v231 = vadd.f32 %v43, %v230
  %v232 = vpop.f32.mrb[0].mxu0
  %v233 = vadd.f32 %v43, %v232
  %234 = vmatprep.mubr.f32.mxu0 0.0
  %235 = vmatmul.mubr.f32.gmra.mrb[0].mxu0 %v61
  %v236 = vpop.f32.mrb[0].mxu0
  %v237 = vadd.f32 %v48, %v236
  %v238 = vpop.f32.mrb[0].mxu0
  %v239 = vadd.f32 %v48, %v238
  %240 = vdwg.mxu0
  %v241 = vmax.f32 %v130, 0.0
  %v242 = vmax.f32 %v132, 0.0
  %v243 = vmax.f32 %v219, 0.0
  %v244 = vmax.f32 %v221, 0.0
  %v245 = vmax.f32 %v136, 0.0
  %v246 = vmax.f32 %v138, 0.0
  %v247 = vmax.f32 %v225, 0.0
  %v248 = vmax.f32 %v227, 0.0
  %v249 = vmax.f32 %v142, 0.0
  %v250 = vmax.f32 %v144, 0.0
  %v251 = vmax.f32 %v231, 0.0
  %v252 = vmax.f32 %v233, 0.0
  %v253 = vmax.f32 %v148, 0.0
  %v254 = vmax.f32 %v150, 0.0
  %v255 = vmax.f32 %v237, 0.0
  %v256 = vmax.f32 %v239, 0.0
  %v257 = vmul.f32 %v241, %v241
  %v258 = vmul.f32 %v242, %v242
  %v259 = vmul.f32 %v243, %v243
  %v260 = vmul.f32 %v244, %v244
  %v261 = vmul.f32 %v245, %v245
  %v262 = vmul.f32 %v246, %v246
  %v263 = vmul.f32 %v247, %v247
  %v264 = vmul.f32 %v248, %v248
  %v265 = vmul.f32 %v249, %v249
  %v266 = vmul.f32 %v250, %v250
  %v267 = vmul.f32 %v251, %v251
  %v268 = vmul.f32 %v252, %v252
  %v269 = vmul.f32 %v253, %v253
  %v270 = vmul.f32 %v254, %v254
  %v271 = vmul.f32 %v255, %v255
  %v272 = vmul.f32 %v256, %v256
  %vm289 = vcmask 1046528
  %v290 = vrot.slane %v257, 1
  %v291 = vrot.slane %v261, 1
  %v292 = vsel %vm289, %v290, %v291
  %v293 = vrot.slane %v258, 1
  %v294 = vrot.slane %v262, 1
  %v295 = vsel %vm289, %v293, %v294
  %v296 = vrot.slane %v259, 1
  %v297 = vrot.slane %v263, 1
  %v298 = vsel %vm289, %v296, %v297
  %v299 = vrot.slane %v260, 1
  %v300 = vrot.slane %v264, 1
  %v301 = vsel %vm289, %v299, %v300
  %v302 = vrot.slane %v265, 1
  %v303 = vsel %vm289, %v291, %v302
  %v304 = vrot.slane %v266, 1
  %v305 = vsel %vm289, %v294, %v304
  %v306 = vrot.slane %v267, 1
  %v307 = vsel %vm289, %v297, %v306
  %v308 = vrot.slane %v268, 1
  %v309 = vsel %vm289, %v300, %v308
  %v310 = vrot.slane %v269, 1
  %v311 = vsel %vm289, %v302, %v310
  %v312 = vrot.slane %v270, 1
  %v313 = vsel %vm289, %v304, %v312
  %v314 = vrot.slane %v271, 1
  %v315 = vsel %vm289, %v306, %v314
  %v316 = vrot.slane %v272, 1
  %v317 = vsel %vm289, %v308, %v316
  %v334 = vsel %vm289, %v310, 0.0
  %v335 = vsel %vm289, %v312, 0.0
  %v336 = vsel %vm289, %v314, 0.0
  %v337 = vsel %vm289, %v316, 0.0
  %v338 = vadd.f32 %v257, %v292
  %v339 = vadd.f32 %v258, %v295
  %v340 = vadd.f32 %v259, %v298
  %v341 = vadd.f32 %v260, %v301
  %v342 = vadd.f32 %v261, %v303
  %v343 = vadd.f32 %v262, %v305
  %v344 = vadd.f32 %v263, %v307
  %v345 = vadd.f32 %v264, %v309
  %v346 = vadd.f32 %v265, %v311
  %v347 = vadd.f32 %v266, %v313
  %v348 = vadd.f32 %v267, %v315
  %v349 = vadd.f32 %v268, %v317
  %v350 = vadd.f32 %v269, %v334
  %v351 = vadd.f32 %v270, %v335
  %v352 = vadd.f32 %v271, %v336
  %v353 = vadd.f32 %v272, %v337
  %vm354 = vcmask 1040384
  %v355 = vrot.slane %v257, 7
  %v356 = vrot.slane %v258, 7
  %v357 = vrot.slane %v259, 7
  %v358 = vrot.slane %v260, 7
  %v359 = vrot.slane %v261, 7
  %v360 = vsel %vm354, %v355, %v359
  %v361 = vrot.slane %v262, 7
  %v362 = vsel %vm354, %v356, %v361
  %v363 = vrot.slane %v263, 7
  %v364 = vsel %vm354, %v357, %v363
  %v365 = vrot.slane %v264, 7
  %v366 = vsel %vm354, %v358, %v365
  %v367 = vrot.slane %v265, 7
  %v368 = vsel %vm354, %v359, %v367
  %v369 = vrot.slane %v266, 7
  %v370 = vsel %vm354, %v361, %v369
  %v371 = vrot.slane %v267, 7
  %v372 = vsel %vm354, %v363, %v371
  %v373 = vrot.slane %v268, 7
  %v374 = vsel %vm354, %v365, %v373
  %v375 = vrot.slane %v269, 7
  %v376 = vsel %vm354, %v367, %v375
  %v377 = vrot.slane %v270, 7
  %v378 = vsel %vm354, %v369, %v377
  %v379 = vrot.slane %v271, 7
  %v380 = vsel %vm354, %v371, %v379
  %v381 = vrot.slane %v272, 7
  %v382 = vsel %vm354, %v373, %v381
  %v399 = vsel %vm354, 0.0, %v355
  %v400 = vsel %vm354, 0.0, %v356
  %v401 = vsel %vm354, 0.0, %v357
  %v402 = vsel %vm354, 0.0, %v358
  %v403 = vadd.f32 %v338, %v399
  %v404 = vadd.f32 %v339, %v400
  %v405 = vadd.f32 %v340, %v401
  %v406 = vadd.f32 %v341, %v402
  %v407 = vadd.f32 %v342, %v360
  %v408 = vadd.f32 %v343, %v362
  %v409 = vadd.f32 %v344, %v364
  %v410 = vadd.f32 %v345, %v366
  %v411 = vadd.f32 %v346, %v368
  %v412 = vadd.f32 %v347, %v370
  %v413 = vadd.f32 %v348, %v372
  %v414 = vadd.f32 %v349, %v374
  %v415 = vadd.f32 %v350, %v376
  %v416 = vadd.f32 %v351, %v378
  %v417 = vadd.f32 %v352, %v380
  %v418 = vadd.f32 %v353, %v382
  %vm419 = vcmask 1045504
  %v420 = vrot.slane %v257, 2
  %v421 = vrot.slane %v261, 2
  %v422 = vsel %vm419, %v420, %v421
  %v423 = vrot.slane %v258, 2
  %v424 = vrot.slane %v262, 2
  %v425 = vsel %vm419, %v423, %v424
  %v426 = vrot.slane %v259, 2
  %v427 = vrot.slane %v263, 2
  %v428 = vsel %vm419, %v426, %v427
  %v429 = vrot.slane %v260, 2
  %v430 = vrot.slane %v264, 2
  %v431 = vsel %vm419, %v429, %v430
  %v432 = vrot.slane %v265, 2
  %v433 = vsel %vm419, %v421, %v432
  %v434 = vrot.slane %v266, 2
  %v435 = vsel %vm419, %v424, %v434
  %v436 = vrot.slane %v267, 2
  %v437 = vsel %vm419, %v427, %v436
  %v438 = vrot.slane %v268, 2
  %v439 = vsel %vm419, %v430, %v438
  %v440 = vrot.slane %v269, 2
  %v441 = vsel %vm419, %v432, %v440
  %v442 = vrot.slane %v270, 2
  %v443 = vsel %vm419, %v434, %v442
  %v444 = vrot.slane %v271, 2
  %v445 = vsel %vm419, %v436, %v444
  %v446 = vrot.slane %v272, 2
  %v447 = vsel %vm419, %v438, %v446
  %v464 = vsel %vm419, %v440, 0.0
  %v465 = vsel %vm419, %v442, 0.0
  %v466 = vsel %vm419, %v444, 0.0
  %v467 = vsel %vm419, %v446, 0.0
  %v468 = vadd.f32 %v403, %v422
  %v469 = vadd.f32 %v404, %v425
  %v470 = vadd.f32 %v405, %v428
  %v471 = vadd.f32 %v406, %v431
  %v472 = vadd.f32 %v407, %v433
  %v473 = vadd.f32 %v408, %v435
  %v474 = vadd.f32 %v409, %v437
  %v475 = vadd.f32 %v410, %v439
  %v476 = vadd.f32 %v411, %v441
  %v477 = vadd.f32 %v412, %v443
  %v478 = vadd.f32 %v413, %v445
  %v479 = vadd.f32 %v414, %v447
  %v480 = vadd.f32 %v415, %v464
  %v481 = vadd.f32 %v416, %v465
  %v482 = vadd.f32 %v417, %v466
  %v483 = vadd.f32 %v418, %v467
  %vm484 = vcmask 1041408
  %v485 = vrot.slane %v257, 6
  %v486 = vrot.slane %v258, 6
  %v487 = vrot.slane %v259, 6
  %v488 = vrot.slane %v260, 6
  %v489 = vrot.slane %v261, 6
  %v490 = vsel %vm484, %v485, %v489
  %v491 = vrot.slane %v262, 6
  %v492 = vsel %vm484, %v486, %v491
  %v493 = vrot.slane %v263, 6
  %v494 = vsel %vm484, %v487, %v493
  %v495 = vrot.slane %v264, 6
  %v496 = vsel %vm484, %v488, %v495
  %v497 = vrot.slane %v265, 6
  %v498 = vsel %vm484, %v489, %v497
  %v499 = vrot.slane %v266, 6
  %v500 = vsel %vm484, %v491, %v499
  %v501 = vrot.slane %v267, 6
  %v502 = vsel %vm484, %v493, %v501
  %v503 = vrot.slane %v268, 6
  %v504 = vsel %vm484, %v495, %v503
  %v505 = vrot.slane %v269, 6
  %v506 = vsel %vm484, %v497, %v505
  %v507 = vrot.slane %v270, 6
  %v508 = vsel %vm484, %v499, %v507
  %v509 = vrot.slane %v271, 6
  %v510 = vsel %vm484, %v501, %v509
  %v511 = vrot.slane %v272, 6
  %v512 = vsel %vm484, %v503, %v511
  %v529 = vsel %vm484, 0.0, %v485
  %v530 = vsel %vm484, 0.0, %v486
  %v531 = vsel %vm484, 0.0, %v487
  %v532 = vsel %vm484, 0.0, %v488
  %v533 = vadd.f32 %v468, %v529
  %v534 = vadd.f32 %v469, %v530
  %v535 = vadd.f32 %v470, %v531
  %v536 = vadd.f32 %v471, %v532
  %v537 = vadd.f32 %v472, %v490
  %v538 = vadd.f32 %v473, %v492
  %v539 = vadd.f32 %v474, %v494
  %v540 = vadd.f32 %v475, %v496
  %v541 = vadd.f32 %v476, %v498
  %v542 = vadd.f32 %v477, %v500
  %v543 = vadd.f32 %v478, %v502
  %v544 = vadd.f32 %v479, %v504
  %v545 = vadd.f32 %v480, %v506
  %v546 = vadd.f32 %v481, %v508
  %v547 = vadd.f32 %v482, %v510
  %v548 = vadd.f32 %v483, %v512
  %v549 = vmul.f32 %v533, 0.0002
  %v550 = vmul.f32 %v534, 0.0002
  %v551 = vmul.f32 %v535, 0.0002
  %v552 = vmul.f32 %v536, 0.0002
  %v553 = vmul.f32 %v537, 0.0002
  %v554 = vmul.f32 %v538, 0.0002
  %v555 = vmul.f32 %v539, 0.0002
  %v556 = vmul.f32 %v540, 0.0002
  %v557 = vmul.f32 %v541, 0.0002
  %v558 = vmul.f32 %v542, 0.0002
  %v559 = vmul.f32 %v543, 0.0002
  %v560 = vmul.f32 %v544, 0.0002
  %v561 = vmul.f32 %v545, 0.0002
  %v562 = vmul.f32 %v546, 0.0002
  %v563 = vmul.f32 %v547, 0.0002
  %v564 = vmul.f32 %v548, 0.0002
  %v565 = vadd.f32 %v549, 1.0
  %v566 = vadd.f32 %v550, 1.0
  %v567 = vadd.f32 %v551, 1.0
  %v568 = vadd.f32 %v552, 1.0
  %v569 = vadd.f32 %v553, 1.0
  %v570 = vadd.f32 %v554, 1.0
  %v571 = vadd.f32 %v555, 1.0
  %v572 = vadd.f32 %v556, 1.0
  %v573 = vadd.f32 %v557, 1.0
  %v574 = vadd.f32 %v558, 1.0
  %v575 = vadd.f32 %v559, 1.0
  %v576 = vadd.f32 %v560, 1.0
  %v577 = vadd.f32 %v561, 1.0
  %v578 = vadd.f32 %v562, 1.0
  %v579 = vadd.f32 %v563, 1.0
  %v580 = vadd.f32 %v564, 1.0
  %v581 = vrsqrt.pop %v565
  %v582 = vrsqrt.pop %v566
  %v583 = vrsqrt.pop %v567
  %v584 = vrsqrt.pop %v568
  %v585 = vrsqrt.pop %v569
  %v586 = vrsqrt.pop %v570
  %v587 = vrsqrt.pop %v571
  %v588 = vrsqrt.pop %v572
  %v589 = vrsqrt.pop %v573
  %v590 = vrsqrt.pop %v574
  %v591 = vrsqrt.pop %v575
  %v592 = vrsqrt.pop %v576
  %v593 = vrsqrt.pop %v577
  %v594 = vrsqrt.pop %v578
  %v595 = vrsqrt.pop %v579
  %v596 = vrsqrt.pop %v580
  %v597 = vmul.f32 %v241, %v581
  %v598 = vmul.f32 %v242, %v582
  %v599 = vmul.f32 %v243, %v583
  %v600 = vmul.f32 %v244, %v584
  %v601 = vmul.f32 %v245, %v585
  %v602 = vmul.f32 %v246, %v586
  %v603 = vmul.f32 %v247, %v587
  %v604 = vmul.f32 %v248, %v588
  %v605 = vmul.f32 %v249, %v589
  %v606 = vmul.f32 %v250, %v590
  %v607 = vmul.f32 %v251, %v591
  %v608 = vmul.f32 %v252, %v592
  %v609 = vmul.f32 %v253, %v593
  %v610 = vmul.f32 %v254, %v594
  %v611 = vmul.f32 %v255, %v595
  %v612 = vmul.f32 %v256, %v596
  %613 = vst [vmem:[%s3] sm:$0xff] %v597
  %614 = vst [vmem:[%s3 + $0x8] sm:$0xff] %v598
  %615 = vst [vmem:[%s3 + $0x10] sm:$0xff] %v599
  %616 = vst [vmem:[%s3 + $0x18] sm:$0xff] %v600
  %617 = vst [vmem:[%s3 + $0x20] sm:$0xff] %v601
  %618 = vst [vmem:[%s3 + $0x28] sm:$0xff] %v602
  %619 = vst [vmem:[%s3 + $0x30] sm:$0xff] %v603
  %620 = vst [vmem:[%s3 + $0x38] sm:$0xff] %v604
  %621 = vst [vmem:[%s3 + $0x40] sm:$0xff] %v605
  %622 = vst [vmem:[%s3 + $0x48] sm:$0xff] %v606
  %623 = vst [vmem:[%s3 + $0x50] sm:$0xff] %v607
  %624 = vst [vmem:[%s3 + $0x58] sm:$0xff] %v608
  %625 = vst [vmem:[%s3 + $0x60] sm:$0xff] %v609
  %626 = vst [vmem:[%s3 + $0x68] sm:$0xff] %v610
  %627 = vst [vmem:[%s3 + $0x70] sm:$0xff] %v611
  %628 = vst [vmem:[%s3 + $0x78] sm:$0xff] %v612
  // Predicated region
  $region14: #{ff_gauss_vae_forward.7} parent=0 // pred_check
    _
  $region15: #{ff_gauss_vae_forward.7} parent=0 // pred_check_branch
    %630 = sbr.rel (0) target = $region17
  $region16: #{ff_gauss_vae_forward.7} parent=0 // pred_region
    _
  $region17: #{ff_gauss_vae_forward.7} parent=0 // pred_fallthru
    _
  // Predicated region
  $region18: #{ff_gauss_vae_forward.7} parent=0 // pred_check
    _
  $region19: #{ff_gauss_vae_forward.7} parent=0 // pred_check_branch
    %632 = sbr.rel (0) target = $region21
  $region20: #{ff_gauss_vae_forward.7} parent=0 // pred_region
    _
  $region21: #{ff_gauss_vae_forward.7} parent=0 // pred_fallthru
    _

// kernel: ff_gauss_vae_forward.8
$region0: #{ff_gauss_vae_forward.8}
  #allocation0 [shape = 'u32[]', space=smem, size = 0x4, offset = 0x4, fixed_abs, tag = 'smem constant byte address 0x4 - core index']
  #allocation1 [shape = 'u32[144,128]{1,0:T(1,128)}', space=vmem, size = 0x12000, scoped, tag = 'internal scratch']
  %s0 = inlined_call_operand.vmem [shape: f32[32,512], index: 0, kind: input, shape index: {}]
  %s1 = inlined_call_operand.vmem [shape: f32[512,128], index: 1, kind: input, shape index: {}]
  %s2 = inlined_call_operand.vmem [shape: f32[32,1], index: 2, kind: input, shape index: {}]
  %s3 = inlined_call_operand.vmem [shape: f32[32,128], index: 3, kind: output, shape index: {}]
  %s4 = sld [smem:[#allocation0]]
  $region22: #{ff_gauss_vae_forward.8} parent=0
    _
  %s6 = ssub.s32 1, %s4
  %s7 = scalar_select 0, %s6, %s4
  // Predicated region
  $region2: #{ff_gauss_vae_forward.8} parent=0 // pred_check
    _
  $region3: #{ff_gauss_vae_forward.8} parent=0 // pred_check_branch
    %9 = sbr.rel (0) target = $region5
  $region4: #{ff_gauss_vae_forward.8} parent=0 // pred_region
    _
  $region5: #{ff_gauss_vae_forward.8} parent=0 // pred_fallthru
    _
  // Predicated region
  $region6: #{ff_gauss_vae_forward.8} parent=0 // pred_check
    _
  $region7: #{ff_gauss_vae_forward.8} parent=0 // pred_check_branch
    %11 = sbr.rel (0) target = $region9
  $region8: #{ff_gauss_vae_forward.8} parent=0 // pred_region
    _
  $region9: #{ff_gauss_vae_forward.8} parent=0 // pred_fallthru
    _
  // Predicated region
  $region10: #{ff_gauss_vae_forward.8} parent=0 // pred_check
    _
  $region11: #{ff_gauss_vae_forward.8} parent=0 // pred_check_branch
    %13 = sbr.rel (0) target = $region13
  $region12: #{ff_gauss_vae_forward.8} parent=0 // pred_region
    _
  $region13: #{ff_gauss_vae_forward.8} parent=0 // pred_fallthru
    _
  %v14 = vld [vmem:[%s0] sm:$0xff]
  %v15 = vld [vmem:[%s0 + $0x8] sm:$0xff]
  %v16 = vld [vmem:[%s0 + $0x10] sm:$0xff]
  %v17 = vld [vmem:[%s0 + $0x18] sm:$0xff]
  %v18 = vld [vmem:[%s0 + $0x20] sm:$0xff]
  %v19 = vld [vmem:[%s0 + $0x28] sm:$0xff]
  %v20 = vld [vmem:[%s0 + $0x30] sm:$0xff]
  %v21 = vld [vmem:[%s0 + $0x38] sm:$0xff]
  %v22 = vld [vmem:[%s0 + $0x40] sm:$0xff]
  %v23 = vld [vmem:[%s0 + $0x48] sm:$0xff]
  %v24 = vld [vmem:[%s0 + $0x50] sm:$0xff]
  %v25 = vld [vmem:[%s0 + $0x58] sm:$0xff]
  %v26 = vld [vmem:[%s0 + $0x60] sm:$0xff]
  %v27 = vld [vmem:[%s0 + $0x68] sm:$0xff]
  %v28 = vld [vmem:[%s0 + $0x70] sm:$0xff]
  %v29 = vld [vmem:[%s0 + $0x78] sm:$0xff]
  %v30 = vld [vmem:[%s1] sm:$0xff]
  %v31 = vld [vmem:[%s1 + $0x8] sm:$0xff]
  %v32 = vld [vmem:[%s1 + $0x10] sm:$0xff]
  %v33 = vld [vmem:[%s1 + $0x18] sm:$0xff]
  %v34 = vld [vmem:[%s1 + $0x20] sm:$0xff]
  %v35 = vld [vmem:[%s1 + $0x28] sm:$0xff]
  %v36 = vld [vmem:[%s1 + $0x30] sm:$0xff]
  %v37 = vld [vmem:[%s1 + $0x38] sm:$0xff]
  %v38 = vld [vmem:[%s1 + $0x40] sm:$0xff]
  %v39 = vld [vmem:[%s1 + $0x48] sm:$0xff]
  %v40 = vld [vmem:[%s1 + $0x50] sm:$0xff]
  %v41 = vld [vmem:[%s1 + $0x58] sm:$0xff]
  %v42 = vld [vmem:[%s1 + $0x60] sm:$0xff]
  %v43 = vld [vmem:[%s1 + $0x68] sm:$0xff]
  %v44 = vld [vmem:[%s1 + $0x70] sm:$0xff]
  %v45 = vld [vmem:[%s1 + $0x78] sm:$0xff]
  %v46 = vld [vmem:[%s1 + $0x80] sm:$0xff]
  %v47 = vld [vmem:[%s1 + $0x88] sm:$0xff]
  %v48 = vld [vmem:[%s1 + $0x90] sm:$0xff]
  %v49 = vld [vmem:[%s1 + $0x98] sm:$0xff]
  %v50 = vld [vmem:[%s1 + $0xa0] sm:$0xff]
  %v51 = vld [vmem:[%s1 + $0xa8] sm:$0xff]
  %v52 = vld [vmem:[%s1 + $0xb0] sm:$0xff]
  %v53 = vld [vmem:[%s1 + $0xb8] sm:$0xff]
  %v54 = vld [vmem:[%s1 + $0xc0] sm:$0xff]
  %v55 = vld [vmem:[%s1 + $0xc8] sm:$0xff]
  %v56 = vld [vmem:[%s1 + $0xd0] sm:$0xff]
  %v57 = vld [vmem:[%s1 + $0xd8] sm:$0xff]
  %v58 = vld [vmem:[%s1 + $0xe0] sm:$0xff]
  %v59 = vld [vmem:[%s1 + $0xe8] sm:$0xff]
  %v60 = vld [vmem:[%s1 + $0xf0] sm:$0xff]
  %v61 = vld [vmem:[%s1 + $0xf8] sm:$0xff]
  %v62 = vld [vmem:[%s1 + $0x100] sm:$0xff]
  %v63 = vld [vmem:[%s1 + $0x108] sm:$0xff]
  %v64 = vld [vmem:[%s1 + $0x110] sm:$0xff]
  %v65 = vld [vmem:[%s1 + $0x118] sm:$0xff]
  %v66 = vld [vmem:[%s1 + $0x120] sm:$0xff]
  %v67 = vld [vmem:[%s1 + $0x128] sm:$0xff]
  %v68 = vld [vmem:[%s1 + $0x130] sm:$0xff]
  %v69 = vld [vmem:[%s1 + $0x138] sm:$0xff]
  %v70 = vld [vmem:[%s1 + $0x140] sm:$0xff]
  %v71 = vld [vmem:[%s1 + $0x148] sm:$0xff]
  %v72 = vld [vmem:[%s1 + $0x150] sm:$0xff]
  %v73 = vld [vmem:[%s1 + $0x158] sm:$0xff]
  %v74 = vld [vmem:[%s1 + $0x160] sm:$0xff]
  %v75 = vld [vmem:[%s1 + $0x168] sm:$0xff]
  %v76 = vld [vmem:[%s1 + $0x170] sm:$0xff]
  %v77 = vld [vmem:[%s1 + $0x178] sm:$0xff]
  %v78 = vld [vmem:[%s1 + $0x180] sm:$0xff]
  %v79 = vld [vmem:[%s1 + $0x188] sm:$0xff]
  %v80 = vld [vmem:[%s1 + $0x190] sm:$0xff]
  %v81 = vld [vmem:[%s1 + $0x198] sm:$0xff]
  %v82 = vld [vmem:[%s1 + $0x1a0] sm:$0xff]
  %v83 = vld [vmem:[%s1 + $0x1a8] sm:$0xff]
  %v84 = vld [vmem:[%s1 + $0x1b0] sm:$0xff]
  %v85 = vld [vmem:[%s1 + $0x1b8] sm:$0xff]
  %v86 = vld [vmem:[%s1 + $0x1c0] sm:$0xff]
  %v87 = vld [vmem:[%s1 + $0x1c8] sm:$0xff]
  %v88 = vld [vmem:[%s1 + $0x1d0] sm:$0xff]
  %v89 = vld [vmem:[%s1 + $0x1d8] sm:$0xff]
  %v90 = vld [vmem:[%s1 + $0x1e0] sm:$0xff]
  %v91 = vld [vmem:[%s1 + $0x1e8] sm:$0xff]
  %v92 = vld [vmem:[%s1 + $0x1f0] sm:$0xff]
  %v93 = vld [vmem:[%s1 + $0x1f8] sm:$0xff]
  %v94 = vld [vmem:[%s2] sm:$0xff]
  %v95 = vld [vmem:[%s2 + $0x8] sm:$0xff]
  %v96 = vld [vmem:[%s2 + $0x10] sm:$0xff]
  %v97 = vld [vmem:[%s2 + $0x18] sm:$0xff]
  %99 = vset.pattern.permute.xlu0 0
  %100 = vperm.xlu0 %99, %v94
  %v101 = vpop.permute.xlu0 %100
  %104 = vset.pattern.permute.xlu0 0
  %105 = vperm.xlu0 %104, %v95
  %v106 = vpop.permute.xlu0 %105
  %109 = vset.pattern.permute.xlu0 0
  %110 = vperm.xlu0 %109, %v96
  %v111 = vpop.permute.xlu0 %110
  %114 = vset.pattern.permute.xlu0 0
  %115 = vperm.xlu0 %114, %v97
  %v116 = vpop.permute.xlu0 %115
  %118 = vmatprep.subr.mxu0 0.0
  %119 = vmatpush1.msra.mxu0 %v30
  %120 = vmatprep.subr.mxu0 0.0
  %121 = vmatpush1.msra.mxu0 %v31
  %122 = vmatprep.subr.mxu0 0.0
  %123 = vmatpush1.msra.mxu0 %v32
  %124 = vmatprep.subr.mxu0 0.0
  %125 = vmatpush1.msra.mxu0 %v33
  %126 = vmatprep.subr.mxu0 0.0
  %127 = vmatpush1.msra.mxu0 %v34
  %128 = vmatprep.subr.mxu0 0.0
  %129 = vmatpush1.msra.mxu0 %v35
  %130 = vmatprep.subr.mxu0 0.0
  %131 = vmatpush1.msra.mxu0 %v36
  %132 = vmatprep.subr.mxu0 0.0
  %133 = vmatpush1.msra.mxu0 %v37
  %134 = vmatprep.subr.mxu0 0.0
  %135 = vmatpush1.msra.mxu0 %v38
  %136 = vmatprep.subr.mxu0 0.0
  %137 = vmatpush1.msra.mxu0 %v39
  %138 = vmatprep.subr.mxu0 0.0
  %139 = vmatpush1.msra.mxu0 %v40
  %140 = vmatprep.subr.mxu0 0.0
  %141 = vmatpush1.msra.mxu0 %v41
  %142 = vmatprep.subr.mxu0 0.0
  %143 = vmatpush1.msra.mxu0 %v42
  %144 = vmatprep.subr.mxu0 0.0
  %145 = vmatpush1.msra.mxu0 %v43
  %146 = vmatprep.subr.mxu0 0.0
  %147 = vmatpush1.msra.mxu0 %v44
  %148 = vmatprep.subr.mxu0 0.0
  %149 = vmatpush1.msra.mxu0 %v45
  %150 = vmatprep.subr.mxu0 0.0
  %151 = vmatpush1.msra.mxu0 %v46
  %152 = vmatprep.subr.mxu0 0.0
  %153 = vmatpush1.msra.mxu0 %v47
  %154 = vmatprep.subr.mxu0 0.0
  %155 = vmatpush1.msra.mxu0 %v48
  %156 = vmatprep.subr.mxu0 0.0
  %157 = vmatpush1.msra.mxu0 %v49
  %158 = vmatprep.subr.mxu0 0.0
  %159 = vmatpush1.msra.mxu0 %v50
  %160 = vmatprep.subr.mxu0 0.0
  %161 = vmatpush1.msra.mxu0 %v51
  %162 = vmatprep.subr.mxu0 0.0
  %163 = vmatpush1.msra.mxu0 %v52
  %164 = vmatprep.subr.mxu0 0.0
  %165 = vmatpush1.msra.mxu0 %v53
  %166 = vmatprep.subr.mxu0 0.0
  %167 = vmatpush1.msra.mxu0 %v54
  %168 = vmatprep.subr.mxu0 0.0
  %169 = vmatpush1.msra.mxu0 %v55
  %170 = vmatprep.subr.mxu0 0.0
  %171 = vmatpush1.msra.mxu0 %v56
  %172 = vmatprep.subr.mxu0 0.0
  %173 = vmatpush1.msra.mxu0 %v57
  %174 = vmatprep.subr.mxu0 0.0
  %175 = vmatpush1.msra.mxu0 %v58
  %176 = vmatprep.subr.mxu0 0.0
  %177 = vmatpush1.msra.mxu0 %v59
  %178 = vmatprep.subr.mxu0 0.0
  %179 = vmatpush1.msra.mxu0 %v60
  %180 = vmatprep.subr.mxu0 0.0
  %181 = vmatpush1.msra.mxu0 %v61
  %182 = vmatprep.mubr.f32.mxu0 %v15
  %183 = vmatmul.mubr.f32.gmra.mrb[0].mxu0 %v14
  %v184 = vpop.f32.mrb[0].mxu0
  %v185 = vadd.f32 %v101, %v184
  %v186 = vpop.f32.mrb[0].mxu0
  %187 = vmatprep.mubr.f32.mxu0 %v19
  %188 = vmatmul.mubr.f32.gmra.mrb[0].mxu0 %v18
  %v189 = vpop.f32.mrb[0].mxu0
  %v190 = vadd.f32 %v106, %v189
  %v191 = vpop.f32.mrb[0].mxu0
  %192 = vmatprep.mubr.f32.mxu0 %v23
  %193 = vmatmul.mubr.f32.gmra.mrb[0].mxu0 %v22
  %v194 = vpop.f32.mrb[0].mxu0
  %v195 = vadd.f32 %v111, %v194
  %v196 = vpop.f32.mrb[0].mxu0
  %197 = vmatprep.mubr.f32.mxu0 %v27
  %198 = vmatmul.mubr.f32.gmra.mrb[0].mxu0 %v26
  %v199 = vpop.f32.mrb[0].mxu0
  %v200 = vadd.f32 %v116, %v199
  %v201 = vpop.f32.mrb[0].mxu0
  %202 = vdwg.mxu0
  %203 = vmatprep.subr.mxu0 0.0
  %204 = vmatpush1.msra.mxu0 %v62
  %205 = vmatprep.subr.mxu0 0.0
  %206 = vmatpush1.msra.mxu0 %v63
  %207 = vmatprep.subr.mxu0 0.0
  %208 = vmatpush1.msra.mxu0 %v64
  %209 = vmatprep.subr.mxu0 0.0
  %210 = vmatpush1.msra.mxu0 %v65
  %211 = vmatprep.subr.mxu0 0.0
  %212 = vmatpush1.msra.mxu0 %v66
  %213 = vmatprep.subr.mxu0 0.0
  %214 = vmatpush1.msra.mxu0 %v67
  %215 = vmatprep.subr.mxu0 0.0
  %216 = vmatpush1.msra.mxu0 %v68
  %217 = vmatprep.subr.mxu0 0.0
  %218 = vmatpush1.msra.mxu0 %v69
  %219 = vmatprep.subr.mxu0 0.0
  %220 = vmatpush1.msra.mxu0 %v70
  %221 = vmatprep.subr.mxu0 0.0
  %222 = vmatpush1.msra.mxu0 %v71
  %223 = vmatprep.subr.mxu0 0.0
  %224 = vmatpush1.msra.mxu0 %v72
  %225 = vmatprep.subr.mxu0 0.0
  %226 = vmatpush1.msra.mxu0 %v73
  %227 = vmatprep.subr.mxu0 0.0
  %228 = vmatpush1.msra.mxu0 %v74
  %229 = vmatprep.subr.mxu0 0.0
  %230 = vmatpush1.msra.mxu0 %v75
  %231 = vmatprep.subr.mxu0 0.0
  %232 = vmatpush1.msra.mxu0 %v76
  %233 = vmatprep.subr.mxu0 0.0
  %234 = vmatpush1.msra.mxu0 %v77
  %235 = vmatprep.subr.mxu0 0.0
  %236 = vmatpush1.msra.mxu0 %v78
  %237 = vmatprep.subr.mxu0 0.0
  %238 = vmatpush1.msra.mxu0 %v79
  %239 = vmatprep.subr.mxu0 0.0
  %240 = vmatpush1.msra.mxu0 %v80
  %241 = vmatprep.subr.mxu0 0.0
  %242 = vmatpush1.msra.mxu0 %v81
  %243 = vmatprep.subr.mxu0 0.0
  %244 = vmatpush1.msra.mxu0 %v82
  %245 = vmatprep.subr.mxu0 0.0
  %246 = vmatpush1.msra.mxu0 %v83
  %247 = vmatprep.subr.mxu0 0.0
  %248 = vmatpush1.msra.mxu0 %v84
  %249 = vmatprep.subr.mxu0 0.0
  %250 = vmatpush1.msra.mxu0 %v85
  %251 = vmatprep.subr.mxu0 0.0
  %252 = vmatpush1.msra.mxu0 %v86
  %253 = vmatprep.subr.mxu0 0.0
  %254 = vmatpush1.msra.mxu0 %v87
  %255 = vmatprep.subr.mxu0 0.0
  %256 = vmatpush1.msra.mxu0 %v88
  %257 = vmatprep.subr.mxu0 0.0
  %258 = vmatpush1.msra.mxu0 %v89
  %259 = vmatprep.subr.mxu0 0.0
  %260 = vmatpush1.msra.mxu0 %v90
  %261 = vmatprep.subr.mxu0 0.0
  %262 = vmatpush1.msra.mxu0 %v91
  %263 = vmatprep.subr.mxu0 0.0
  %264 = vmatpush1.msra.mxu0 %v92
  %265 = vmatprep.subr.mxu0 0.0
  %266 = vmatpush1.msra.mxu0 %v93
  %267 = vmatprep.mubr.f32.mxu0 %v17
  %268 = vmatmul.mubr.f32.gmra.mrb[0].mxu0 %v16
  %v269 = vpop.f32.mrb[0].mxu0
  %v270 = vadd.f32 %v185, %v269
  %v271 = vpop.f32.mrb[0].mxu0
  %272 = vmatprep.mubr.f32.mxu0 %v21
  %273 = vmatmul.mubr.f32.gmra.mrb[0].mxu0 %v20
  %v274 = vpop.f32.mrb[0].mxu0
  %v275 = vadd.f32 %v190, %v274
  %v276 = vpop.f32.mrb[0].mxu0
  %277 = vmatprep.mubr.f32.mxu0 %v25
  %278 = vmatmul.mubr.f32.gmra.mrb[0].mxu0 %v24
  %v279 = vpop.f32.mrb[0].mxu0
  %v280 = vadd.f32 %v195, %v279
  %v281 = vpop.f32.mrb[0].mxu0
  %282 = vmatprep.mubr.f32.mxu0 %v29
  %283 = vmatmul.mubr.f32.gmra.mrb[0].mxu0 %v28
  %v284 = vpop.f32.mrb[0].mxu0
  %v285 = vadd.f32 %v200, %v284
  %v286 = vpop.f32.mrb[0].mxu0
  %287 = vdwg.mxu0
  %v288 = vmax.f32 %v270, 0.0
  %v289 = vmax.f32 %v275, 0.0
  %v290 = vmax.f32 %v280, 0.0
  %v291 = vmax.f32 %v285, 0.0
  %v292 = vmul.f32 %v288, %v288
  %v293 = vmul.f32 %v289, %v289
  %v294 = vmul.f32 %v290, %v290
  %v295 = vmul.f32 %v291, %v291
  %vm300 = vcmask 1046528
  %v301 = vrot.slane %v292, 1
  %v302 = vrot.slane %v293, 1
  %v303 = vsel %vm300, %v301, %v302
  %v304 = vrot.slane %v294, 1
  %v305 = vsel %vm300, %v302, %v304
  %v306 = vrot.slane %v295, 1
  %v307 = vsel %vm300, %v304, %v306
  %v312 = vsel %vm300, %v306, 0.0
  %v313 = vadd.f32 %v292, %v303
  %v314 = vadd.f32 %v293, %v305
  %v315 = vadd.f32 %v294, %v307
  %v316 = vadd.f32 %v295, %v312
  %vm317 = vcmask 1040384
  %v318 = vrot.slane %v292, 7
  %v319 = vrot.slane %v293, 7
  %v320 = vsel %vm317, %v318, %v319
  %v321 = vrot.slane %v294, 7
  %v322 = vsel %vm317, %v319, %v321
  %v323 = vrot.slane %v295, 7
  %v324 = vsel %vm317, %v321, %v323
  %v329 = vsel %vm317, 0.0, %v318
  %v330 = vadd.f32 %v313, %v329
  %v331 = vadd.f32 %v314, %v320
  %v332 = vadd.f32 %v315, %v322
  %v333 = vadd.f32 %v316, %v324
  %vm334 = vcmask 1045504
  %v335 = vrot.slane %v292, 2
  %v336 = vrot.slane %v293, 2
  %v337 = vsel %vm334, %v335, %v336
  %v338 = vrot.slane %v294, 2
  %v339 = vsel %vm334, %v336, %v338
  %v340 = vrot.slane %v295, 2
  %v341 = vsel %vm334, %v338, %v340
  %v346 = vsel %vm334, %v340, 0.0
  %v347 = vadd.f32 %v330, %v337
  %v348 = vadd.f32 %v331, %v339
  %v349 = vadd.f32 %v332, %v341
  %v350 = vadd.f32 %v333, %v346
  %vm351 = vcmask 1041408
  %v352 = vrot.slane %v292, 6
  %v353 = vrot.slane %v293, 6
  %v354 = vsel %vm351, %v352, %v353
  %v355 = vrot.slane %v294, 6
  %v356 = vsel %vm351, %v353, %v355
  %v357 = vrot.slane %v295, 6
  %v358 = vsel %vm351, %v355, %v357
  %v363 = vsel %vm351, 0.0, %v352
  %v364 = vadd.f32 %v347, %v363
  %v365 = vadd.f32 %v348, %v354
  %v366 = vadd.f32 %v349, %v356
  %v367 = vadd.f32 %v350, %v358
  %v368 = vmul.f32 %v364, 0.0002
  %v369 = vmul.f32 %v365, 0.0002
  %v370 = vmul.f32 %v366, 0.0002
  %v371 = vmul.f32 %v367, 0.0002
  %v372 = vadd.f32 %v368, 1.0
  %v373 = vadd.f32 %v369, 1.0
  %v374 = vadd.f32 %v370, 1.0
  %v375 = vadd.f32 %v371, 1.0
  %v376 = vrsqrt.pop %v372
  %v377 = vrsqrt.pop %v373
  %v378 = vrsqrt.pop %v374
  %v379 = vrsqrt.pop %v375
  %v380 = vmul.f32 %v288, %v376
  %v381 = vmul.f32 %v289, %v377
  %v382 = vmul.f32 %v290, %v378
  %v383 = vmul.f32 %v291, %v379
  %384 = vst [vmem:[%s3] sm:$0xff] %v380
  %385 = vst [vmem:[%s3 + $0x8] sm:$0xff] %v381
  %386 = vst [vmem:[%s3 + $0x10] sm:$0xff] %v382
  %387 = vst [vmem:[%s3 + $0x18] sm:$0xff] %v383
  // Predicated region
  $region14: #{ff_gauss_vae_forward.8} parent=0 // pred_check
    _
  $region15: #{ff_gauss_vae_forward.8} parent=0 // pred_check_branch
    %389 = sbr.rel (0) target = $region17
  $region16: #{ff_gauss_vae_forward.8} parent=0 // pred_region
    _
  $region17: #{ff_gauss_vae_forward.8} parent=0 // pred_fallthru
    _
  // Predicated region
  $region18: #{ff_gauss_vae_forward.8} parent=0 // pred_check
    _
  $region19: #{ff_gauss_vae_forward.8} parent=0 // pred_check_branch
    %391 = sbr.rel (0) target = $region21
  $region20: #{ff_gauss_vae_forward.8} parent=0 // pred_region
    _
  $region21: #{ff_gauss_vae_forward.8} parent=0 // pred_fallthru
    _

// kernel: ff_gauss_vae_forward.9
$region0: #{ff_gauss_vae_forward.9}
  #allocation0 [shape = 'u32[]', space=smem, size = 0x4, offset = 0x4, fixed_abs, tag = 'smem constant byte address 0x4 - core index']
  #allocation1 [shape = 'u32[144,128]{1,0:T(1,128)}', space=vmem, size = 0x12000, scoped, tag = 'internal scratch']
  %s0 = inlined_call_operand.vmem [shape: f32[32,512], index: 0, kind: input, shape index: {}]
  %s1 = inlined_call_operand.vmem [shape: f32[512,32], index: 1, kind: input, shape index: {}]
  %s2 = inlined_call_operand.vmem [shape: f32[32,1], index: 2, kind: input, shape index: {}]
  %s3 = inlined_call_operand.vmem [shape: f32[32,32], index: 3, kind: output, shape index: {}]
  %s4 = sld [smem:[#allocation0]]
  $region22: #{ff_gauss_vae_forward.9} parent=0
    _
  %s6 = ssub.s32 1, %s4
  %s7 = scalar_select 0, %s6, %s4
  // Predicated region
  $region2: #{ff_gauss_vae_forward.9} parent=0 // pred_check
    _
  $region3: #{ff_gauss_vae_forward.9} parent=0 // pred_check_branch
    %9 = sbr.rel (0) target = $region5
  $region4: #{ff_gauss_vae_forward.9} parent=0 // pred_region
    _
  $region5: #{ff_gauss_vae_forward.9} parent=0 // pred_fallthru
    _
  // Predicated region
  $region6: #{ff_gauss_vae_forward.9} parent=0 // pred_check
    _
  $region7: #{ff_gauss_vae_forward.9} parent=0 // pred_check_branch
    %11 = sbr.rel (0) target = $region9
  $region8: #{ff_gauss_vae_forward.9} parent=0 // pred_region
    _
  $region9: #{ff_gauss_vae_forward.9} parent=0 // pred_fallthru
    _
  // Predicated region
  $region10: #{ff_gauss_vae_forward.9} parent=0 // pred_check
    _
  $region11: #{ff_gauss_vae_forward.9} parent=0 // pred_check_branch
    %13 = sbr.rel (0) target = $region13
  $region12: #{ff_gauss_vae_forward.9} parent=0 // pred_region
    _
  $region13: #{ff_gauss_vae_forward.9} parent=0 // pred_fallthru
    _
  %v14 = vld [vmem:[%s0] sm:$0xff]
  %v15 = vld [vmem:[%s0 + $0x8] sm:$0xff]
  %v16 = vld [vmem:[%s0 + $0x10] sm:$0xff]
  %v17 = vld [vmem:[%s0 + $0x18] sm:$0xff]
  %v18 = vld [vmem:[%s0 + $0x20] sm:$0xff]
  %v19 = vld [vmem:[%s0 + $0x28] sm:$0xff]
  %v20 = vld [vmem:[%s0 + $0x30] sm:$0xff]
  %v21 = vld [vmem:[%s0 + $0x38] sm:$0xff]
  %v22 = vld [vmem:[%s0 + $0x40] sm:$0xff]
  %v23 = vld [vmem:[%s0 + $0x48] sm:$0xff]
  %v24 = vld [vmem:[%s0 + $0x50] sm:$0xff]
  %v25 = vld [vmem:[%s0 + $0x58] sm:$0xff]
  %v26 = vld [vmem:[%s0 + $0x60] sm:$0xff]
  %v27 = vld [vmem:[%s0 + $0x68] sm:$0xff]
  %v28 = vld [vmem:[%s0 + $0x70] sm:$0xff]
  %v29 = vld [vmem:[%s0 + $0x78] sm:$0xff]
  %v30 = vld [vmem:[%s1] sm:$0xff]
  %v31 = vld [vmem:[%s1 + $0x8] sm:$0xff]
  %v32 = vld [vmem:[%s1 + $0x10] sm:$0xff]
  %v33 = vld [vmem:[%s1 + $0x18] sm:$0xff]
  %v34 = vld [vmem:[%s1 + $0x20] sm:$0xff]
  %v35 = vld [vmem:[%s1 + $0x28] sm:$0xff]
  %v36 = vld [vmem:[%s1 + $0x30] sm:$0xff]
  %v37 = vld [vmem:[%s1 + $0x38] sm:$0xff]
  %v38 = vld [vmem:[%s1 + $0x40] sm:$0xff]
  %v39 = vld [vmem:[%s1 + $0x48] sm:$0xff]
  %v40 = vld [vmem:[%s1 + $0x50] sm:$0xff]
  %v41 = vld [vmem:[%s1 + $0x58] sm:$0xff]
  %v42 = vld [vmem:[%s1 + $0x60] sm:$0xff]
  %v43 = vld [vmem:[%s1 + $0x68] sm:$0xff]
  %v44 = vld [vmem:[%s1 + $0x70] sm:$0xff]
  %v45 = vld [vmem:[%s1 + $0x78] sm:$0xff]
  %v46 = vld [vmem:[%s1 + $0x80] sm:$0xff]
  %v47 = vld [vmem:[%s1 + $0x88] sm:$0xff]
  %v48 = vld [vmem:[%s1 + $0x90] sm:$0xff]
  %v49 = vld [vmem:[%s1 + $0x98] sm:$0xff]
  %v50 = vld [vmem:[%s1 + $0xa0] sm:$0xff]
  %v51 = vld [vmem:[%s1 + $0xa8] sm:$0xff]
  %v52 = vld [vmem:[%s1 + $0xb0] sm:$0xff]
  %v53 = vld [vmem:[%s1 + $0xb8] sm:$0xff]
  %v54 = vld [vmem:[%s1 + $0xc0] sm:$0xff]
  %v55 = vld [vmem:[%s1 + $0xc8] sm:$0xff]
  %v56 = vld [vmem:[%s1 + $0xd0] sm:$0xff]
  %v57 = vld [vmem:[%s1 + $0xd8] sm:$0xff]
  %v58 = vld [vmem:[%s1 + $0xe0] sm:$0xff]
  %v59 = vld [vmem:[%s1 + $0xe8] sm:$0xff]
  %v60 = vld [vmem:[%s1 + $0xf0] sm:$0xff]
  %v61 = vld [vmem:[%s1 + $0xf8] sm:$0xff]
  %v62 = vld [vmem:[%s1 + $0x100] sm:$0xff]
  %v63 = vld [vmem:[%s1 + $0x108] sm:$0xff]
  %v64 = vld [vmem:[%s1 + $0x110] sm:$0xff]
  %v65 = vld [vmem:[%s1 + $0x118] sm:$0xff]
  %v66 = vld [vmem:[%s1 + $0x120] sm:$0xff]
  %v67 = vld [vmem:[%s1 + $0x128] sm:$0xff]
  %v68 = vld [vmem:[%s1 + $0x130] sm:$0xff]
  %v69 = vld [vmem:[%s1 + $0x138] sm:$0xff]
  %v70 = vld [vmem:[%s1 + $0x140] sm:$0xff]
  %v71 = vld [vmem:[%s1 + $0x148] sm:$0xff]
  %v72 = vld [vmem:[%s1 + $0x150] sm:$0xff]
  %v73 = vld [vmem:[%s1 + $0x158] sm:$0xff]
  %v74 = vld [vmem:[%s1 + $0x160] sm:$0xff]
  %v75 = vld [vmem:[%s1 + $0x168] sm:$0xff]
  %v76 = vld [vmem:[%s1 + $0x170] sm:$0xff]
  %v77 = vld [vmem:[%s1 + $0x178] sm:$0xff]
  %v78 = vld [vmem:[%s1 + $0x180] sm:$0xff]
  %v79 = vld [vmem:[%s1 + $0x188] sm:$0xff]
  %v80 = vld [vmem:[%s1 + $0x190] sm:$0xff]
  %v81 = vld [vmem:[%s1 + $0x198] sm:$0xff]
  %v82 = vld [vmem:[%s1 + $0x1a0] sm:$0xff]
  %v83 = vld [vmem:[%s1 + $0x1a8] sm:$0xff]
  %v84 = vld [vmem:[%s1 + $0x1b0] sm:$0xff]
  %v85 = vld [vmem:[%s1 + $0x1b8] sm:$0xff]
  %v86 = vld [vmem:[%s1 + $0x1c0] sm:$0xff]
  %v87 = vld [vmem:[%s1 + $0x1c8] sm:$0xff]
  %v88 = vld [vmem:[%s1 + $0x1d0] sm:$0xff]
  %v89 = vld [vmem:[%s1 + $0x1d8] sm:$0xff]
  %v90 = vld [vmem:[%s1 + $0x1e0] sm:$0xff]
  %v91 = vld [vmem:[%s1 + $0x1e8] sm:$0xff]
  %v92 = vld [vmem:[%s1 + $0x1f0] sm:$0xff]
  %v93 = vld [vmem:[%s1 + $0x1f8] sm:$0xff]
  %v94 = vld [vmem:[%s2] sm:$0xff]
  %v95 = vld [vmem:[%s2 + $0x8] sm:$0xff]
  %v96 = vld [vmem:[%s2 + $0x10] sm:$0xff]
  %v97 = vld [vmem:[%s2 + $0x18] sm:$0xff]
  %99 = vset.pattern.permute.xlu0 0
  %100 = vperm.xlu0 %99, %v94
  %v101 = vpop.permute.xlu0 %100
  %104 = vset.pattern.permute.xlu0 0
  %105 = vperm.xlu0 %104, %v95
  %v106 = vpop.permute.xlu0 %105
  %109 = vset.pattern.permute.xlu0 0
  %110 = vperm.xlu0 %109, %v96
  %v111 = vpop.permute.xlu0 %110
  %114 = vset.pattern.permute.xlu0 0
  %115 = vperm.xlu0 %114, %v97
  %v116 = vpop.permute.xlu0 %115
  %118 = vmatprep.subr.mxu0 0.0
  %119 = vmatpush1.msra.mxu0 %v30
  %120 = vmatprep.subr.mxu0 0.0
  %121 = vmatpush1.msra.mxu0 %v31
  %122 = vmatprep.subr.mxu0 0.0
  %123 = vmatpush1.msra.mxu0 %v32
  %124 = vmatprep.subr.mxu0 0.0
  %125 = vmatpush1.msra.mxu0 %v33
  %126 = vmatprep.subr.mxu0 0.0
  %127 = vmatpush1.msra.mxu0 %v34
  %128 = vmatprep.subr.mxu0 0.0
  %129 = vmatpush1.msra.mxu0 %v35
  %130 = vmatprep.subr.mxu0 0.0
  %131 = vmatpush1.msra.mxu0 %v36
  %132 = vmatprep.subr.mxu0 0.0
  %133 = vmatpush1.msra.mxu0 %v37
  %134 = vmatprep.subr.mxu0 0.0
  %135 = vmatpush1.msra.mxu0 %v38
  %136 = vmatprep.subr.mxu0 0.0
  %137 = vmatpush1.msra.mxu0 %v39
  %138 = vmatprep.subr.mxu0 0.0
  %139 = vmatpush1.msra.mxu0 %v40
  %140 = vmatprep.subr.mxu0 0.0
  %141 = vmatpush1.msra.mxu0 %v41
  %142 = vmatprep.subr.mxu0 0.0
  %143 = vmatpush1.msra.mxu0 %v42
  %144 = vmatprep.subr.mxu0 0.0
  %145 = vmatpush1.msra.mxu0 %v43
  %146 = vmatprep.subr.mxu0 0.0
  %147 = vmatpush1.msra.mxu0 %v44
  %148 = vmatprep.subr.mxu0 0.0
  %149 = vmatpush1.msra.mxu0 %v45
  %150 = vmatprep.subr.mxu0 0.0
  %151 = vmatpush1.msra.mxu0 %v46
  %152 = vmatprep.subr.mxu0 0.0
  %153 = vmatpush1.msra.mxu0 %v47
  %154 = vmatprep.subr.mxu0 0.0
  %155 = vmatpush1.msra.mxu0 %v48
  %156 = vmatprep.subr.mxu0 0.0
  %157 = vmatpush1.msra.mxu0 %v49
  %158 = vmatprep.subr.mxu0 0.0
  %159 = vmatpush1.msra.mxu0 %v50
  %160 = vmatprep.subr.mxu0 0.0
  %161 = vmatpush1.msra.mxu0 %v51
  %162 = vmatprep.subr.mxu0 0.0
  %163 = vmatpush1.msra.mxu0 %v52
  %164 = vmatprep.subr.mxu0 0.0
  %165 = vmatpush1.msra.mxu0 %v53
  %166 = vmatprep.subr.mxu0 0.0
  %167 = vmatpush1.msra.mxu0 %v54
  %168 = vmatprep.subr.mxu0 0.0
  %169 = vmatpush1.msra.mxu0 %v55
  %170 = vmatprep.subr.mxu0 0.0
  %171 = vmatpush1.msra.mxu0 %v56
  %172 = vmatprep.subr.mxu0 0.0
  %173 = vmatpush1.msra.mxu0 %v57
  %174 = vmatprep.subr.mxu0 0.0
  %175 = vmatpush1.msra.mxu0 %v58
  %176 = vmatprep.subr.mxu0 0.0
  %177 = vmatpush1.msra.mxu0 %v59
  %178 = vmatprep.subr.mxu0 0.0
  %179 = vmatpush1.msra.mxu0 %v60
  %180 = vmatprep.subr.mxu0 0.0
  %181 = vmatpush1.msra.mxu0 %v61
  %182 = vmatprep.mubr.f32.mxu0 %v15
  %183 = vmatmul.mubr.f32.gmra.mrb[0].mxu0 %v14
  %v184 = vpop.f32.mrb[0].mxu0
  %v185 = vadd.f32 %v101, %v184
  %v186 = vpop.f32.mrb[0].mxu0
  %187 = vmatprep.mubr.f32.mxu0 %v19
  %188 = vmatmul.mubr.f32.gmra.mrb[0].mxu0 %v18
  %v189 = vpop.f32.mrb[0].mxu0
  %v190 = vadd.f32 %v106, %v189
  %v191 = vpop.f32.mrb[0].mxu0
  %192 = vmatprep.mubr.f32.mxu0 %v23
  %193 = vmatmul.mubr.f32.gmra.mrb[0].mxu0 %v22
  %v194 = vpop.f32.mrb[0].mxu0
  %v195 = vadd.f32 %v111, %v194
  %v196 = vpop.f32.mrb[0].mxu0
  %197 = vmatprep.mubr.f32.mxu0 %v27
  %198 = vmatmul.mubr.f32.gmra.mrb[0].mxu0 %v26
  %v199 = vpop.f32.mrb[0].mxu0
  %v200 = vadd.f32 %v116, %v199
  %v201 = vpop.f32.mrb[0].mxu0
  %202 = vdwg.mxu0
  %203 = vmatprep.subr.mxu0 0.0
  %204 = vmatpush1.msra.mxu0 %v62
  %205 = vmatprep.subr.mxu0 0.0
  %206 = vmatpush1.msra.mxu0 %v63
  %207 = vmatprep.subr.mxu0 0.0
  %208 = vmatpush1.msra.mxu0 %v64
  %209 = vmatprep.subr.mxu0 0.0
  %210 = vmatpush1.msra.mxu0 %v65
  %211 = vmatprep.subr.mxu0 0.0
  %212 = vmatpush1.msra.mxu0 %v66
  %213 = vmatprep.subr.mxu0 0.0
  %214 = vmatpush1.msra.mxu0 %v67
  %215 = vmatprep.subr.mxu0 0.0
  %216 = vmatpush1.msra.mxu0 %v68
  %217 = vmatprep.subr.mxu0 0.0
  %218 = vmatpush1.msra.mxu0 %v69
  %219 = vmatprep.subr.mxu0 0.0
  %220 = vmatpush1.msra.mxu0 %v70
  %221 = vmatprep.subr.mxu0 0.0
  %222 = vmatpush1.msra.mxu0 %v71
  %223 = vmatprep.subr.mxu0 0.0
  %224 = vmatpush1.msra.mxu0 %v72
  %225 = vmatprep.subr.mxu0 0.0
  %226 = vmatpush1.msra.mxu0 %v73
  %227 = vmatprep.subr.mxu0 0.0
  %228 = vmatpush1.msra.mxu0 %v74
  %229 = vmatprep.subr.mxu0 0.0
  %230 = vmatpush1.msra.mxu0 %v75
  %231 = vmatprep.subr.mxu0 0.0
  %232 = vmatpush1.msra.mxu0 %v76
  %233 = vmatprep.subr.mxu0 0.0
  %234 = vmatpush1.msra.mxu0 %v77
  %235 = vmatprep.subr.mxu0 0.0
  %236 = vmatpush1.msra.mxu0 %v78
  %237 = vmatprep.subr.mxu0 0.0
  %238 = vmatpush1.msra.mxu0 %v79
  %239 = vmatprep.subr.mxu0 0.0
  %240 = vmatpush1.msra.mxu0 %v80
  %241 = vmatprep.subr.mxu0 0.0
  %242 = vmatpush1.msra.mxu0 %v81
  %243 = vmatprep.subr.mxu0 0.0
  %244 = vmatpush1.msra.mxu0 %v82
  %245 = vmatprep.subr.mxu0 0.0
  %246 = vmatpush1.msra.mxu0 %v83
  %247 = vmatprep.subr.mxu0 0.0
  %248 = vmatpush1.msra.mxu0 %v84
  %249 = vmatprep.subr.mxu0 0.0
  %250 = vmatpush1.msra.mxu0 %v85
  %251 = vmatprep.subr.mxu0 0.0
  %252 = vmatpush1.msra.mxu0 %v86
  %253 = vmatprep.subr.mxu0 0.0
  %254 = vmatpush1.msra.mxu0 %v87
  %255 = vmatprep.subr.mxu0 0.0
  %256 = vmatpush1.msra.mxu0 %v88
  %257 = vmatprep.subr.mxu0 0.0
  %258 = vmatpush1.msra.mxu0 %v89
  %259 = vmatprep.subr.mxu0 0.0
  %260 = vmatpush1.msra.mxu0 %v90
  %261 = vmatprep.subr.mxu0 0.0
  %262 = vmatpush1.msra.mxu0 %v91
  %263 = vmatprep.subr.mxu0 0.0
  %264 = vmatpush1.msra.mxu0 %v92
  %265 = vmatprep.subr.mxu0 0.0
  %266 = vmatpush1.msra.mxu0 %v93
  %267 = vmatprep.mubr.f32.mxu0 %v17
  %268 = vmatmul.mubr.f32.gmra.mrb[0].mxu0 %v16
  %v269 = vpop.f32.mrb[0].mxu0
  %v270 = vadd.f32 %v185, %v269
  %v271 = vpop.f32.mrb[0].mxu0
  %272 = vmatprep.mubr.f32.mxu0 %v21
  %273 = vmatmul.mubr.f32.gmra.mrb[0].mxu0 %v20
  %v274 = vpop.f32.mrb[0].mxu0
  %v275 = vadd.f32 %v190, %v274
  %v276 = vpop.f32.mrb[0].mxu0
  %277 = vmatprep.mubr.f32.mxu0 %v25
  %278 = vmatmul.mubr.f32.gmra.mrb[0].mxu0 %v24
  %v279 = vpop.f32.mrb[0].mxu0
  %v280 = vadd.f32 %v195, %v279
  %v281 = vpop.f32.mrb[0].mxu0
  %282 = vmatprep.mubr.f32.mxu0 %v29
  %283 = vmatmul.mubr.f32.gmra.mrb[0].mxu0 %v28
  %v284 = vpop.f32.mrb[0].mxu0
  %v285 = vadd.f32 %v200, %v284
  %v286 = vpop.f32.mrb[0].mxu0
  %287 = vdwg.mxu0
  %v288 = vmax.f32 %v270, 0.0
  %v289 = vmax.f32 %v275, 0.0
  %v290 = vmax.f32 %v280, 0.0
  %v291 = vmax.f32 %v285, 0.0
  %v292 = vmul.f32 %v288, %v288
  %v293 = vmul.f32 %v289, %v289
  %v294 = vmul.f32 %v290, %v290
  %v295 = vmul.f32 %v291, %v291
  %vm300 = vcmask 1046528
  %v301 = vrot.slane %v292, 1
  %v302 = vrot.slane %v293, 1
  %v303 = vsel %vm300, %v301, %v302
  %v304 = vrot.slane %v294, 1
  %v305 = vsel %vm300, %v302, %v304
  %v306 = vrot.slane %v295, 1
  %v307 = vsel %vm300, %v304, %v306
  %v312 = vsel %vm300, %v306, 0.0
  %v313 = vadd.f32 %v292, %v303
  %v314 = vadd.f32 %v293, %v305
  %v315 = vadd.f32 %v294, %v307
  %v316 = vadd.f32 %v295, %v312
  %vm317 = vcmask 1040384
  %v318 = vrot.slane %v292, 7
  %v319 = vrot.slane %v293, 7
  %v320 = vsel %vm317, %v318, %v319
  %v321 = vrot.slane %v294, 7
  %v322 = vsel %vm317, %v319, %v321
  %v323 = vrot.slane %v295, 7
  %v324 = vsel %vm317, %v321, %v323
  %v329 = vsel %vm317, 0.0, %v318
  %v330 = vadd.f32 %v313, %v329
  %v331 = vadd.f32 %v314, %v320
  %v332 = vadd.f32 %v315, %v322
  %v333 = vadd.f32 %v316, %v324
  %vm334 = vcmask 1045504
  %v335 = vrot.slane %v292, 2
  %v336 = vrot.slane %v293, 2
  %v337 = vsel %vm334, %v335, %v336
  %v338 = vrot.slane %v294, 2
  %v339 = vsel %vm334, %v336, %v338
  %v340 = vrot.slane %v295, 2
  %v341 = vsel %vm334, %v338, %v340
  %v346 = vsel %vm334, %v340, 0.0
  %v347 = vadd.f32 %v330, %v337
  %v348 = vadd.f32 %v331, %v339
  %v349 = vadd.f32 %v332, %v341
  %v350 = vadd.f32 %v333, %v346
  %vm351 = vcmask 1041408
  %v352 = vrot.slane %v292, 6
  %v353 = vrot.slane %v293, 6
  %v354 = vsel %vm351, %v352, %v353
  %v355 = vrot.slane %v294, 6
  %v356 = vsel %vm351, %v353, %v355
  %v357 = vrot.slane %v295, 6
  %v358 = vsel %vm351, %v355, %v357
  %v363 = vsel %vm351, 0.0, %v352
  %v364 = vadd.f32 %v347, %v363
  %v365 = vadd.f32 %v348, %v354
  %v366 = vadd.f32 %v349, %v356
  %v367 = vadd.f32 %v350, %v358
  %v368 = vmul.f32 %v364, 0.0002
  %v369 = vmul.f32 %v365, 0.0002
  %v370 = vmul.f32 %v366, 0.0002
  %v371 = vmul.f32 %v367, 0.0002
  %v372 = vadd.f32 %v368, 1.0
  %v373 = vadd.f32 %v369, 1.0
  %v374 = vadd.f32 %v370, 1.0
  %v375 = vadd.f32 %v371, 1.0
  %v376 = vrsqrt.pop %v372
  %v377 = vrsqrt.pop %v373
  %v378 = vrsqrt.pop %v374
  %v379 = vrsqrt.pop %v375
  %v380 = vmul.f32 %v288, %v376
  %v381 = vmul.f32 %v289, %v377
  %v382 = vmul.f32 %v290, %v378
  %v383 = vmul.f32 %v291, %v379
  %vm384 = vcmask 261120
  %385 = vst.msk [vmem:[%s3] sm:$0xff] %vm384, %v380
  %386 = vst.msk [vmem:[%s3 + $0x8] sm:$0xff] %vm384, %v381
  %387 = vst.msk [vmem:[%s3 + $0x10] sm:$0xff] %vm384, %v382
  %388 = vst.msk [vmem:[%s3 + $0x18] sm:$0xff] %vm384, %v383
  // Predicated region
  $region14: #{ff_gauss_vae_forward.9} parent=0 // pred_check
    _
  $region15: #{ff_gauss_vae_forward.9} parent=0 // pred_check_branch
    %390 = sbr.rel (0) target = $region17
  $region16: #{ff_gauss_vae_forward.9} parent=0 // pred_region
    _
  $region17: #{ff_gauss_vae_forward.9} parent=0 // pred_fallthru
    _
  // Predicated region
  $region18: #{ff_gauss_vae_forward.9} parent=0 // pred_check
    _
  $region19: #{ff_gauss_vae_forward.9} parent=0 // pred_check_branch
    %392 = sbr.rel (0) target = $region21
  $region20: #{ff_gauss_vae_forward.9} parent=0 // pred_region
    _
  $region21: #{ff_gauss_vae_forward.9} parent=0 // pred_fallthru
    _

// kernel: ff_gauss_vae_forward.10
$region0: #{ff_gauss_vae_forward.10}
  #allocation0 [shape = 'u32[]', space=smem, size = 0x4, offset = 0x4, fixed_abs, tag = 'smem constant byte address 0x4 - core index']
  #allocation1 [shape = 'u32[144,128]{1,0:T(1,128)}', space=vmem, size = 0x12000, scoped, tag = 'internal scratch']
  %s0 = inlined_call_operand.vmem [shape: f32[2,512], index: 0, kind: input, shape index: {}]
  %s1 = inlined_call_operand.vmem [shape: f32[2,8], index: 1, kind: input, shape index: {}]
  %s2 = inlined_call_operand.vmem [shape: f32[512,256], index: 2, kind: input, shape index: {}]
  %s3 = inlined_call_operand.vmem [shape: f32[1,256], index: 3, kind: input, shape index: {}]
  %s4 = inlined_call_operand.vmem [shape: f32[256,256], index: 4, kind: input, shape index: {}]
  %s5 = inlined_call_operand.vmem [shape: f32[1,256], index: 5, kind: input, shape index: {}]
  %s6 = inlined_call_operand.vmem [shape: f32[256,16], index: 6, kind: input, shape index: {}]
  %s7 = inlined_call_operand.vmem [shape: f32[1,16], index: 7, kind: input, shape index: {}]
  %s8 = inlined_call_operand.vmem [shape: f32[8,256], index: 8, kind: input, shape index: {}]
  %s9 = inlined_call_operand.vmem [shape: f32[1,256], index: 9, kind: input, shape index: {}]
  %s10 = inlined_call_operand.vmem [shape: f32[256,256], index: 10, kind: input, shape index: {}]
  %s11 = inlined_call_operand.vmem [shape: f32[1,256], index: 11, kind: input, shape index: {}]
  %s12 = inlined_call_operand.vmem [shape: f32[256,512], index: 12, kind: input, shape index: {}]
  %s13 = inlined_call_operand.vmem [shape: f32[1,512], index: 13, kind: input, shape index: {}]
  %s14 = inlined_call_operand.hbm [shape: f32[2,8], index: 14, kind: output, shape index: {0}]
  %s15 = inlined_call_operand.hbm [shape: f32[2,8], index: 15, kind: output, shape index: {1}]
  %s16 = inlined_call_operand.vmem [shape: f32[2,512], index: 16, kind: output, shape index: {2}]
  %17 = xla_tuple %s14, %s15, %s16
  %s18 = sld [smem:[#allocation0]]
  $region82: #{ff_gauss_vae_forward.10} parent=0
    _
  %s20 = ssub.s32 1, %s18
  %s21 = scalar_select 0, %s20, %s18
  $region1: #{ff_gauss_vae_forward.10} parent=0
    #allocation2 [shape = 'u8[1024]{0}', space=vmem, size = 0x400, scoped, tag = 'output window, operand 0, single buffered']
    #allocation3 [shape = 's32[1]{0}', space=sflag, size = 0x4, scoped, tag = 'scoped memory for ff_gauss_vae_forward.10']
    #allocation4 [shape = 'u8[1024]{0}', space=vmem, size = 0x400, scoped, tag = 'output window, operand 1, single buffered']
    #allocation5 [shape = 's32[1]{0}', space=sflag, size = 0x4, scoped, tag = 'scoped memory for ff_gauss_vae_forward.10']
    %22 = vsyncpa [#allocation3], 0
    %23 = vsyncpa [#allocation5], 0
    // Predicated region
    $region2: #{ff_gauss_vae_forward.10} parent=1 // pred_check
      _
    $region3: #{ff_gauss_vae_forward.10} parent=1 // pred_check_branch
      %25 = sbr.rel (0) target = $region5
    $region4: #{ff_gauss_vae_forward.10} parent=1 // pred_region
      _
    $region5: #{ff_gauss_vae_forward.10} parent=1 // pred_fallthru
      _
    // Predicated region
    $region6: #{ff_gauss_vae_forward.10} parent=1 // pred_check
      _
    $region7: #{ff_gauss_vae_forward.10} parent=1 // pred_check_branch
      %27 = sbr.rel (0) target = $region9
    $region8: #{ff_gauss_vae_forward.10} parent=1 // pred_region
      _
    $region9: #{ff_gauss_vae_forward.10} parent=1 // pred_fallthru
      _
    // Predicated region
    $region10: #{ff_gauss_vae_forward.10} parent=1 // pred_check
      _
    $region11: #{ff_gauss_vae_forward.10} parent=1 // pred_check_branch
      %29 = sbr.rel (0) target = $region13
    $region12: #{ff_gauss_vae_forward.10} parent=1 // pred_region
      _
    $region13: #{ff_gauss_vae_forward.10} parent=1 // pred_fallthru
      _
    // Predicated region
    $region14: #{ff_gauss_vae_forward.10} parent=1 // pred_check
      _
    $region15: #{ff_gauss_vae_forward.10} parent=1 // pred_check_branch
      %31 = sbr.rel (0) target = $region17
    $region16: #{ff_gauss_vae_forward.10} parent=1 // pred_region
      _
    $region17: #{ff_gauss_vae_forward.10} parent=1 // pred_fallthru
      _
    // Predicated region
    $region18: #{ff_gauss_vae_forward.10} parent=1 // pred_check
      _
    $region19: #{ff_gauss_vae_forward.10} parent=1 // pred_check_branch
      %33 = sbr.rel (0) target = $region21
    $region20: #{ff_gauss_vae_forward.10} parent=1 // pred_region
      _
    $region21: #{ff_gauss_vae_forward.10} parent=1 // pred_fallthru
      _
    // Predicated region
    $region22: #{ff_gauss_vae_forward.10} parent=1 // pred_check
      _
    $region23: #{ff_gauss_vae_forward.10} parent=1 // pred_check_branch
      %35 = sbr.rel (0) target = $region25
    $region24: #{ff_gauss_vae_forward.10} parent=1 // pred_region
      _
    $region25: #{ff_gauss_vae_forward.10} parent=1 // pred_fallthru
      _
    // Predicated region
    $region26: #{ff_gauss_vae_forward.10} parent=1 // pred_check
      _
    $region27: #{ff_gauss_vae_forward.10} parent=1 // pred_check_branch
      %37 = sbr.rel (0) target = $region29
    $region28: #{ff_gauss_vae_forward.10} parent=1 // pred_region
      _
    $region29: #{ff_gauss_vae_forward.10} parent=1 // pred_fallthru
      _
    // Predicated region
    $region30: #{ff_gauss_vae_forward.10} parent=1 // pred_check
      _
    $region31: #{ff_gauss_vae_forward.10} parent=1 // pred_check_branch
      %39 = sbr.rel (0) target = $region33
    $region32: #{ff_gauss_vae_forward.10} parent=1 // pred_region
      _
    $region33: #{ff_gauss_vae_forward.10} parent=1 // pred_fallthru
      _
    // Predicated region
    $region34: #{ff_gauss_vae_forward.10} parent=1 // pred_check
      _
    $region35: #{ff_gauss_vae_forward.10} parent=1 // pred_check_branch
      %41 = sbr.rel (0) target = $region37
    $region36: #{ff_gauss_vae_forward.10} parent=1 // pred_region
      _
    $region37: #{ff_gauss_vae_forward.10} parent=1 // pred_fallthru
      _
    // Predicated region
    $region38: #{ff_gauss_vae_forward.10} parent=1 // pred_check
      _
    $region39: #{ff_gauss_vae_forward.10} parent=1 // pred_check_branch
      %43 = sbr.rel (0) target = $region41
    $region40: #{ff_gauss_vae_forward.10} parent=1 // pred_region
      _
    $region41: #{ff_gauss_vae_forward.10} parent=1 // pred_fallthru
      _
    // Predicated region
    $region42: #{ff_gauss_vae_forward.10} parent=1 // pred_check
      _
    $region43: #{ff_gauss_vae_forward.10} parent=1 // pred_check_branch
      %45 = sbr.rel (0) target = $region45
    $region44: #{ff_gauss_vae_forward.10} parent=1 // pred_region
      _
    $region45: #{ff_gauss_vae_forward.10} parent=1 // pred_fallthru
      _
    // Predicated region
    $region46: #{ff_gauss_vae_forward.10} parent=1 // pred_check
      _
    $region47: #{ff_gauss_vae_forward.10} parent=1 // pred_check_branch
      %47 = sbr.rel (0) target = $region49
    $region48: #{ff_gauss_vae_forward.10} parent=1 // pred_region
      _
    $region49: #{ff_gauss_vae_forward.10} parent=1 // pred_fallthru
      _
    // Predicated region
    $region50: #{ff_gauss_vae_forward.10} parent=1 // pred_check
      _
    $region51: #{ff_gauss_vae_forward.10} parent=1 // pred_check_branch
      %49 = sbr.rel (0) target = $region53
    $region52: #{ff_gauss_vae_forward.10} parent=1 // pred_region
      _
    $region53: #{ff_gauss_vae_forward.10} parent=1 // pred_fallthru
      _
    // Predicated region
    $region54: #{ff_gauss_vae_forward.10} parent=1 // pred_check
      _
    $region55: #{ff_gauss_vae_forward.10} parent=1 // pred_check_branch
      %51 = sbr.rel (0) target = $region57
    $region56: #{ff_gauss_vae_forward.10} parent=1 // pred_region
      _
    $region57: #{ff_gauss_vae_forward.10} parent=1 // pred_fallthru
      _
    %v52 = vld [vmem:[%s0] sm:$0xff]
    %v53 = vld [vmem:[%s2] sm:$0xff]
    %v54 = vld [vmem:[%s2 + $0x8] sm:$0xff]
    %v55 = vld [vmem:[%s2 + $0x10] sm:$0xff]
    %v56 = vld [vmem:[%s2 + $0x18] sm:$0xff]
    %v57 = vld [vmem:[%s2 + $0x20] sm:$0xff]
    %v58 = vld [vmem:[%s2 + $0x28] sm:$0xff]
    %v59 = vld [vmem:[%s2 + $0x30] sm:$0xff]
    %v60 = vld [vmem:[%s2 + $0x38] sm:$0xff]
    %v61 = vld [vmem:[%s2 + $0x40] sm:$0xff]
    %v62 = vld [vmem:[%s2 + $0x48] sm:$0xff]
    %v63 = vld [vmem:[%s2 + $0x50] sm:$0xff]
    %v64 = vld [vmem:[%s2 + $0x58] sm:$0xff]
    %v65 = vld [vmem:[%s2 + $0x60] sm:$0xff]
    %v66 = vld [vmem:[%s2 + $0x68] sm:$0xff]
    %v67 = vld [vmem:[%s2 + $0x70] sm:$0xff]
    %v68 = vld [vmem:[%s2 + $0x78] sm:$0xff]
    %v69 = vld [vmem:[%s2 + $0x80] sm:$0xff]
    %v70 = vld [vmem:[%s2 + $0x88] sm:$0xff]
    %v71 = vld [vmem:[%s2 + $0x90] sm:$0xff]
    %v72 = vld [vmem:[%s2 + $0x98] sm:$0xff]
    %v73 = vld [vmem:[%s2 + $0xa0] sm:$0xff]
    %v74 = vld [vmem:[%s2 + $0xa8] sm:$0xff]
    %v75 = vld [vmem:[%s2 + $0xb0] sm:$0xff]
    %v76 = vld [vmem:[%s2 + $0xb8] sm:$0xff]
    %v77 = vld [vmem:[%s2 + $0xc0] sm:$0xff]
    %v78 = vld [vmem:[%s2 + $0xc8] sm:$0xff]
    %v79 = vld [vmem:[%s2 + $0xd0] sm:$0xff]
    %v80 = vld [vmem:[%s2 + $0xd8] sm:$0xff]
    %v81 = vld [vmem:[%s2 + $0xe0] sm:$0xff]
    %v82 = vld [vmem:[%s2 + $0xe8] sm:$0xff]
    %v83 = vld [vmem:[%s2 + $0xf0] sm:$0xff]
    %v84 = vld [vmem:[%s2 + $0xf8] sm:$0xff]
    %v85 = vld [vmem:[%s2 + $0x100] sm:$0xff]
    %v86 = vld [vmem:[%s2 + $0x108] sm:$0xff]
    %v87 = vld [vmem:[%s2 + $0x110] sm:$0xff]
    %v88 = vld [vmem:[%s2 + $0x118] sm:$0xff]
    %v89 = vld [vmem:[%s2 + $0x120] sm:$0xff]
    %v90 = vld [vmem:[%s2 + $0x128] sm:$0xff]
    %v91 = vld [vmem:[%s2 + $0x130] sm:$0xff]
    %v92 = vld [vmem:[%s2 + $0x138] sm:$0xff]
    %v93 = vld [vmem:[%s2 + $0x140] sm:$0xff]
    %v94 = vld [vmem:[%s2 + $0x148] sm:$0xff]
    %v95 = vld [vmem:[%s2 + $0x150] sm:$0xff]
    %v96 = vld [vmem:[%s2 + $0x158] sm:$0xff]
    %v97 = vld [vmem:[%s2 + $0x160] sm:$0xff]
    %v98 = vld [vmem:[%s2 + $0x168] sm:$0xff]
    %v99 = vld [vmem:[%s2 + $0x170] sm:$0xff]
    %v100 = vld [vmem:[%s2 + $0x178] sm:$0xff]
    %v101 = vld [vmem:[%s2 + $0x180] sm:$0xff]
    %v102 = vld [vmem:[%s2 + $0x188] sm:$0xff]
    %v103 = vld [vmem:[%s2 + $0x190] sm:$0xff]
    %v104 = vld [vmem:[%s2 + $0x198] sm:$0xff]
    %v105 = vld [vmem:[%s2 + $0x1a0] sm:$0xff]
    %v106 = vld [vmem:[%s2 + $0x1a8] sm:$0xff]
    %v107 = vld [vmem:[%s2 + $0x1b0] sm:$0xff]
    %v108 = vld [vmem:[%s2 + $0x1b8] sm:$0xff]
    %v109 = vld [vmem:[%s2 + $0x1c0] sm:$0xff]
    %v110 = vld [vmem:[%s2 + $0x1c8] sm:$0xff]
    %v111 = vld [vmem:[%s2 + $0x1d0] sm:$0xff]
    %v112 = vld [vmem:[%s2 + $0x1d8] sm:$0xff]
    %v113 = vld [vmem:[%s2 + $0x1e0] sm:$0xff]
    %v114 = vld [vmem:[%s2 + $0x1e8] sm:$0xff]
    %v115 = vld [vmem:[%s2 + $0x1f0] sm:$0xff]
    %v116 = vld [vmem:[%s2 + $0x1f8] sm:$0xff]
    %v117 = vld [vmem:[%s2 + $0x200] sm:$0xff]
    %v118 = vld [vmem:[%s2 + $0x208] sm:$0xff]
    %v119 = vld [vmem:[%s2 + $0x210] sm:$0xff]
    %v120 = vld [vmem:[%s2 + $0x218] sm:$0xff]
    %v121 = vld [vmem:[%s2 + $0x220] sm:$0xff]
    %v122 = vld [vmem:[%s2 + $0x228] sm:$0xff]
    %v123 = vld [vmem:[%s2 + $0x230] sm:$0xff]
    %v124 = vld [vmem:[%s2 + $0x238] sm:$0xff]
    %v125 = vld [vmem:[%s2 + $0x240] sm:$0xff]
    %v126 = vld [vmem:[%s2 + $0x248] sm:$0xff]
    %v127 = vld [vmem:[%s2 + $0x250] sm:$0xff]
    %v128 = vld [vmem:[%s2 + $0x258] sm:$0xff]
    %v129 = vld [vmem:[%s2 + $0x260] sm:$0xff]
    %v130 = vld [vmem:[%s2 + $0x268] sm:$0xff]
    %v131 = vld [vmem:[%s2 + $0x270] sm:$0xff]
    %v132 = vld [vmem:[%s2 + $0x278] sm:$0xff]
    %v133 = vld [vmem:[%s2 + $0x280] sm:$0xff]
    %v134 = vld [vmem:[%s2 + $0x288] sm:$0xff]
    %v135 = vld [vmem:[%s2 + $0x290] sm:$0xff]
    %v136 = vld [vmem:[%s2 + $0x298] sm:$0xff]
    %v137 = vld [vmem:[%s2 + $0x2a0] sm:$0xff]
    %v138 = vld [vmem:[%s2 + $0x2a8] sm:$0xff]
    %v139 = vld [vmem:[%s2 + $0x2b0] sm:$0xff]
    %v140 = vld [vmem:[%s2 + $0x2b8] sm:$0xff]
    %v141 = vld [vmem:[%s2 + $0x2c0] sm:$0xff]
    %v142 = vld [vmem:[%s2 + $0x2c8] sm:$0xff]
    %v143 = vld [vmem:[%s2 + $0x2d0] sm:$0xff]
    %v144 = vld [vmem:[%s2 + $0x2d8] sm:$0xff]
    %v145 = vld [vmem:[%s2 + $0x2e0] sm:$0xff]
    %v146 = vld [vmem:[%s2 + $0x2e8] sm:$0xff]
    %v147 = vld [vmem:[%s2 + $0x2f0] sm:$0xff]
    %v148 = vld [vmem:[%s2 + $0x2f8] sm:$0xff]
    %v149 = vld [vmem:[%s2 + $0x300] sm:$0xff]
    %v150 = vld [vmem:[%s2 + $0x308] sm:$0xff]
    %v151 = vld [vmem:[%s2 + $0x310] sm:$0xff]
    %v152 = vld [vmem:[%s2 + $0x318] sm:$0xff]
    %v153 = vld [vmem:[%s2 + $0x320] sm:$0xff]
    %v154 = vld [vmem:[%s2 + $0x328] sm:$0xff]
    %v155 = vld [vmem:[%s2 + $0x330] sm:$0xff]
    %v156 = vld [vmem:[%s2 + $0x338] sm:$0xff]
    %v157 = vld [vmem:[%s2 + $0x340] sm:$0xff]
    %v158 = vld [vmem:[%s2 + $0x348] sm:$0xff]
    %v159 = vld [vmem:[%s2 + $0x350] sm:$0xff]
    %v160 = vld [vmem:[%s2 + $0x358] sm:$0xff]
    %v161 = vld [vmem:[%s2 + $0x360] sm:$0xff]
    %v162 = vld [vmem:[%s2 + $0x368] sm:$0xff]
    %v163 = vld [vmem:[%s2 + $0x370] sm:$0xff]
    %v164 = vld [vmem:[%s2 + $0x378] sm:$0xff]
    %v165 = vld [vmem:[%s2 + $0x380] sm:$0xff]
    %v166 = vld [vmem:[%s2 + $0x388] sm:$0xff]
    %v167 = vld [vmem:[%s2 + $0x390] sm:$0xff]
    %v168 = vld [vmem:[%s2 + $0x398] sm:$0xff]
    %v169 = vld [vmem:[%s2 + $0x3a0] sm:$0xff]
    %v170 = vld [vmem:[%s2 + $0x3a8] sm:$0xff]
    %v171 = vld [vmem:[%s2 + $0x3b0] sm:$0xff]
    %v172 = vld [vmem:[%s2 + $0x3b8] sm:$0xff]
    %v173 = vld [vmem:[%s2 + $0x3c0] sm:$0xff]
    %v174 = vld [vmem:[%s2 + $0x3c8] sm:$0xff]
    %v175 = vld [vmem:[%s2 + $0x3d0] sm:$0xff]
    %v176 = vld [vmem:[%s2 + $0x3d8] sm:$0xff]
    %v177 = vld [vmem:[%s2 + $0x3e0] sm:$0xff]
    %v178 = vld [vmem:[%s2 + $0x3e8] sm:$0xff]
    %v179 = vld [vmem:[%s2 + $0x3f0] sm:$0xff]
    %v180 = vld [vmem:[%s2 + $0x3f8] sm:$0xff]
    %v181 = vld [vmem:[%s3] sm:$0x3]
    %v183 = vlaneseq
    %v184 = vshrl.u32 %v183, 7
    %v185 = vsub.s32 0, %v184
    %v186 = vrot.slane %v181, %v185
    %v187 = vlaneseq
    %v188 = vshrl.u32 %v187, 7
    %v189 = vsub.s32 1, %v188
    %v190 = vrot.slane %v181, %v189
    %v194 = vcombine.high %v52, %v52
    %v196 = vunpack.c.l.s4 1983009808
    %v197 = vunpack.c.0.s8 %v196
    %v198 = vlaneseq
    %v199 = vshrl.u32 %v198, 7
    %v200 = vsub.s32 %v197, %v199
    %v201 = vrot.slane %v52, %v200
    %v203 = vunpack.c.l.s4 1983009808
    %v204 = vunpack.c.0.s8 %v203
    %v205 = vlaneseq
    %v206 = vshrl.u32 %v205, 7
    %v207 = vsub.s32 %v204, %v206
    %v208 = vrot.slane %v194, %v207
    %v209 = vcombine.high %v201, %v201
    %v210 = vcombine.high %v208, %v208
    %215 = vmatprep.subr.mxu0 %v54
    %216 = vmatpush1.msra.mxu0 %v53
    %217 = vmatprep.subr.mxu0 %v56
    %218 = vmatpush1.msra.mxu0 %v55
    %219 = vmatprep.subr.mxu0 %v58
    %220 = vmatpush1.msra.mxu0 %v57
    %221 = vmatprep.subr.mxu0 %v60
    %222 = vmatpush1.msra.mxu0 %v59
    %223 = vmatprep.subr.mxu0 %v62
    %224 = vmatpush1.msra.mxu0 %v61
    %225 = vmatprep.subr.mxu0 %v64
    %226 = vmatpush1.msra.mxu0 %v63
    %227 = vmatprep.subr.mxu0 %v66
    %228 = vmatpush1.msra.mxu0 %v65
    %229 = vmatprep.subr.mxu0 %v68
    %230 = vmatpush1.msra.mxu0 %v67
    %231 = vmatprep.subr.mxu0 %v70
    %232 = vmatpush1.msra.mxu0 %v69
    %233 = vmatprep.subr.mxu0 %v72
    %234 = vmatpush1.msra.mxu0 %v71
    %235 = vmatprep.subr.mxu0 %v74
    %236 = vmatpush1.msra.mxu0 %v73
    %237 = vmatprep.subr.mxu0 %v76
    %238 = vmatpush1.msra.mxu0 %v75
    %239 = vmatprep.subr.mxu0 %v78
    %240 = vmatpush1.msra.mxu0 %v77
    %241 = vmatprep.subr.mxu0 %v80
    %242 = vmatpush1.msra.mxu0 %v79
    %243 = vmatprep.subr.mxu0 %v82
    %244 = vmatpush1.msra.mxu0 %v81
    %245 = vmatprep.subr.mxu0 %v84
    %246 = vmatpush1.msra.mxu0 %v83
    %247 = vmatprep.subr.mxu0 %v86
    %248 = vmatpush1.msra.mxu0 %v85
    %249 = vmatprep.subr.mxu0 %v88
    %250 = vmatpush1.msra.mxu0 %v87
    %251 = vmatprep.subr.mxu0 %v90
    %252 = vmatpush1.msra.mxu0 %v89
    %253 = vmatprep.subr.mxu0 %v92
    %254 = vmatpush1.msra.mxu0 %v91
    %255 = vmatprep.subr.mxu0 %v94
    %256 = vmatpush1.msra.mxu0 %v93
    %257 = vmatprep.subr.mxu0 %v96
    %258 = vmatpush1.msra.mxu0 %v95
    %259 = vmatprep.subr.mxu0 %v98
    %260 = vmatpush1.msra.mxu0 %v97
    %261 = vmatprep.subr.mxu0 %v100
    %262 = vmatpush1.msra.mxu0 %v99
    %263 = vmatprep.subr.mxu0 %v102
    %264 = vmatpush1.msra.mxu0 %v101
    %265 = vmatprep.subr.mxu0 %v104
    %266 = vmatpush1.msra.mxu0 %v103
    %267 = vmatprep.subr.mxu0 %v106
    %268 = vmatpush1.msra.mxu0 %v105
    %269 = vmatprep.subr.mxu0 %v108
    %270 = vmatpush1.msra.mxu0 %v107
    %271 = vmatprep.subr.mxu0 %v110
    %272 = vmatpush1.msra.mxu0 %v109
    %273 = vmatprep.subr.mxu0 %v112
    %274 = vmatpush1.msra.mxu0 %v111
    %275 = vmatprep.subr.mxu0 %v114
    %276 = vmatpush1.msra.mxu0 %v113
    %277 = vmatprep.subr.mxu0 %v116
    %278 = vmatpush1.msra.mxu0 %v115
    %279 = vmatprep.mubr.f32.mxu0 %v209
    %280 = vmatmul.mubr.f32.gmra.mrb[0].mxu0 %v201
    %v281 = vpop.f32.mrb[0].mxu0
    %v282 = vadd.f32 %v186, %v281
    %v283 = vpop.f32.mrb[0].mxu0
    %v284 = vadd.f32 %v190, %v283
    %285 = vdwg.mxu0
    %286 = vmatprep.subr.mxu0 %v118
    %287 = vmatpush1.msra.mxu0 %v117
    %288 = vmatprep.subr.mxu0 %v120
    %289 = vmatpush1.msra.mxu0 %v119
    %290 = vmatprep.subr.mxu0 %v122
    %291 = vmatpush1.msra.mxu0 %v121
    %292 = vmatprep.subr.mxu0 %v124
    %293 = vmatpush1.msra.mxu0 %v123
    %294 = vmatprep.subr.mxu0 %v126
    %295 = vmatpush1.msra.mxu0 %v125
    %296 = vmatprep.subr.mxu0 %v128
    %297 = vmatpush1.msra.mxu0 %v127
    %298 = vmatprep.subr.mxu0 %v130
    %299 = vmatpush1.msra.mxu0 %v129
    %300 = vmatprep.subr.mxu0 %v132
    %301 = vmatpush1.msra.mxu0 %v131
    %302 = vmatprep.subr.mxu0 %v134
    %303 = vmatpush1.msra.mxu0 %v133
    %304 = vmatprep.subr.mxu0 %v136
    %305 = vmatpush1.msra.mxu0 %v135
    %306 = vmatprep.subr.mxu0 %v138
    %307 = vmatpush1.msra.mxu0 %v137
    %308 = vmatprep.subr.mxu0 %v140
    %309 = vmatpush1.msra.mxu0 %v139
    %310 = vmatprep.subr.mxu0 %v142
    %311 = vmatpush1.msra.mxu0 %v141
    %312 = vmatprep.subr.mxu0 %v144
    %313 = vmatpush1.msra.mxu0 %v143
    %314 = vmatprep.subr.mxu0 %v146
    %315 = vmatpush1.msra.mxu0 %v145
    %316 = vmatprep.subr.mxu0 %v148
    %317 = vmatpush1.msra.mxu0 %v147
    %318 = vmatprep.subr.mxu0 %v150
    %319 = vmatpush1.msra.mxu0 %v149
    %320 = vmatprep.subr.mxu0 %v152
    %321 = vmatpush1.msra.mxu0 %v151
    %322 = vmatprep.subr.mxu0 %v154
    %323 = vmatpush1.msra.mxu0 %v153
    %324 = vmatprep.subr.mxu0 %v156
    %325 = vmatpush1.msra.mxu0 %v155
    %326 = vmatprep.subr.mxu0 %v158
    %327 = vmatpush1.msra.mxu0 %v157
    %328 = vmatprep.subr.mxu0 %v160
    %329 = vmatpush1.msra.mxu0 %v159
    %330 = vmatprep.subr.mxu0 %v162
    %331 = vmatpush1.msra.mxu0 %v161
    %332 = vmatprep.subr.mxu0 %v164
    %333 = vmatpush1.msra.mxu0 %v163
    %334 = vmatprep.subr.mxu0 %v166
    %335 = vmatpush1.msra.mxu0 %v165
    %336 = vmatprep.subr.mxu0 %v168
    %337 = vmatpush1.msra.mxu0 %v167
    %338 = vmatprep.subr.mxu0 %v170
    %339 = vmatpush1.msra.mxu0 %v169
    %340 = vmatprep.subr.mxu0 %v172
    %341 = vmatpush1.msra.mxu0 %v171
    %342 = vmatprep.subr.mxu0 %v174
    %343 = vmatpush1.msra.mxu0 %v173
    %344 = vmatprep.subr.mxu0 %v176
    %345 = vmatpush1.msra.mxu0 %v175
    %346 = vmatprep.subr.mxu0 %v178
    %347 = vmatpush1.msra.mxu0 %v177
    %348 = vmatprep.subr.mxu0 %v180
    %349 = vmatpush1.msra.mxu0 %v179
    %350 = vmatprep.mubr.f32.mxu0 %v210
    %351 = vmatmul.mubr.f32.gmra.mrb[0].mxu0 %v208
    %v352 = vpop.f32.mrb[0].mxu0
    %v353 = vadd.f32 %v282, %v352
    %v354 = vpop.f32.mrb[0].mxu0
    %v355 = vadd.f32 %v284, %v354
    %356 = vdwg.mxu0
    %v357 = vmax.f32 %v353, 0.0
    %v358 = vmax.f32 %v355, 0.0
    %v359 = vld [vmem:[%s4] sm:$0xff]
    %v360 = vld [vmem:[%s4 + $0x8] sm:$0xff]
    %v361 = vld [vmem:[%s4 + $0x10] sm:$0xff]
    %v362 = vld [vmem:[%s4 + $0x18] sm:$0xff]
    %v363 = vld [vmem:[%s4 + $0x20] sm:$0xff]
    %v364 = vld [vmem:[%s4 + $0x28] sm:$0xff]
    %v365 = vld [vmem:[%s4 + $0x30] sm:$0xff]
    %v366 = vld [vmem:[%s4 + $0x38] sm:$0xff]
    %v367 = vld [vmem:[%s4 + $0x40] sm:$0xff]
    %v368 = vld [vmem:[%s4 + $0x48] sm:$0xff]
    %v369 = vld [vmem:[%s4 + $0x50] sm:$0xff]
    %v370 = vld [vmem:[%s4 + $0x58] sm:$0xff]
    %v371 = vld [vmem:[%s4 + $0x60] sm:$0xff]
    %v372 = vld [vmem:[%s4 + $0x68] sm:$0xff]
    %v373 = vld [vmem:[%s4 + $0x70] sm:$0xff]
    %v374 = vld [vmem:[%s4 + $0x78] sm:$0xff]
    %v375 = vld [vmem:[%s4 + $0x80] sm:$0xff]
    %v376 = vld [vmem:[%s4 + $0x88] sm:$0xff]
    %v377 = vld [vmem:[%s4 + $0x90] sm:$0xff]
    %v378 = vld [vmem:[%s4 + $0x98] sm:$0xff]
    %v379 = vld [vmem:[%s4 + $0xa0] sm:$0xff]
    %v380 = vld [vmem:[%s4 + $0xa8] sm:$0xff]
    %v381 = vld [vmem:[%s4 + $0xb0] sm:$0xff]
    %v382 = vld [vmem:[%s4 + $0xb8] sm:$0xff]
    %v383 = vld [vmem:[%s4 + $0xc0] sm:$0xff]
    %v384 = vld [vmem:[%s4 + $0xc8] sm:$0xff]
    %v385 = vld [vmem:[%s4 + $0xd0] sm:$0xff]
    %v386 = vld [vmem:[%s4 + $0xd8] sm:$0xff]
    %v387 = vld [vmem:[%s4 + $0xe0] sm:$0xff]
    %v388 = vld [vmem:[%s4 + $0xe8] sm:$0xff]
    %v389 = vld [vmem:[%s4 + $0xf0] sm:$0xff]
    %v390 = vld [vmem:[%s4 + $0xf8] sm:$0xff]
    %v391 = vld [vmem:[%s4 + $0x100] sm:$0xff]
    %v392 = vld [vmem:[%s4 + $0x108] sm:$0xff]
    %v393 = vld [vmem:[%s4 + $0x110] sm:$0xff]
    %v394 = vld [vmem:[%s4 + $0x118] sm:$0xff]
    %v395 = vld [vmem:[%s4 + $0x120] sm:$0xff]
    %v396 = vld [vmem:[%s4 + $0x128] sm:$0xff]
    %v397 = vld [vmem:[%s4 + $0x130] sm:$0xff]
    %v398 = vld [vmem:[%s4 + $0x138] sm:$0xff]
    %v399 = vld [vmem:[%s4 + $0x140] sm:$0xff]
    %v400 = vld [vmem:[%s4 + $0x148] sm:$0xff]
    %v401 = vld [vmem:[%s4 + $0x150] sm:$0xff]
    %v402 = vld [vmem:[%s4 + $0x158] sm:$0xff]
    %v403 = vld [vmem:[%s4 + $0x160] sm:$0xff]
    %v404 = vld [vmem:[%s4 + $0x168] sm:$0xff]
    %v405 = vld [vmem:[%s4 + $0x170] sm:$0xff]
    %v406 = vld [vmem:[%s4 + $0x178] sm:$0xff]
    %v407 = vld [vmem:[%s4 + $0x180] sm:$0xff]
    %v408 = vld [vmem:[%s4 + $0x188] sm:$0xff]
    %v409 = vld [vmem:[%s4 + $0x190] sm:$0xff]
    %v410 = vld [vmem:[%s4 + $0x198] sm:$0xff]
    %v411 = vld [vmem:[%s4 + $0x1a0] sm:$0xff]
    %v412 = vld [vmem:[%s4 + $0x1a8] sm:$0xff]
    %v413 = vld [vmem:[%s4 + $0x1b0] sm:$0xff]
    %v414 = vld [vmem:[%s4 + $0x1b8] sm:$0xff]
    %v415 = vld [vmem:[%s4 + $0x1c0] sm:$0xff]
    %v416 = vld [vmem:[%s4 + $0x1c8] sm:$0xff]
    %v417 = vld [vmem:[%s4 + $0x1d0] sm:$0xff]
    %v418 = vld [vmem:[%s4 + $0x1d8] sm:$0xff]
    %v419 = vld [vmem:[%s4 + $0x1e0] sm:$0xff]
    %v420 = vld [vmem:[%s4 + $0x1e8] sm:$0xff]
    %v421 = vld [vmem:[%s4 + $0x1f0] sm:$0xff]
    %v422 = vld [vmem:[%s4 + $0x1f8] sm:$0xff]
    %v423 = vld [vmem:[%s5] sm:$0x3]
    %v425 = vlaneseq
    %v426 = vshrl.u32 %v425, 7
    %v427 = vsub.s32 0, %v426
    %v428 = vrot.slane %v423, %v427
    %v429 = vlaneseq
    %v430 = vshrl.u32 %v429, 7
    %v431 = vsub.s32 1, %v430
    %v432 = vrot.slane %v423, %v431
    %435 = vmatprep.subr.mxu0 %v360
    %436 = vmatpush1.msra.mxu0 %v359
    %437 = vmatprep.subr.mxu0 %v362
    %438 = vmatpush1.msra.mxu0 %v361
    %439 = vmatprep.subr.mxu0 %v364
    %440 = vmatpush1.msra.mxu0 %v363
    %441 = vmatprep.subr.mxu0 %v366
    %442 = vmatpush1.msra.mxu0 %v365
    %443 = vmatprep.subr.mxu0 %v368
    %444 = vmatpush1.msra.mxu0 %v367
    %445 = vmatprep.subr.mxu0 %v370
    %446 = vmatpush1.msra.mxu0 %v369
    %447 = vmatprep.subr.mxu0 %v372
    %448 = vmatpush1.msra.mxu0 %v371
    %449 = vmatprep.subr.mxu0 %v374
    %450 = vmatpush1.msra.mxu0 %v373
    %451 = vmatprep.subr.mxu0 %v376
    %452 = vmatpush1.msra.mxu0 %v375
    %453 = vmatprep.subr.mxu0 %v378
    %454 = vmatpush1.msra.mxu0 %v377
    %455 = vmatprep.subr.mxu0 %v380
    %456 = vmatpush1.msra.mxu0 %v379
    %457 = vmatprep.subr.mxu0 %v382
    %458 = vmatpush1.msra.mxu0 %v381
    %459 = vmatprep.subr.mxu0 %v384
    %460 = vmatpush1.msra.mxu0 %v383
    %461 = vmatprep.subr.mxu0 %v386
    %462 = vmatpush1.msra.mxu0 %v385
    %463 = vmatprep.subr.mxu0 %v388
    %464 = vmatpush1.msra.mxu0 %v387
    %465 = vmatprep.subr.mxu0 %v390
    %466 = vmatpush1.msra.mxu0 %v389
    %467 = vmatprep.subr.mxu0 %v392
    %468 = vmatpush1.msra.mxu0 %v391
    %469 = vmatprep.subr.mxu0 %v394
    %470 = vmatpush1.msra.mxu0 %v393
    %471 = vmatprep.subr.mxu0 %v396
    %472 = vmatpush1.msra.mxu0 %v395
    %473 = vmatprep.subr.mxu0 %v398
    %474 = vmatpush1.msra.mxu0 %v397
    %475 = vmatprep.subr.mxu0 %v400
    %476 = vmatpush1.msra.mxu0 %v399
    %477 = vmatprep.subr.mxu0 %v402
    %478 = vmatpush1.msra.mxu0 %v401
    %479 = vmatprep.subr.mxu0 %v404
    %480 = vmatpush1.msra.mxu0 %v403
    %481 = vmatprep.subr.mxu0 %v406
    %482 = vmatpush1.msra.mxu0 %v405
    %483 = vmatprep.subr.mxu0 %v408
    %484 = vmatpush1.msra.mxu0 %v407
    %485 = vmatprep.subr.mxu0 %v410
    %486 = vmatpush1.msra.mxu0 %v409
    %487 = vmatprep.subr.mxu0 %v412
    %488 = vmatpush1.msra.mxu0 %v411
    %489 = vmatprep.subr.mxu0 %v414
    %490 = vmatpush1.msra.mxu0 %v413
    %491 = vmatprep.subr.mxu0 %v416
    %492 = vmatpush1.msra.mxu0 %v415
    %493 = vmatprep.subr.mxu0 %v418
    %494 = vmatpush1.msra.mxu0 %v417
    %495 = vmatprep.subr.mxu0 %v420
    %496 = vmatpush1.msra.mxu0 %v419
    %497 = vmatprep.subr.mxu0 %v422
    %498 = vmatpush1.msra.mxu0 %v421
    %499 = vmatprep.mubr.f32.mxu0 %v358
    %500 = vmatmul.mubr.f32.gmra.mrb[0].mxu0 %v357
    %v501 = vpop.f32.mrb[0].mxu0
    %v502 = vadd.f32 %v428, %v501
    %v503 = vpop.f32.mrb[0].mxu0
    %v504 = vadd.f32 %v432, %v503
    %505 = vdwg.mxu0
    %v506 = vmax.f32 %v502, 0.0
    %v507 = vmax.f32 %v504, 0.0
    %v508 = vld [vmem:[%s6] sm:$0xff]
    %v509 = vld [vmem:[%s6 + $0x8] sm:$0xff]
    %v510 = vld [vmem:[%s6 + $0x10] sm:$0xff]
    %v511 = vld [vmem:[%s6 + $0x18] sm:$0xff]
    %v512 = vld [vmem:[%s6 + $0x20] sm:$0xff]
    %v513 = vld [vmem:[%s6 + $0x28] sm:$0xff]
    %v514 = vld [vmem:[%s6 + $0x30] sm:$0xff]
    %v515 = vld [vmem:[%s6 + $0x38] sm:$0xff]
    %v516 = vld [vmem:[%s6 + $0x40] sm:$0xff]
    %v517 = vld [vmem:[%s6 + $0x48] sm:$0xff]
    %v518 = vld [vmem:[%s6 + $0x50] sm:$0xff]
    %v519 = vld [vmem:[%s6 + $0x58] sm:$0xff]
    %v520 = vld [vmem:[%s6 + $0x60] sm:$0xff]
    %v521 = vld [vmem:[%s6 + $0x68] sm:$0xff]
    %v522 = vld [vmem:[%s6 + $0x70] sm:$0xff]
    %v523 = vld [vmem:[%s6 + $0x78] sm:$0xff]
    %v524 = vld [vmem:[%s6 + $0x80] sm:$0xff]
    %v525 = vld [vmem:[%s6 + $0x88] sm:$0xff]
    %v526 = vld [vmem:[%s6 + $0x90] sm:$0xff]
    %v527 = vld [vmem:[%s6 + $0x98] sm:$0xff]
    %v528 = vld [vmem:[%s6 + $0xa0] sm:$0xff]
    %v529 = vld [vmem:[%s6 + $0xa8] sm:$0xff]
    %v530 = vld [vmem:[%s6 + $0xb0] sm:$0xff]
    %v531 = vld [vmem:[%s6 + $0xb8] sm:$0xff]
    %v532 = vld [vmem:[%s6 + $0xc0] sm:$0xff]
    %v533 = vld [vmem:[%s6 + $0xc8] sm:$0xff]
    %v534 = vld [vmem:[%s6 + $0xd0] sm:$0xff]
    %v535 = vld [vmem:[%s6 + $0xd8] sm:$0xff]
    %v536 = vld [vmem:[%s6 + $0xe0] sm:$0xff]
    %v537 = vld [vmem:[%s6 + $0xe8] sm:$0xff]
    %v538 = vld [vmem:[%s6 + $0xf0] sm:$0xff]
    %v539 = vld [vmem:[%s6 + $0xf8] sm:$0xff]
    %v540 = vld [vmem:[%s7] sm:$0x1]
    %v542 = vlaneseq
    %v543 = vshrl.u32 %v542, 7
    %v544 = vsub.s32 0, %v543
    %v545 = vrot.slane %v540, %v544
    %547 = vmatprep.subr.mxu0 0.0
    %548 = vmatpush1.msra.mxu0 %v508
    %549 = vmatprep.subr.mxu0 0.0
    %550 = vmatpush1.msra.mxu0 %v509
    %551 = vmatprep.subr.mxu0 0.0
    %552 = vmatpush1.msra.mxu0 %v510
    %553 = vmatprep.subr.mxu0 0.0
    %554 = vmatpush1.msra.mxu0 %v511
    %555 = vmatprep.subr.mxu0 0.0
    %556 = vmatpush1.msra.mxu0 %v512
    %557 = vmatprep.subr.mxu0 0.0
    %558 = vmatpush1.msra.mxu0 %v513
    %559 = vmatprep.subr.mxu0 0.0
    %560 = vmatpush1.msra.mxu0 %v514
    %561 = vmatprep.subr.mxu0 0.0
    %562 = vmatpush1.msra.mxu0 %v515
    %563 = vmatprep.subr.mxu0 0.0
    %564 = vmatpush1.msra.mxu0 %v516
    %565 = vmatprep.subr.mxu0 0.0
    %566 = vmatpush1.msra.mxu0 %v517
    %567 = vmatprep.subr.mxu0 0.0
    %568 = vmatpush1.msra.mxu0 %v518
    %569 = vmatprep.subr.mxu0 0.0
    %570 = vmatpush1.msra.mxu0 %v519
    %571 = vmatprep.subr.mxu0 0.0
    %572 = vmatpush1.msra.mxu0 %v520
    %573 = vmatprep.subr.mxu0 0.0
    %574 = vmatpush1.msra.mxu0 %v521
    %575 = vmatprep.subr.mxu0 0.0
    %576 = vmatpush1.msra.mxu0 %v522
    %577 = vmatprep.subr.mxu0 0.0
    %578 = vmatpush1.msra.mxu0 %v523
    %579 = vmatprep.subr.mxu0 0.0
    %580 = vmatpush1.msra.mxu0 %v524
    %581 = vmatprep.subr.mxu0 0.0
    %582 = vmatpush1.msra.mxu0 %v525
    %583 = vmatprep.subr.mxu0 0.0
    %584 = vmatpush1.msra.mxu0 %v526
    %585 = vmatprep.subr.mxu0 0.0
    %586 = vmatpush1.msra.mxu0 %v527
    %587 = vmatprep.subr.mxu0 0.0
    %588 = vmatpush1.msra.mxu0 %v528
    %589 = vmatprep.subr.mxu0 0.0
    %590 = vmatpush1.msra.mxu0 %v529
    %591 = vmatprep.subr.mxu0 0.0
    %592 = vmatpush1.msra.mxu0 %v530
    %593 = vmatprep.subr.mxu0 0.0
    %594 = vmatpush1.msra.mxu0 %v531
    %595 = vmatprep.subr.mxu0 0.0
    %596 = vmatpush1.msra.mxu0 %v532
    %597 = vmatprep.subr.mxu0 0.0
    %598 = vmatpush1.msra.mxu0 %v533
    %599 = vmatprep.subr.mxu0 0.0
    %600 = vmatpush1.msra.mxu0 %v534
    %601 = vmatprep.subr.mxu0 0.0
    %602 = vmatpush1.msra.mxu0 %v535
    %603 = vmatprep.subr.mxu0 0.0
    %604 = vmatpush1.msra.mxu0 %v536
    %605 = vmatprep.subr.mxu0 0.0
    %606 = vmatpush1.msra.mxu0 %v537
    %607 = vmatprep.subr.mxu0 0.0
    %608 = vmatpush1.msra.mxu0 %v538
    %609 = vmatprep.subr.mxu0 0.0
    %610 = vmatpush1.msra.mxu0 %v539
    %611 = vmatprep.mubr.f32.mxu0 %v507
    %612 = vmatmul.mubr.f32.gmra.mrb[0].mxu0 %v506
    %v613 = vpop.f32.mrb[0].mxu0
    %v614 = vadd.f32 %v545, %v613
    %v615 = vpop.f32.mrb[0].mxu0
    %616 = vdwg.mxu0
    %v617 = vmul.f32 %v614, 0.5
    %v618 = vmul.f32 %v617, 1.442695
    %v619 = vpow.pop %v618
    %v620 = vld [vmem:[%s1] sm:$0x3]
    %622 = vrot.lane.b32.xlu0 %v620, 8
    %v623 = vpop.permute.xlu0 %622
    %v625 = vmul.f32 %v619, %v623
    %627 = vrot.lane.b32.xlu0 %v625, 120
    %v628 = vpop.permute.xlu0 %627
    %v630 = vadd.f32 %v614, %v628
    %v631 = vld [vmem:[%s8] sm:$0xff]
    %v632 = vld [vmem:[%s8 + $0x8] sm:$0xff]
    %v633 = vld [vmem:[%s9] sm:$0x3]
    %v635 = vlaneseq
    %v636 = vshrl.u32 %v635, 7
    %v637 = vsub.s32 0, %v636
    %v638 = vrot.slane %v633, %v637
    %v639 = vlaneseq
    %v640 = vshrl.u32 %v639, 7
    %v641 = vsub.s32 1, %v640
    %v642 = vrot.slane %v633, %v641
    %vm645 = vcmask 64512
    %v647 = vsel %vm645, %v630, 0
    %649 = vmatprep.subr.mxu0 %v632
    %650 = vmatpush1.msra.mxu0 %v631
    %651 = vmatprep.subr.mxu0 0.0
    %652 = vmatpush1.msra.mxu0 0.0
    %653 = vmatprep.subr.mxu0 0.0
    %654 = vmatpush1.msra.mxu0 0.0
    %655 = vmatprep.subr.mxu0 0.0
    %656 = vmatpush1.msra.mxu0 0.0
    %657 = vmatprep.subr.mxu0 0.0
    %658 = vmatpush1.msra.mxu0 0.0
    %659 = vmatprep.subr.mxu0 0.0
    %660 = vmatpush1.msra.mxu0 0.0
    %661 = vmatprep.subr.mxu0 0.0
    %662 = vmatpush1.msra.mxu0 0.0
    %663 = vmatprep.subr.mxu0 0.0
    %664 = vmatpush1.msra.mxu0 0.0
    %665 = vmatprep.subr.mxu0 0.0
    %666 = vmatpush1.msra.mxu0 0.0
    %667 = vmatprep.subr.mxu0 0.0
    %668 = vmatpush1.msra.mxu0 0.0
    %669 = vmatprep.subr.mxu0 0.0
    %670 = vmatpush1.msra.mxu0 0.0
    %671 = vmatprep.subr.mxu0 0.0
    %672 = vmatpush1.msra.mxu0 0.0
    %673 = vmatprep.subr.mxu0 0.0
    %674 = vmatpush1.msra.mxu0 0.0
    %675 = vmatprep.subr.mxu0 0.0
    %676 = vmatpush1.msra.mxu0 0.0
    %677 = vmatprep.subr.mxu0 0.0
    %678 = vmatpush1.msra.mxu0 0.0
    %679 = vmatprep.subr.mxu0 0.0
    %680 = vmatpush1.msra.mxu0 0.0
    %681 = vmatprep.subr.mxu0 0.0
    %682 = vmatpush1.msra.mxu0 0.0
    %683 = vmatprep.subr.mxu0 0.0
    %684 = vmatpush1.msra.mxu0 0.0
    %685 = vmatprep.subr.mxu0 0.0
    %686 = vmatpush1.msra.mxu0 0.0
    %687 = vmatprep.subr.mxu0 0.0
    %688 = vmatpush1.msra.mxu0 0.0
    %689 = vmatprep.subr.mxu0 0.0
    %690 = vmatpush1.msra.mxu0 0.0
    %691 = vmatprep.subr.mxu0 0.0
    %692 = vmatpush1.msra.mxu0 0.0
    %693 = vmatprep.subr.mxu0 0.0
    %694 = vmatpush1.msra.mxu0 0.0
    %695 = vmatprep.subr.mxu0 0.0
    %696 = vmatpush1.msra.mxu0 0.0
    %697 = vmatprep.subr.mxu0 0.0
    %698 = vmatpush1.msra.mxu0 0.0
    %699 = vmatprep.subr.mxu0 0.0
    %700 = vmatpush1.msra.mxu0 0.0
    %701 = vmatprep.subr.mxu0 0.0
    %702 = vmatpush1.msra.mxu0 0.0
    %703 = vmatprep.subr.mxu0 0.0
    %704 = vmatpush1.msra.mxu0 0.0
    %705 = vmatprep.subr.mxu0 0.0
    %706 = vmatpush1.msra.mxu0 0.0
    %707 = vmatprep.subr.mxu0 0.0
    %708 = vmatpush1.msra.mxu0 0.0
    %709 = vmatprep.subr.mxu0 0.0
    %710 = vmatpush1.msra.mxu0 0.0
    %711 = vmatprep.subr.mxu0 0.0
    %712 = vmatpush1.msra.mxu0 0.0
    %713 = vmatprep.mubr.f32.mxu0 0.0
    %714 = vmatmul.mubr.f32.gmra.mrb[0].mxu0 %v647
    %v715 = vpop.f32.mrb[0].mxu0
    %v716 = vadd.f32 %v638, %v715
    %v717 = vpop.f32.mrb[0].mxu0
    %v718 = vadd.f32 %v642, %v717
    %719 = vdwg.mxu0
    %v720 = vmax.f32 %v716, 0.0
    %v721 = vmax.f32 %v718, 0.0
    %v722 = vld [vmem:[%s10] sm:$0xff]
    %v723 = vld [vmem:[%s10 + $0x8] sm:$0xff]
    %v724 = vld [vmem:[%s10 + $0x10] sm:$0xff]
    %v725 = vld [vmem:[%s10 + $0x18] sm:$0xff]
    %v726 = vld [vmem:[%s10 + $0x20] sm:$0xff]
    %v727 = vld [vmem:[%s10 + $0x28] sm:$0xff]
    %v728 = vld [vmem:[%s10 + $0x30] sm:$0xff]
    %v729 = vld [vmem:[%s10 + $0x38] sm:$0xff]
    %v730 = vld [vmem:[%s10 + $0x40] sm:$0xff]
    %v731 = vld [vmem:[%s10 + $0x48] sm:$0xff]
    %v732 = vld [vmem:[%s10 + $0x50] sm:$0xff]
    %v733 = vld [vmem:[%s10 + $0x58] sm:$0xff]
    %v734 = vld [vmem:[%s10 + $0x60] sm:$0xff]
    %v735 = vld [vmem:[%s10 + $0x68] sm:$0xff]
    %v736 = vld [vmem:[%s10 + $0x70] sm:$0xff]
    %v737 = vld [vmem:[%s10 + $0x78] sm:$0xff]
    %v738 = vld [vmem:[%s10 + $0x80] sm:$0xff]
    %v739 = vld [vmem:[%s10 + $0x88] sm:$0xff]
    %v740 = vld [vmem:[%s10 + $0x90] sm:$0xff]
    %v741 = vld [vmem:[%s10 + $0x98] sm:$0xff]
    %v742 = vld [vmem:[%s10 + $0xa0] sm:$0xff]
    %v743 = vld [vmem:[%s10 + $0xa8] sm:$0xff]
    %v744 = vld [vmem:[%s10 + $0xb0] sm:$0xff]
    %v745 = vld [vmem:[%s10 + $0xb8] sm:$0xff]
    %v746 = vld [vmem:[%s10 + $0xc0] sm:$0xff]
    %v747 = vld [vmem:[%s10 + $0xc8] sm:$0xff]
    %v748 = vld [vmem:[%s10 + $0xd0] sm:$0xff]
    %v749 = vld [vmem:[%s10 + $0xd8] sm:$0xff]
    %v750 = vld [vmem:[%s10 + $0xe0] sm:$0xff]
    %v751 = vld [vmem:[%s10 + $0xe8] sm:$0xff]
    %v752 = vld [vmem:[%s10 + $0xf0] sm:$0xff]
    %v753 = vld [vmem:[%s10 + $0xf8] sm:$0xff]
    %v754 = vld [vmem:[%s10 + $0x100] sm:$0xff]
    %v755 = vld [vmem:[%s10 + $0x108] sm:$0xff]
    %v756 = vld [vmem:[%s10 + $0x110] sm:$0xff]
    %v757 = vld [vmem:[%s10 + $0x118] sm:$0xff]
    %v758 = vld [vmem:[%s10 + $0x120] sm:$0xff]
    %v759 = vld [vmem:[%s10 + $0x128] sm:$0xff]
    %v760 = vld [vmem:[%s10 + $0x130] sm:$0xff]
    %v761 = vld [vmem:[%s10 + $0x138] sm:$0xff]
    %v762 = vld [vmem:[%s10 + $0x140] sm:$0xff]
    %v763 = vld [vmem:[%s10 + $0x148] sm:$0xff]
    %v764 = vld [vmem:[%s10 + $0x150] sm:$0xff]
    %v765 = vld [vmem:[%s10 + $0x158] sm:$0xff]
    %v766 = vld [vmem:[%s10 + $0x160] sm:$0xff]
    %v767 = vld [vmem:[%s10 + $0x168] sm:$0xff]
    %v768 = vld [vmem:[%s10 + $0x170] sm:$0xff]
    %v769 = vld [vmem:[%s10 + $0x178] sm:$0xff]
    %v770 = vld [vmem:[%s10 + $0x180] sm:$0xff]
    %v771 = vld [vmem:[%s10 + $0x188] sm:$0xff]
    %v772 = vld [vmem:[%s10 + $0x190] sm:$0xff]
    %v773 = vld [vmem:[%s10 + $0x198] sm:$0xff]
    %v774 = vld [vmem:[%s10 + $0x1a0] sm:$0xff]
    %v775 = vld [vmem:[%s10 + $0x1a8] sm:$0xff]
    %v776 = vld [vmem:[%s10 + $0x1b0] sm:$0xff]
    %v777 = vld [vmem:[%s10 + $0x1b8] sm:$0xff]
    %v778 = vld [vmem:[%s10 + $0x1c0] sm:$0xff]
    %v779 = vld [vmem:[%s10 + $0x1c8] sm:$0xff]
    %v780 = vld [vmem:[%s10 + $0x1d0] sm:$0xff]
    %v781 = vld [vmem:[%s10 + $0x1d8] sm:$0xff]
    %v782 = vld [vmem:[%s10 + $0x1e0] sm:$0xff]
    %v783 = vld [vmem:[%s10 + $0x1e8] sm:$0xff]
    %v784 = vld [vmem:[%s10 + $0x1f0] sm:$0xff]
    %v785 = vld [vmem:[%s10 + $0x1f8] sm:$0xff]
    %v786 = vld [vmem:[%s11] sm:$0x3]
    %v788 = vlaneseq
    %v789 = vshrl.u32 %v788, 7
    %v790 = vsub.s32 0, %v789
    %v791 = vrot.slane %v786, %v790
    %v792 = vlaneseq
    %v793 = vshrl.u32 %v792, 7
    %v794 = vsub.s32 1, %v793
    %v795 = vrot.slane %v786, %v794
    %798 = vmatprep.subr.mxu0 %v723
    %799 = vmatpush1.msra.mxu0 %v722
    %800 = vmatprep.subr.mxu0 %v725
    %801 = vmatpush1.msra.mxu0 %v724
    %802 = vmatprep.subr.mxu0 %v727
    %803 = vmatpush1.msra.mxu0 %v726
    %804 = vmatprep.subr.mxu0 %v729
    %805 = vmatpush1.msra.mxu0 %v728
    %806 = vmatprep.subr.mxu0 %v731
    %807 = vmatpush1.msra.mxu0 %v730
    %808 = vmatprep.subr.mxu0 %v733
    %809 = vmatpush1.msra.mxu0 %v732
    %810 = vmatprep.subr.mxu0 %v735
    %811 = vmatpush1.msra.mxu0 %v734
    %812 = vmatprep.subr.mxu0 %v737
    %813 = vmatpush1.msra.mxu0 %v736
    %814 = vmatprep.subr.mxu0 %v739
    %815 = vmatpush1.msra.mxu0 %v738
    %816 = vmatprep.subr.mxu0 %v741
    %817 = vmatpush1.msra.mxu0 %v740
    %818 = vmatprep.subr.mxu0 %v743
    %819 = vmatpush1.msra.mxu0 %v742
    %820 = vmatprep.subr.mxu0 %v745
    %821 = vmatpush1.msra.mxu0 %v744
    %822 = vmatprep.subr.mxu0 %v747
    %823 = vmatpush1.msra.mxu0 %v746
    %824 = vmatprep.subr.mxu0 %v749
    %825 = vmatpush1.msra.mxu0 %v748
    %826 = vmatprep.subr.mxu0 %v751
    %827 = vmatpush1.msra.mxu0 %v750
    %828 = vmatprep.subr.mxu0 %v753
    %829 = vmatpush1.msra.mxu0 %v752
    %830 = vmatprep.subr.mxu0 %v755
    %831 = vmatpush1.msra.mxu0 %v754
    %832 = vmatprep.subr.mxu0 %v757
    %833 = vmatpush1.msra.mxu0 %v756
    %834 = vmatprep.subr.mxu0 %v759
    %835 = vmatpush1.msra.mxu0 %v758
    %836 = vmatprep.subr.mxu0 %v761
    %837 = vmatpush1.msra.mxu0 %v760
    %838 = vmatprep.subr.mxu0 %v763
    %839 = vmatpush1.msra.mxu0 %v762
    %840 = vmatprep.subr.mxu0 %v765
    %841 = vmatpush1.msra.mxu0 %v764
    %842 = vmatprep.subr.mxu0 %v767
    %843 = vmatpush1.msra.mxu0 %v766
    %844 = vmatprep.subr.mxu0 %v769
    %845 = vmatpush1.msra.mxu0 %v768
    %846 = vmatprep.subr.mxu0 %v771
    %847 = vmatpush1.msra.mxu0 %v770
    %848 = vmatprep.subr.mxu0 %v773
    %849 = vmatpush1.msra.mxu0 %v772
    %850 = vmatprep.subr.mxu0 %v775
    %851 = vmatpush1.msra.mxu0 %v774
    %852 = vmatprep.subr.mxu0 %v777
    %853 = vmatpush1.msra.mxu0 %v776
    %854 = vmatprep.subr.mxu0 %v779
    %855 = vmatpush1.msra.mxu0 %v778
    %856 = vmatprep.subr.mxu0 %v781
    %857 = vmatpush1.msra.mxu0 %v780
    %858 = vmatprep.subr.mxu0 %v783
    %859 = vmatpush1.msra.mxu0 %v782
    %860 = vmatprep.subr.mxu0 %v785
    %861 = vmatpush1.msra.mxu0 %v784
    %862 = vmatprep.mubr.f32.mxu0 %v721
    %863 = vmatmul.mubr.f32.gmra.mrb[0].mxu0 %v720
    %v864 = vpop.f32.mrb[0].mxu0
    %v865 = vadd.f32 %v791, %v864
    %v866 = vpop.f32.mrb[0].mxu0
    %v867 = vadd.f32 %v795, %v866
    %868 = vdwg.mxu0
    %v869 = vmax.f32 %v865, 0.0
    %v870 = vmax.f32 %v867, 0.0
    %v871 = vld [vmem:[%s12] sm:$0xff]
    %v872 = vld [vmem:[%s12 + $0x8] sm:$0xff]
    %v873 = vld [vmem:[%s12 + $0x10] sm:$0xff]
    %v874 = vld [vmem:[%s12 + $0x18] sm:$0xff]
    %v875 = vld [vmem:[%s12 + $0x20] sm:$0xff]
    %v876 = vld [vmem:[%s12 + $0x28] sm:$0xff]
    %v877 = vld [vmem:[%s12 + $0x30] sm:$0xff]
    %v878 = vld [vmem:[%s12 + $0x38] sm:$0xff]
    %v879 = vld [vmem:[%s12 + $0x40] sm:$0xff]
    %v880 = vld [vmem:[%s12 + $0x48] sm:$0xff]
    %v881 = vld [vmem:[%s12 + $0x50] sm:$0xff]
    %v882 = vld [vmem:[%s12 + $0x58] sm:$0xff]
    %v883 = vld [vmem:[%s12 + $0x60] sm:$0xff]
    %v884 = vld [vmem:[%s12 + $0x68] sm:$0xff]
    %v885 = vld [vmem:[%s12 + $0x70] sm:$0xff]
    %v886 = vld [vmem:[%s12 + $0x78] sm:$0xff]
    %v887 = vld [vmem:[%s12 + $0x80] sm:$0xff]
    %v888 = vld [vmem:[%s12 + $0x88] sm:$0xff]
    %v889 = vld [vmem:[%s12 + $0x90] sm:$0xff]
    %v890 = vld [vmem:[%s12 + $0x98] sm:$0xff]
    %v891 = vld [vmem:[%s12 + $0xa0] sm:$0xff]
    %v892 = vld [vmem:[%s12 + $0xa8] sm:$0xff]
    %v893 = vld [vmem:[%s12 + $0xb0] sm:$0xff]
    %v894 = vld [vmem:[%s12 + $0xb8] sm:$0xff]
    %v895 = vld [vmem:[%s12 + $0xc0] sm:$0xff]
    %v896 = vld [vmem:[%s12 + $0xc8] sm:$0xff]
    %v897 = vld [vmem:[%s12 + $0xd0] sm:$0xff]
    %v898 = vld [vmem:[%s12 + $0xd8] sm:$0xff]
    %v899 = vld [vmem:[%s12 + $0xe0] sm:$0xff]
    %v900 = vld [vmem:[%s12 + $0xe8] sm:$0xff]
    %v901 = vld [vmem:[%s12 + $0xf0] sm:$0xff]
    %v902 = vld [vmem:[%s12 + $0xf8] sm:$0xff]
    %v903 = vld [vmem:[%s12 + $0x100] sm:$0xff]
    %v904 = vld [vmem:[%s12 + $0x108] sm:$0xff]
    %v905 = vld [vmem:[%s12 + $0x110] sm:$0xff]
    %v906 = vld [vmem:[%s12 + $0x118] sm:$0xff]
    %v907 = vld [vmem:[%s12 + $0x120] sm:$0xff]
    %v908 = vld [vmem:[%s12 + $0x128] sm:$0xff]
    %v909 = vld [vmem:[%s12 + $0x130] sm:$0xff]
    %v910 = vld [vmem:[%s12 + $0x138] sm:$0xff]
    %v911 = vld [vmem:[%s12 + $0x140] sm:$0xff]
    %v912 = vld [vmem:[%s12 + $0x148] sm:$0xff]
    %v913 = vld [vmem:[%s12 + $0x150] sm:$0xff]
    %v914 = vld [vmem:[%s12 + $0x158] sm:$0xff]
    %v915 = vld [vmem:[%s12 + $0x160] sm:$0xff]
    %v916 = vld [vmem:[%s12 + $0x168] sm:$0xff]
    %v917 = vld [vmem:[%s12 + $0x170] sm:$0xff]
    %v918 = vld [vmem:[%s12 + $0x178] sm:$0xff]
    %v919 = vld [vmem:[%s12 + $0x180] sm:$0xff]
    %v920 = vld [vmem:[%s12 + $0x188] sm:$0xff]
    %v921 = vld [vmem:[%s12 + $0x190] sm:$0xff]
    %v922 = vld [vmem:[%s12 + $0x198] sm:$0xff]
    %v923 = vld [vmem:[%s12 + $0x1a0] sm:$0xff]
    %v924 = vld [vmem:[%s12 + $0x1a8] sm:$0xff]
    %v925 = vld [vmem:[%s12 + $0x1b0] sm:$0xff]
    %v926 = vld [vmem:[%s12 + $0x1b8] sm:$0xff]
    %v927 = vld [vmem:[%s12 + $0x1c0] sm:$0xff]
    %v928 = vld [vmem:[%s12 + $0x1c8] sm:$0xff]
    %v929 = vld [vmem:[%s12 + $0x1d0] sm:$0xff]
    %v930 = vld [vmem:[%s12 + $0x1d8] sm:$0xff]
    %v931 = vld [vmem:[%s12 + $0x1e0] sm:$0xff]
    %v932 = vld [vmem:[%s12 + $0x1e8] sm:$0xff]
    %v933 = vld [vmem:[%s12 + $0x1f0] sm:$0xff]
    %v934 = vld [vmem:[%s12 + $0x1f8] sm:$0xff]
    %v935 = vld [vmem:[%s12 + $0x200] sm:$0xff]
    %v936 = vld [vmem:[%s12 + $0x208] sm:$0xff]
    %v937 = vld [vmem:[%s12 + $0x210] sm:$0xff]
    %v938 = vld [vmem:[%s12 + $0x218] sm:$0xff]
    %v939 = vld [vmem:[%s12 + $0x220] sm:$0xff]
    %v940 = vld [vmem:[%s12 + $0x228] sm:$0xff]
    %v941 = vld [vmem:[%s12 + $0x230] sm:$0xff]
    %v942 = vld [vmem:[%s12 + $0x238] sm:$0xff]
    %v943 = vld [vmem:[%s12 + $0x240] sm:$0xff]
    %v944 = vld [vmem:[%s12 + $0x248] sm:$0xff]
    %v945 = vld [vmem:[%s12 + $0x250] sm:$0xff]
    %v946 = vld [vmem:[%s12 + $0x258] sm:$0xff]
    %v947 = vld [vmem:[%s12 + $0x260] sm:$0xff]
    %v948 = vld [vmem:[%s12 + $0x268] sm:$0xff]
    %v949 = vld [vmem:[%s12 + $0x270] sm:$0xff]
    %v950 = vld [vmem:[%s12 + $0x278] sm:$0xff]
    %v951 = vld [vmem:[%s12 + $0x280] sm:$0xff]
    %v952 = vld [vmem:[%s12 + $0x288] sm:$0xff]
    %v953 = vld [vmem:[%s12 + $0x290] sm:$0xff]
    %v954 = vld [vmem:[%s12 + $0x298] sm:$0xff]
    %v955 = vld [vmem:[%s12 + $0x2a0] sm:$0xff]
    %v956 = vld [vmem:[%s12 + $0x2a8] sm:$0xff]
    %v957 = vld [vmem:[%s12 + $0x2b0] sm:$0xff]
    %v958 = vld [vmem:[%s12 + $0x2b8] sm:$0xff]
    %v959 = vld [vmem:[%s12 + $0x2c0] sm:$0xff]
    %v960 = vld [vmem:[%s12 + $0x2c8] sm:$0xff]
    %v961 = vld [vmem:[%s12 + $0x2d0] sm:$0xff]
    %v962 = vld [vmem:[%s12 + $0x2d8] sm:$0xff]
    %v963 = vld [vmem:[%s12 + $0x2e0] sm:$0xff]
    %v964 = vld [vmem:[%s12 + $0x2e8] sm:$0xff]
    %v965 = vld [vmem:[%s12 + $0x2f0] sm:$0xff]
    %v966 = vld [vmem:[%s12 + $0x2f8] sm:$0xff]
    %v967 = vld [vmem:[%s12 + $0x300] sm:$0xff]
    %v968 = vld [vmem:[%s12 + $0x308] sm:$0xff]
    %v969 = vld [vmem:[%s12 + $0x310] sm:$0xff]
    %v970 = vld [vmem:[%s12 + $0x318] sm:$0xff]
    %v971 = vld [vmem:[%s12 + $0x320] sm:$0xff]
    %v972 = vld [vmem:[%s12 + $0x328] sm:$0xff]
    %v973 = vld [vmem:[%s12 + $0x330] sm:$0xff]
    %v974 = vld [vmem:[%s12 + $0x338] sm:$0xff]
    %v975 = vld [vmem:[%s12 + $0x340] sm:$0xff]
    %v976 = vld [vmem:[%s12 + $0x348] sm:$0xff]
    %v977 = vld [vmem:[%s12 + $0x350] sm:$0xff]
    %v978 = vld [vmem:[%s12 + $0x358] sm:$0xff]
    %v979 = vld [vmem:[%s12 + $0x360] sm:$0xff]
    %v980 = vld [vmem:[%s12 + $0x368] sm:$0xff]
    %v981 = vld [vmem:[%s12 + $0x370] sm:$0xff]
    %v982 = vld [vmem:[%s12 + $0x378] sm:$0xff]
    %v983 = vld [vmem:[%s12 + $0x380] sm:$0xff]
    %v984 = vld [vmem:[%s12 + $0x388] sm:$0xff]
    %v985 = vld [vmem:[%s12 + $0x390] sm:$0xff]
    %v986 = vld [vmem:[%s12 + $0x398] sm:$0xff]
    %v987 = vld [vmem:[%s12 + $0x3a0] sm:$0xff]
    %v988 = vld [vmem:[%s12 + $0x3a8] sm:$0xff]
    %v989 = vld [vmem:[%s12 + $0x3b0] sm:$0xff]
    %v990 = vld [vmem:[%s12 + $0x3b8] sm:$0xff]
    %v991 = vld [vmem:[%s12 + $0x3c0] sm:$0xff]
    %v992 = vld [vmem:[%s12 + $0x3c8] sm:$0xff]
    %v993 = vld [vmem:[%s12 + $0x3d0] sm:$0xff]
    %v994 = vld [vmem:[%s12 + $0x3d8] sm:$0xff]
    %v995 = vld [vmem:[%s12 + $0x3e0] sm:$0xff]
    %v996 = vld [vmem:[%s12 + $0x3e8] sm:$0xff]
    %v997 = vld [vmem:[%s12 + $0x3f0] sm:$0xff]
    %v998 = vld [vmem:[%s12 + $0x3f8] sm:$0xff]
    %v999 = vld [vmem:[%s13] sm:$0xf]
    %v1001 = vlaneseq
    %v1002 = vshrl.u32 %v1001, 7
    %v1003 = vsub.s32 0, %v1002
    %v1004 = vrot.slane %v999, %v1003
    %v1005 = vlaneseq
    %v1006 = vshrl.u32 %v1005, 7
    %v1007 = vsub.s32 1, %v1006
    %v1008 = vrot.slane %v999, %v1007
    %v1009 = vlaneseq
    %v1010 = vshrl.u32 %v1009, 7
    %v1011 = vsub.s32 2, %v1010
    %v1012 = vrot.slane %v999, %v1011
    %v1013 = vlaneseq
    %v1014 = vshrl.u32 %v1013, 7
    %v1015 = vsub.s32 3, %v1014
    %v1016 = vrot.slane %v999, %v1015
    %1021 = vmatprep.subr.mxu0 %v872
    %1022 = vmatpush1.msra.mxu0 %v871
    %1023 = vmatprep.subr.mxu0 %v876
    %1024 = vmatpush1.msra.mxu0 %v875
    %1025 = vmatprep.subr.mxu0 %v880
    %1026 = vmatpush1.msra.mxu0 %v879
    %1027 = vmatprep.subr.mxu0 %v884
    %1028 = vmatpush1.msra.mxu0 %v883
    %1029 = vmatprep.subr.mxu0 %v888
    %1030 = vmatpush1.msra.mxu0 %v887
    %1031 = vmatprep.subr.mxu0 %v892
    %1032 = vmatpush1.msra.mxu0 %v891
    %1033 = vmatprep.subr.mxu0 %v896
    %1034 = vmatpush1.msra.mxu0 %v895
    %1035 = vmatprep.subr.mxu0 %v900
    %1036 = vmatpush1.msra.mxu0 %v899
    %1037 = vmatprep.subr.mxu0 %v904
    %1038 = vmatpush1.msra.mxu0 %v903
    %1039 = vmatprep.subr.mxu0 %v908
    %1040 = vmatpush1.msra.mxu0 %v907
    %1041 = vmatprep.subr.mxu0 %v912
    %1042 = vmatpush1.msra.mxu0 %v911
    %1043 = vmatprep.subr.mxu0 %v916
    %1044 = vmatpush1.msra.mxu0 %v915
    %1045 = vmatprep.subr.mxu0 %v920
    %1046 = vmatpush1.msra.mxu0 %v919
    %1047 = vmatprep.subr.mxu0 %v924
    %1048 = vmatpush1.msra.mxu0 %v923
    %1049 = vmatprep.subr.mxu0 %v928
    %1050 = vmatpush1.msra.mxu0 %v927
    %1051 = vmatprep.subr.mxu0 %v932
    %1052 = vmatpush1.msra.mxu0 %v931
    %1053 = vmatprep.subr.mxu0 %v936
    %1054 = vmatpush1.msra.mxu0 %v935
    %1055 = vmatprep.subr.mxu0 %v940
    %1056 = vmatpush1.msra.mxu0 %v939
    %1057 = vmatprep.subr.mxu0 %v944
    %1058 = vmatpush1.msra.mxu0 %v943
    %1059 = vmatprep.subr.mxu0 %v948
    %1060 = vmatpush1.msra.mxu0 %v947
    %1061 = vmatprep.subr.mxu0 %v952
    %1062 = vmatpush1.msra.mxu0 %v951
    %1063 = vmatprep.subr.mxu0 %v956
    %1064 = vmatpush1.msra.mxu0 %v955
    %1065 = vmatprep.subr.mxu0 %v960
    %1066 = vmatpush1.msra.mxu0 %v959
    %1067 = vmatprep.subr.mxu0 %v964
    %1068 = vmatpush1.msra.mxu0 %v963
    %1069 = vmatprep.subr.mxu0 %v968
    %1070 = vmatpush1.msra.mxu0 %v967
    %1071 = vmatprep.subr.mxu0 %v972
    %1072 = vmatpush1.msra.mxu0 %v971
    %1073 = vmatprep.subr.mxu0 %v976
    %1074 = vmatpush1.msra.mxu0 %v975
    %1075 = vmatprep.subr.mxu0 %v980
    %1076 = vmatpush1.msra.mxu0 %v979
    %1077 = vmatprep.subr.mxu0 %v984
    %1078 = vmatpush1.msra.mxu0 %v983
    %1079 = vmatprep.subr.mxu0 %v988
    %1080 = vmatpush1.msra.mxu0 %v987
    %1081 = vmatprep.subr.mxu0 %v992
    %1082 = vmatpush1.msra.mxu0 %v991
    %1083 = vmatprep.subr.mxu0 %v996
    %1084 = vmatpush1.msra.mxu0 %v995
    %1085 = vmatprep.mubr.f32.mxu0 %v870
    %1086 = vmatmul.mubr.f32.gmra.mrb[0].mxu0 %v869
    %v1087 = vpop.f32.mrb[0].mxu0
    %v1088 = vadd.f32 %v1004, %v1087
    %v1089 = vpop.f32.mrb[0].mxu0
    %v1090 = vadd.f32 %v1008, %v1089
    %1091 = vdwg.mxu0
    %1092 = vmatprep.subr.mxu0 %v874
    %1093 = vmatpush1.msra.mxu0 %v873
    %1094 = vmatprep.subr.mxu0 %v878
    %1095 = vmatpush1.msra.mxu0 %v877
    %1096 = vmatprep.subr.mxu0 %v882
    %1097 = vmatpush1.msra.mxu0 %v881
    %1098 = vmatprep.subr.mxu0 %v886
    %1099 = vmatpush1.msra.mxu0 %v885
    %1100 = vmatprep.subr.mxu0 %v890
    %1101 = vmatpush1.msra.mxu0 %v889
    %1102 = vmatprep.subr.mxu0 %v894
    %1103 = vmatpush1.msra.mxu0 %v893
    %1104 = vmatprep.subr.mxu0 %v898
    %1105 = vmatpush1.msra.mxu0 %v897
    %1106 = vmatprep.subr.mxu0 %v902
    %1107 = vmatpush1.msra.mxu0 %v901
    %1108 = vmatprep.subr.mxu0 %v906
    %1109 = vmatpush1.msra.mxu0 %v905
    %1110 = vmatprep.subr.mxu0 %v910
    %1111 = vmatpush1.msra.mxu0 %v909
    %1112 = vmatprep.subr.mxu0 %v914
    %1113 = vmatpush1.msra.mxu0 %v913
    %1114 = vmatprep.subr.mxu0 %v918
    %1115 = vmatpush1.msra.mxu0 %v917
    %1116 = vmatprep.subr.mxu0 %v922
    %1117 = vmatpush1.msra.mxu0 %v921
    %1118 = vmatprep.subr.mxu0 %v926
    %1119 = vmatpush1.msra.mxu0 %v925
    %1120 = vmatprep.subr.mxu0 %v930
    %1121 = vmatpush1.msra.mxu0 %v929
    %1122 = vmatprep.subr.mxu0 %v934
    %1123 = vmatpush1.msra.mxu0 %v933
    %1124 = vmatprep.subr.mxu0 %v938
    %1125 = vmatpush1.msra.mxu0 %v937
    %1126 = vmatprep.subr.mxu0 %v942
    %1127 = vmatpush1.msra.mxu0 %v941
    %1128 = vmatprep.subr.mxu0 %v946
    %1129 = vmatpush1.msra.mxu0 %v945
    %1130 = vmatprep.subr.mxu0 %v950
    %1131 = vmatpush1.msra.mxu0 %v949
    %1132 = vmatprep.subr.mxu0 %v954
    %1133 = vmatpush1.msra.mxu0 %v953
    %1134 = vmatprep.subr.mxu0 %v958
    %1135 = vmatpush1.msra.mxu0 %v957
    %1136 = vmatprep.subr.mxu0 %v962
    %1137 = vmatpush1.msra.mxu0 %v961
    %1138 = vmatprep.subr.mxu0 %v966
    %1139 = vmatpush1.msra.mxu0 %v965
    %1140 = vmatprep.subr.mxu0 %v970
    %1141 = vmatpush1.msra.mxu0 %v969
    %1142 = vmatprep.subr.mxu0 %v974
    %1143 = vmatpush1.msra.mxu0 %v973
    %1144 = vmatprep.subr.mxu0 %v978
    %1145 = vmatpush1.msra.mxu0 %v977
    %1146 = vmatprep.subr.mxu0 %v982
    %1147 = vmatpush1.msra.mxu0 %v981
    %1148 = vmatprep.subr.mxu0 %v986
    %1149 = vmatpush1.msra.mxu0 %v985
    %1150 = vmatprep.subr.mxu0 %v990
    %1151 = vmatpush1.msra.mxu0 %v989
    %1152 = vmatprep.subr.mxu0 %v994
    %1153 = vmatpush1.msra.mxu0 %v993
    %1154 = vmatprep.subr.mxu0 %v998
    %1155 = vmatpush1.msra.mxu0 %v997
    %1156 = vmatprep.mubr.f32.mxu0 %v870
    %1157 = vmatmul.mubr.f32.gmra.mrb[0].mxu0 %v869
    %v1158 = vpop.f32.mrb[0].mxu0
    %v1159 = vadd.f32 %v1012, %v1158
    %v1160 = vpop.f32.mrb[0].mxu0
    %v1161 = vadd.f32 %v1016, %v1160
    %1162 = vdwg.mxu0
    %v1163 = vmax.f32 %v1088, 0.0
    %v1164 = vmax.f32 %v1090, 0.0
    %v1165 = vmax.f32 %v1159, 0.0
    %v1166 = vmax.f32 %v1161, 0.0
    %vm1167 = vcmask 58368
    %1168 = vst.msk [vmem:[#allocation2] sm:$0x3] %vm1167, %v614
    %1170 = vrot.lane.b32.xlu0 %v614, 120
    %v1171 = vpop.permute.xlu0 %1170
    %1173 = vst.msk [vmem:[#allocation4] sm:$0x3] %vm1167, %v1171
    %v1178 = vcombine.low %v1163, %v1164
    %v1179 = vcombine.low %v1165, %v1166
    %v1181 = vunpack.c.l.s4 1983009808
    %v1182 = vunpack.c.0.s8 %v1181
    %v1183 = vlaneseq
    %v1184 = vshrl.u32 %v1183, 7
    %v1185 = vsub.s32 %v1182, %v1184
    %v1186 = vrot.slane %v1178, %v1185
    %v1188 = vunpack.c.l.s4 1983009808
    %v1189 = vunpack.c.0.s8 %v1188
    %v1190 = vlaneseq
    %v1191 = vshrl.u32 %v1190, 7
    %v1192 = vsub.s32 %v1189, %v1191
    %v1193 = vrot.slane %v1179, %v1192
    %v1194 = vcombine.low %v1186, %v1193
    %1196 = vst [vmem:[%s16] sm:$0xff] %v1194
    // Predicated region
    $region58: #{ff_gauss_vae_forward.10} parent=1 // pred_check
      _
    $region59: #{ff_gauss_vae_forward.10} parent=1 // pred_check_branch
      %1198 = sbr.rel (0) target = $region61
    $region60: #{ff_gauss_vae_forward.10} parent=1 // pred_region
      %s1200 = ssub.s32 32, 32
      %1201 = vsyncadd [#allocation3], %s1200
      %s1203 = sshll.u32 [#allocation2], 4
      %s1204 = int_to_ptr.vmem [resolvable:$true] %s1203
      %1206 = dma.vmem_to_hbm [thread:$0]  %s1204, 32, %s14, [#allocation3]
    $region61: #{ff_gauss_vae_forward.10} parent=1 // pred_fallthru
      _
    // Predicated region
    $region62: #{ff_gauss_vae_forward.10} parent=1 // pred_check
      _
    $region63: #{ff_gauss_vae_forward.10} parent=1 // pred_check_branch
      %1208 = sbr.rel (0) target = $region65
    $region64: #{ff_gauss_vae_forward.10} parent=1 // pred_region
      %s1210 = ssub.s32 32, 32
      %1211 = vsyncadd [#allocation5], %s1210
      %s1213 = sshll.u32 [#allocation4], 4
      %s1214 = int_to_ptr.vmem [resolvable:$true] %s1213
      %1216 = dma.vmem_to_hbm [thread:$0]  %s1214, 32, %s15, [#allocation5]
    $region65: #{ff_gauss_vae_forward.10} parent=1 // pred_fallthru
      _
    // Predicated region
    $region66: #{ff_gauss_vae_forward.10} parent=1 // pred_check
      _
    $region67: #{ff_gauss_vae_forward.10} parent=1 // pred_check_branch
      %1218 = sbr.rel (0) target = $region69
    $region68: #{ff_gauss_vae_forward.10} parent=1 // pred_region
      _
    $region69: #{ff_gauss_vae_forward.10} parent=1 // pred_fallthru
      _
    // Predicated region
    $region70: #{ff_gauss_vae_forward.10} parent=1 // pred_check
      _
    $region71: #{ff_gauss_vae_forward.10} parent=1 // pred_check_branch
      %1220 = sbr.rel (0) target = $region73
    $region72: #{ff_gauss_vae_forward.10} parent=1 // pred_region
      %1221 = dma.done [#allocation3], 32
    $region73: #{ff_gauss_vae_forward.10} parent=1 // pred_fallthru
      _
    // Predicated region
    $region74: #{ff_gauss_vae_forward.10} parent=1 // pred_check
      _
    $region75: #{ff_gauss_vae_forward.10} parent=1 // pred_check_branch
      %1223 = sbr.rel (0) target = $region77
    $region76: #{ff_gauss_vae_forward.10} parent=1 // pred_region
      %1224 = dma.done [#allocation5], 32
    $region77: #{ff_gauss_vae_forward.10} parent=1 // pred_fallthru
      _
    // Predicated region
    $region78: #{ff_gauss_vae_forward.10} parent=1 // pred_check
      _
    $region79: #{ff_gauss_vae_forward.10} parent=1 // pred_check_branch
      %1226 = sbr.rel (0) target = $region81
    $region80: #{ff_gauss_vae_forward.10} parent=1 // pred_region
      _
    $region81: #{ff_gauss_vae_forward.10} parent=1 // pred_fallthru
      _
    %1227 = vsyncpa [#allocation3], 1
    %1228 = vsyncpa [#allocation5], 1

// kernel: ff_gauss_vae_forward.11
$region0: #{ff_gauss_vae_forward.11}
  #allocation0 [shape = 'u32[]', space=smem, size = 0x4, offset = 0x4, fixed_abs, tag = 'smem constant byte address 0x4 - core index']
  #allocation1 [shape = 'u32[144,128]{1,0:T(1,128)}', space=vmem, size = 0x12000, scoped, tag = 'internal scratch']
  %s0 = inlined_call_operand.vmem [shape: f32[128,288], index: 0, kind: input, shape index: {}]
  %s1 = inlined_call_operand.vmem [shape: f32[288,32], index: 1, kind: input, shape index: {}]
  %s2 = inlined_call_operand.vmem [shape: f32[128,1], index: 2, kind: input, shape index: {}]
  %s3 = inlined_call_operand.vmem [shape: f32[128,32], index: 3, kind: output, shape index: {}]
  %s4 = sld [smem:[#allocation0]]
  $region22: #{ff_gauss_vae_forward.11} parent=0
    _
  %s6 = ssub.s32 1, %s4
  %s7 = scalar_select 0, %s6, %s4
  // Predicated region
  $region2: #{ff_gauss_vae_forward.11} parent=0 // pred_check
    _
  $region3: #{ff_gauss_vae_forward.11} parent=0 // pred_check_branch
    %9 = sbr.rel (0) target = $region5
  $region4: #{ff_gauss_vae_forward.11} parent=0 // pred_region
    _
  $region5: #{ff_gauss_vae_forward.11} parent=0 // pred_fallthru
    _
  // Predicated region
  $region6: #{ff_gauss_vae_forward.11} parent=0 // pred_check
    _
  $region7: #{ff_gauss_vae_forward.11} parent=0 // pred_check_branch
    %11 = sbr.rel (0) target = $region9
  $region8: #{ff_gauss_vae_forward.11} parent=0 // pred_region
    _
  $region9: #{ff_gauss_vae_forward.11} parent=0 // pred_fallthru
    _
  // Predicated region
  $region10: #{ff_gauss_vae_forward.11} parent=0 // pred_check
    _
  $region11: #{ff_gauss_vae_forward.11} parent=0 // pred_check_branch
    %13 = sbr.rel (0) target = $region13
  $region12: #{ff_gauss_vae_forward.11} parent=0 // pred_region
    _
  $region13: #{ff_gauss_vae_forward.11} parent=0 // pred_fallthru
    _
  %v14 = vld [vmem:[%s0] sm:$0xff]
  %v15 = vld [vmem:[%s0 + $0x8] sm:$0xff]
  %v16 = vld [vmem:[%s0 + $0x10] sm:$0xff]
  %v17 = vld [vmem:[%s0 + $0x18] sm:$0xff]
  %v18 = vld [vmem:[%s0 + $0x20] sm:$0xff]
  %v19 = vld [vmem:[%s0 + $0x28] sm:$0xff]
  %v20 = vld [vmem:[%s0 + $0x30] sm:$0xff]
  %v21 = vld [vmem:[%s0 + $0x38] sm:$0xff]
  %v22 = vld [vmem:[%s0 + $0x40] sm:$0xff]
  %v23 = vld [vmem:[%s0 + $0x48] sm:$0xff]
  %v24 = vld [vmem:[%s0 + $0x50] sm:$0xff]
  %v25 = vld [vmem:[%s0 + $0x58] sm:$0xff]
  %v26 = vld [vmem:[%s0 + $0x60] sm:$0xff]
  %v27 = vld [vmem:[%s0 + $0x68] sm:$0xff]
  %v28 = vld [vmem:[%s0 + $0x70] sm:$0xff]
  %v29 = vld [vmem:[%s0 + $0x78] sm:$0xff]
  %v30 = vld [vmem:[%s0 + $0x80] sm:$0xff]
  %v31 = vld [vmem:[%s0 + $0x88] sm:$0xff]
  %v32 = vld [vmem:[%s0 + $0x90] sm:$0xff]
  %v33 = vld [vmem:[%s0 + $0x98] sm:$0xff]
  %v34 = vld [vmem:[%s0 + $0xa0] sm:$0xff]
  %v35 = vld [vmem:[%s0 + $0xa8] sm:$0xff]
  %v36 = vld [vmem:[%s0 + $0xb0] sm:$0xff]
  %v37 = vld [vmem:[%s0 + $0xb8] sm:$0xff]
  %v38 = vld [vmem:[%s0 + $0xc0] sm:$0xff]
  %v39 = vld [vmem:[%s0 + $0xc8] sm:$0xff]
  %v40 = vld [vmem:[%s0 + $0xd0] sm:$0xff]
  %v41 = vld [vmem:[%s0 + $0xd8] sm:$0xff]
  %v42 = vld [vmem:[%s0 + $0xe0] sm:$0xff]
  %v43 = vld [vmem:[%s0 + $0xe8] sm:$0xff]
  %v44 = vld [vmem:[%s0 + $0xf0] sm:$0xff]
  %v45 = vld [vmem:[%s0 + $0xf8] sm:$0xff]
  %v46 = vld [vmem:[%s0 + $0x100] sm:$0xff]
  %v47 = vld [vmem:[%s0 + $0x108] sm:$0xff]
  %v48 = vld [vmem:[%s0 + $0x110] sm:$0xff]
  %v49 = vld [vmem:[%s0 + $0x118] sm:$0xff]
  %v50 = vld [vmem:[%s0 + $0x120] sm:$0xff]
  %v51 = vld [vmem:[%s0 + $0x128] sm:$0xff]
  %v52 = vld [vmem:[%s0 + $0x130] sm:$0xff]
  %v53 = vld [vmem:[%s0 + $0x138] sm:$0xff]
  %v54 = vld [vmem:[%s0 + $0x140] sm:$0xff]
  %v55 = vld [vmem:[%s0 + $0x148] sm:$0xff]
  %v56 = vld [vmem:[%s0 + $0x150] sm:$0xff]
  %v57 = vld [vmem:[%s0 + $0x158] sm:$0xff]
  %v58 = vld [vmem:[%s0 + $0x160] sm:$0xff]
  %v59 = vld [vmem:[%s0 + $0x168] sm:$0xff]
  %v60 = vld [vmem:[%s0 + $0x170] sm:$0xff]
  %v61 = vld [vmem:[%s0 + $0x178] sm:$0xff]
  %v62 = vld [vmem:[%s1] sm:$0xff]
  %v63 = vld [vmem:[%s1 + $0x8] sm:$0xff]
  %v64 = vld [vmem:[%s1 + $0x10] sm:$0xff]
  %v65 = vld [vmem:[%s1 + $0x18] sm:$0xff]
  %v66 = vld [vmem:[%s1 + $0x20] sm:$0xff]
  %v67 = vld [vmem:[%s1 + $0x28] sm:$0xff]
  %v68 = vld [vmem:[%s1 + $0x30] sm:$0xff]
  %v69 = vld [vmem:[%s1 + $0x38] sm:$0xff]
  %v70 = vld [vmem:[%s1 + $0x40] sm:$0xff]
  %v71 = vld [vmem:[%s1 + $0x48] sm:$0xff]
  %v72 = vld [vmem:[%s1 + $0x50] sm:$0xff]
  %v73 = vld [vmem:[%s1 + $0x58] sm:$0xff]
  %v74 = vld [vmem:[%s1 + $0x60] sm:$0xff]
  %v75 = vld [vmem:[%s1 + $0x68] sm:$0xff]
  %v76 = vld [vmem:[%s1 + $0x70] sm:$0xff]
  %v77 = vld [vmem:[%s1 + $0x78] sm:$0xff]
  %v78 = vld [vmem:[%s1 + $0x80] sm:$0xff]
  %v79 = vld [vmem:[%s1 + $0x88] sm:$0xff]
  %v80 = vld [vmem:[%s1 + $0x90] sm:$0xff]
  %v81 = vld [vmem:[%s1 + $0x98] sm:$0xff]
  %v82 = vld [vmem:[%s1 + $0xa0] sm:$0xff]
  %v83 = vld [vmem:[%s1 + $0xa8] sm:$0xff]
  %v84 = vld [vmem:[%s1 + $0xb0] sm:$0xff]
  %v85 = vld [vmem:[%s1 + $0xb8] sm:$0xff]
  %v86 = vld [vmem:[%s1 + $0xc0] sm:$0xff]
  %v87 = vld [vmem:[%s1 + $0xc8] sm:$0xff]
  %v88 = vld [vmem:[%s1 + $0xd0] sm:$0xff]
  %v89 = vld [vmem:[%s1 + $0xd8] sm:$0xff]
  %v90 = vld [vmem:[%s1 + $0xe0] sm:$0xff]
  %v91 = vld [vmem:[%s1 + $0xe8] sm:$0xff]
  %v92 = vld [vmem:[%s1 + $0xf0] sm:$0xff]
  %v93 = vld [vmem:[%s1 + $0xf8] sm:$0xff]
  %v94 = vld [vmem:[%s1 + $0x100] sm:$0xff]
  %v95 = vld [vmem:[%s1 + $0x108] sm:$0xff]
  %v96 = vld [vmem:[%s1 + $0x110] sm:$0xff]
  %v97 = vld [vmem:[%s1 + $0x118] sm:$0xff]
  %v98 = vld [vmem:[%s2] sm:$0xff]
  %v99 = vld [vmem:[%s2 + $0x8] sm:$0xff]
  %v100 = vld [vmem:[%s2 + $0x10] sm:$0xff]
  %v101 = vld [vmem:[%s2 + $0x18] sm:$0xff]
  %v102 = vld [vmem:[%s2 + $0x20] sm:$0xff]
  %v103 = vld [vmem:[%s2 + $0x28] sm:$0xff]
  %v104 = vld [vmem:[%s2 + $0x30] sm:$0xff]
  %v105 = vld [vmem:[%s2 + $0x38] sm:$0xff]
  %v106 = vld [vmem:[%s2 + $0x40] sm:$0xff]
  %v107 = vld [vmem:[%s2 + $0x48] sm:$0xff]
  %v108 = vld [vmem:[%s2 + $0x50] sm:$0xff]
  %v109 = vld [vmem:[%s2 + $0x58] sm:$0xff]
  %v110 = vld [vmem:[%s2 + $0x60] sm:$0xff]
  %v111 = vld [vmem:[%s2 + $0x68] sm:$0xff]
  %v112 = vld [vmem:[%s2 + $0x70] sm:$0xff]
  %v113 = vld [vmem:[%s2 + $0x78] sm:$0xff]
  %115 = vset.pattern.permute.xlu0 0
  %116 = vperm.xlu0 %115, %v98
  %v117 = vpop.permute.xlu0 %116
  %120 = vset.pattern.permute.xlu0 0
  %121 = vperm.xlu0 %120, %v99
  %v122 = vpop.permute.xlu0 %121
  %125 = vset.pattern.permute.xlu0 0
  %126 = vperm.xlu0 %125, %v100
  %v127 = vpop.permute.xlu0 %126
  %130 = vset.pattern.permute.xlu0 0
  %131 = vperm.xlu0 %130, %v101
  %v132 = vpop.permute.xlu0 %131
  %135 = vset.pattern.permute.xlu0 0
  %136 = vperm.xlu0 %135, %v102
  %v137 = vpop.permute.xlu0 %136
  %140 = vset.pattern.permute.xlu0 0
  %141 = vperm.xlu0 %140, %v103
  %v142 = vpop.permute.xlu0 %141
  %145 = vset.pattern.permute.xlu0 0
  %146 = vperm.xlu0 %145, %v104
  %v147 = vpop.permute.xlu0 %146
  %150 = vset.pattern.permute.xlu0 0
  %151 = vperm.xlu0 %150, %v105
  %v152 = vpop.permute.xlu0 %151
  %155 = vset.pattern.permute.xlu0 0
  %156 = vperm.xlu0 %155, %v106
  %v157 = vpop.permute.xlu0 %156
  %160 = vset.pattern.permute.xlu0 0
  %161 = vperm.xlu0 %160, %v107
  %v162 = vpop.permute.xlu0 %161
  %165 = vset.pattern.permute.xlu0 0
  %166 = vperm.xlu0 %165, %v108
  %v167 = vpop.permute.xlu0 %166
  %170 = vset.pattern.permute.xlu0 0
  %171 = vperm.xlu0 %170, %v109
  %v172 = vpop.permute.xlu0 %171
  %175 = vset.pattern.permute.xlu0 0
  %176 = vperm.xlu0 %175, %v110
  %v177 = vpop.permute.xlu0 %176
  %180 = vset.pattern.permute.xlu0 0
  %181 = vperm.xlu0 %180, %v111
  %v182 = vpop.permute.xlu0 %181
  %185 = vset.pattern.permute.xlu0 0
  %186 = vperm.xlu0 %185, %v112
  %v187 = vpop.permute.xlu0 %186
  %190 = vset.pattern.permute.xlu0 0
  %191 = vperm.xlu0 %190, %v113
  %v192 = vpop.permute.xlu0 %191
  %vm194 = vcmask 261120
  %v196 = vsel %vm194, %v16, 0
  %v199 = vsel %vm194, %v19, 0
  %v202 = vsel %vm194, %v22, 0
  %v205 = vsel %vm194, %v25, 0
  %v208 = vsel %vm194, %v28, 0
  %v211 = vsel %vm194, %v31, 0
  %v214 = vsel %vm194, %v34, 0
  %v217 = vsel %vm194, %v37, 0
  %v220 = vsel %vm194, %v40, 0
  %v223 = vsel %vm194, %v43, 0
  %v226 = vsel %vm194, %v46, 0
  %v229 = vsel %vm194, %v49, 0
  %v232 = vsel %vm194, %v52, 0
  %v235 = vsel %vm194, %v55, 0
  %v238 = vsel %vm194, %v58, 0
  %v241 = vsel %vm194, %v61, 0
  %243 = vmatprep.subr.mxu0 0.0
  %244 = vmatpush1.msra.mxu0 %v62
  %245 = vmatprep.subr.mxu0 0.0
  %246 = vmatpush1.msra.mxu0 %v63
  %247 = vmatprep.subr.mxu0 0.0
  %248 = vmatpush1.msra.mxu0 %v64
  %249 = vmatprep.subr.mxu0 0.0
  %250 = vmatpush1.msra.mxu0 %v65
  %251 = vmatprep.subr.mxu0 0.0
  %252 = vmatpush1.msra.mxu0 %v66
  %253 = vmatprep.subr.mxu0 0.0
  %254 = vmatpush1.msra.mxu0 %v67
  %255 = vmatprep.subr.mxu0 0.0
  %256 = vmatpush1.msra.mxu0 %v68
  %257 = vmatprep.subr.mxu0 0.0
  %258 = vmatpush1.msra.mxu0 %v69
  %259 = vmatprep.subr.mxu0 0.0
  %260 = vmatpush1.msra.mxu0 %v70
  %261 = vmatprep.subr.mxu0 0.0
  %262 = vmatpush1.msra.mxu0 %v71
  %263 = vmatprep.subr.mxu0 0.0
  %264 = vmatpush1.msra.mxu0 %v72
  %265 = vmatprep.subr.mxu0 0.0
  %266 = vmatpush1.msra.mxu0 %v73
  %267 = vmatprep.subr.mxu0 0.0
  %268 = vmatpush1.msra.mxu0 %v74
  %269 = vmatprep.subr.mxu0 0.0
  %270 = vmatpush1.msra.mxu0 %v75
  %271 = vmatprep.subr.mxu0 0.0
  %272 = vmatpush1.msra.mxu0 %v76
  %273 = vmatprep.subr.mxu0 0.0
  %274 = vmatpush1.msra.mxu0 %v77
  %275 = vmatprep.subr.mxu0 0.0
  %276 = vmatpush1.msra.mxu0 %v78
  %277 = vmatprep.subr.mxu0 0.0
  %278 = vmatpush1.msra.mxu0 %v79
  %279 = vmatprep.subr.mxu0 0.0
  %280 = vmatpush1.msra.mxu0 %v80
  %281 = vmatprep.subr.mxu0 0.0
  %282 = vmatpush1.msra.mxu0 %v81
  %283 = vmatprep.subr.mxu0 0.0
  %284 = vmatpush1.msra.mxu0 %v82
  %285 = vmatprep.subr.mxu0 0.0
  %286 = vmatpush1.msra.mxu0 %v83
  %287 = vmatprep.subr.mxu0 0.0
  %288 = vmatpush1.msra.mxu0 %v84
  %289 = vmatprep.subr.mxu0 0.0
  %290 = vmatpush1.msra.mxu0 %v85
  %291 = vmatprep.subr.mxu0 0.0
  %292 = vmatpush1.msra.mxu0 %v86
  %293 = vmatprep.subr.mxu0 0.0
  %294 = vmatpush1.msra.mxu0 %v87
  %295 = vmatprep.subr.mxu0 0.0
  %296 = vmatpush1.msra.mxu0 %v88
  %297 = vmatprep.subr.mxu0 0.0
  %298 = vmatpush1.msra.mxu0 %v89
  %299 = vmatprep.subr.mxu0 0.0
  %300 = vmatpush1.msra.mxu0 %v90
  %301 = vmatprep.subr.mxu0 0.0
  %302 = vmatpush1.msra.mxu0 %v91
  %303 = vmatprep.subr.mxu0 0.0
  %304 = vmatpush1.msra.mxu0 %v92
  %305 = vmatprep.subr.mxu0 0.0
  %306 = vmatpush1.msra.mxu0 %v93
  %307 = vmatprep.mubr.f32.mxu0 %v15
  %308 = vmatmul.mubr.f32.gmra.mrb[0].mxu0 %v14
  %v309 = vpop.f32.mrb[0].mxu0
  %v310 = vadd.f32 %v117, %v309
  %v311 = vpop.f32.mrb[0].mxu0
  %312 = vmatprep.mubr.f32.mxu0 %v18
  %313 = vmatmul.mubr.f32.gmra.mrb[0].mxu0 %v17
  %v314 = vpop.f32.mrb[0].mxu0
  %v315 = vadd.f32 %v122, %v314
  %v316 = vpop.f32.mrb[0].mxu0
  %317 = vmatprep.mubr.f32.mxu0 %v21
  %318 = vmatmul.mubr.f32.gmra.mrb[0].mxu0 %v20
  %v319 = vpop.f32.mrb[0].mxu0
  %v320 = vadd.f32 %v127, %v319
  %v321 = vpop.f32.mrb[0].mxu0
  %322 = vmatprep.mubr.f32.mxu0 %v24
  %323 = vmatmul.mubr.f32.gmra.mrb[0].mxu0 %v23
  %v324 = vpop.f32.mrb[0].mxu0
  %v325 = vadd.f32 %v132, %v324
  %v326 = vpop.f32.mrb[0].mxu0
  %327 = vmatprep.mubr.f32.mxu0 %v27
  %328 = vmatmul.mubr.f32.gmra.mrb[0].mxu0 %v26
  %v329 = vpop.f32.mrb[0].mxu0
  %v330 = vadd.f32 %v137, %v329
  %v331 = vpop.f32.mrb[0].mxu0
  %332 = vmatprep.mubr.f32.mxu0 %v30
  %333 = vmatmul.mubr.f32.gmra.mrb[0].mxu0 %v29
  %v334 = vpop.f32.mrb[0].mxu0
  %v335 = vadd.f32 %v142, %v334
  %v336 = vpop.f32.mrb[0].mxu0
  %337 = vmatprep.mubr.f32.mxu0 %v33
  %338 = vmatmul.mubr.f32.gmra.mrb[0].mxu0 %v32
  %v339 = vpop.f32.mrb[0].mxu0
  %v340 = vadd.f32 %v147, %v339
  %v341 = vpop.f32.mrb[0].mxu0
  %342 = vmatprep.mubr.f32.mxu0 %v36
  %343 = vmatmul.mubr.f32.gmra.mrb[0].mxu0 %v35
  %v344 = vpop.f32.mrb[0].mxu0
  %v345 = vadd.f32 %v152, %v344
  %v346 = vpop.f32.mrb[0].mxu0
  %347 = vmatprep.mubr.f32.mxu0 %v39
  %348 = vmatmul.mubr.f32.gmra.mrb[0].mxu0 %v38
  %v349 = vpop.f32.mrb[0].mxu0
  %v350 = vadd.f32 %v157, %v349
  %v351 = vpop.f32.mrb[0].mxu0
  %352 = vmatprep.mubr.f32.mxu0 %v42
  %353 = vmatmul.mubr.f32.gmra.mrb[0].mxu0 %v41
  %v354 = vpop.f32.mrb[0].mxu0
  %v355 = vadd.f32 %v162, %v354
  %v356 = vpop.f32.mrb[0].mxu0
  %357 = vmatprep.mubr.f32.mxu0 %v45
  %358 = vmatmul.mubr.f32.gmra.mrb[0].mxu0 %v44
  %v359 = vpop.f32.mrb[0].mxu0
  %v360 = vadd.f32 %v167, %v359
  %v361 = vpop.f32.mrb[0].mxu0
  %362 = vmatprep.mubr.f32.mxu0 %v48
  %363 = vmatmul.mubr.f32.gmra.mrb[0].mxu0 %v47
  %v364 = vpop.f32.mrb[0].mxu0
  %v365 = vadd.f32 %v172, %v364
  %v366 = vpop.f32.mrb[0].mxu0
  %367 = vmatprep.mubr.f32.mxu0 %v51
  %368 = vmatmul.mubr.f32.gmra.mrb[0].mxu0 %v50
  %v369 = vpop.f32.mrb[0].mxu0
  %v370 = vadd.f32 %v177, %v369
  %v371 = vpop.f32.mrb[0].mxu0
  %372 = vmatprep.mubr.f32.mxu0 %v54
  %373 = vmatmul.mubr.f32.gmra.mrb[0].mxu0 %v53
  %v374 = vpop.f32.mrb[0].mxu0
  %v375 = vadd.f32 %v182, %v374
  %v376 = vpop.f32.mrb[0].mxu0
  %377 = vmatprep.mubr.f32.mxu0 %v57
  %378 = vmatmul.mubr.f32.gmra.mrb[0].mxu0 %v56
  %v379 = vpop.f32.mrb[0].mxu0
  %v380 = vadd.f32 %v187, %v379
  %v381 = vpop.f32.mrb[0].mxu0
  %382 = vmatprep.mubr.f32.mxu0 %v60
  %383 = vmatmul.mubr.f32.gmra.mrb[0].mxu0 %v59
  %v384 = vpop.f32.mrb[0].mxu0
  %v385 = vadd.f32 %v192, %v384
  %v386 = vpop.f32.mrb[0].mxu0
  %387 = vdwg.mxu0
  %388 = vmatprep.subr.mxu0 0.0
  %389 = vmatpush1.msra.mxu0 %v94
  %390 = vmatprep.subr.mxu0 0.0
  %391 = vmatpush1.msra.mxu0 %v95
  %392 = vmatprep.subr.mxu0 0.0
  %393 = vmatpush1.msra.mxu0 %v96
  %394 = vmatprep.subr.mxu0 0.0
  %395 = vmatpush1.msra.mxu0 %v97
  %396 = vmatprep.subr.mxu0 0.0
  %397 = vmatpush1.msra.mxu0 0.0
  %398 = vmatprep.subr.mxu0 0.0
  %399 = vmatpush1.msra.mxu0 0.0
  %400 = vmatprep.subr.mxu0 0.0
  %401 = vmatpush1.msra.mxu0 0.0
  %402 = vmatprep.subr.mxu0 0.0
  %403 = vmatpush1.msra.mxu0 0.0
  %404 = vmatprep.subr.mxu0 0.0
  %405 = vmatpush1.msra.mxu0 0.0
  %406 = vmatprep.subr.mxu0 0.0
  %407 = vmatpush1.msra.mxu0 0.0
  %408 = vmatprep.subr.mxu0 0.0
  %409 = vmatpush1.msra.mxu0 0.0
  %410 = vmatprep.subr.mxu0 0.0
  %411 = vmatpush1.msra.mxu0 0.0
  %412 = vmatprep.subr.mxu0 0.0
  %413 = vmatpush1.msra.mxu0 0.0
  %414 = vmatprep.subr.mxu0 0.0
  %415 = vmatpush1.msra.mxu0 0.0
  %416 = vmatprep.subr.mxu0 0.0
  %417 = vmatpush1.msra.mxu0 0.0
  %418 = vmatprep.subr.mxu0 0.0
  %419 = vmatpush1.msra.mxu0 0.0
  %420 = vmatprep.subr.mxu0 0.0
  %421 = vmatpush1.msra.mxu0 0.0
  %422 = vmatprep.subr.mxu0 0.0
  %423 = vmatpush1.msra.mxu0 0.0
  %424 = vmatprep.subr.mxu0 0.0
  %425 = vmatpush1.msra.mxu0 0.0
  %426 = vmatprep.subr.mxu0 0.0
  %427 = vmatpush1.msra.mxu0 0.0
  %428 = vmatprep.subr.mxu0 0.0
  %429 = vmatpush1.msra.mxu0 0.0
  %430 = vmatprep.subr.mxu0 0.0
  %431 = vmatpush1.msra.mxu0 0.0
  %432 = vmatprep.subr.mxu0 0.0
  %433 = vmatpush1.msra.mxu0 0.0
  %434 = vmatprep.subr.mxu0 0.0
  %435 = vmatpush1.msra.mxu0 0.0
  %436 = vmatprep.subr.mxu0 0.0
  %437 = vmatpush1.msra.mxu0 0.0
  %438 = vmatprep.subr.mxu0 0.0
  %439 = vmatpush1.msra.mxu0 0.0
  %440 = vmatprep.subr.mxu0 0.0
  %441 = vmatpush1.msra.mxu0 0.0
  %442 = vmatprep.subr.mxu0 0.0
  %443 = vmatpush1.msra.mxu0 0.0
  %444 = vmatprep.subr.mxu0 0.0
  %445 = vmatpush1.msra.mxu0 0.0
  %446 = vmatprep.subr.mxu0 0.0
  %447 = vmatpush1.msra.mxu0 0.0
  %448 = vmatprep.subr.mxu0 0.0
  %449 = vmatpush1.msra.mxu0 0.0
  %450 = vmatprep.subr.mxu0 0.0
  %451 = vmatpush1.msra.mxu0 0.0
  %452 = vmatprep.mubr.f32.mxu0 0.0
  %453 = vmatmul.mubr.f32.gmra.mrb[0].mxu0 %v196
  %v454 = vpop.f32.mrb[0].mxu0
  %v455 = vadd.f32 %v310, %v454
  %v456 = vpop.f32.mrb[0].mxu0
  %457 = vmatprep.mubr.f32.mxu0 0.0
  %458 = vmatmul.mubr.f32.gmra.mrb[0].mxu0 %v199
  %v459 = vpop.f32.mrb[0].mxu0
  %v460 = vadd.f32 %v315, %v459
  %v461 = vpop.f32.mrb[0].mxu0
  %462 = vmatprep.mubr.f32.mxu0 0.0
  %463 = vmatmul.mubr.f32.gmra.mrb[0].mxu0 %v202
  %v464 = vpop.f32.mrb[0].mxu0
  %v465 = vadd.f32 %v320, %v464
  %v466 = vpop.f32.mrb[0].mxu0
  %467 = vmatprep.mubr.f32.mxu0 0.0
  %468 = vmatmul.mubr.f32.gmra.mrb[0].mxu0 %v205
  %v469 = vpop.f32.mrb[0].mxu0
  %v470 = vadd.f32 %v325, %v469
  %v471 = vpop.f32.mrb[0].mxu0
  %472 = vmatprep.mubr.f32.mxu0 0.0
  %473 = vmatmul.mubr.f32.gmra.mrb[0].mxu0 %v208
  %v474 = vpop.f32.mrb[0].mxu0
  %v475 = vadd.f32 %v330, %v474
  %v476 = vpop.f32.mrb[0].mxu0
  %477 = vmatprep.mubr.f32.mxu0 0.0
  %478 = vmatmul.mubr.f32.gmra.mrb[0].mxu0 %v211
  %v479 = vpop.f32.mrb[0].mxu0
  %v480 = vadd.f32 %v335, %v479
  %v481 = vpop.f32.mrb[0].mxu0
  %482 = vmatprep.mubr.f32.mxu0 0.0
  %483 = vmatmul.mubr.f32.gmra.mrb[0].mxu0 %v214
  %v484 = vpop.f32.mrb[0].mxu0
  %v485 = vadd.f32 %v340, %v484
  %v486 = vpop.f32.mrb[0].mxu0
  %487 = vmatprep.mubr.f32.mxu0 0.0
  %488 = vmatmul.mubr.f32.gmra.mrb[0].mxu0 %v217
  %v489 = vpop.f32.mrb[0].mxu0
  %v490 = vadd.f32 %v345, %v489
  %v491 = vpop.f32.mrb[0].mxu0
  %492 = vmatprep.mubr.f32.mxu0 0.0
  %493 = vmatmul.mubr.f32.gmra.mrb[0].mxu0 %v220
  %v494 = vpop.f32.mrb[0].mxu0
  %v495 = vadd.f32 %v350, %v494
  %v496 = vpop.f32.mrb[0].mxu0
  %497 = vmatprep.mubr.f32.mxu0 0.0
  %498 = vmatmul.mubr.f32.gmra.mrb[0].mxu0 %v223
  %v499 = vpop.f32.mrb[0].mxu0
  %v500 = vadd.f32 %v355, %v499
  %v501 = vpop.f32.mrb[0].mxu0
  %502 = vmatprep.mubr.f32.mxu0 0.0
  %503 = vmatmul.mubr.f32.gmra.mrb[0].mxu0 %v226
  %v504 = vpop.f32.mrb[0].mxu0
  %v505 = vadd.f32 %v360, %v504
  %v506 = vpop.f32.mrb[0].mxu0
  %507 = vmatprep.mubr.f32.mxu0 0.0
  %508 = vmatmul.mubr.f32.gmra.mrb[0].mxu0 %v229
  %v509 = vpop.f32.mrb[0].mxu0
  %v510 = vadd.f32 %v365, %v509
  %v511 = vpop.f32.mrb[0].mxu0
  %512 = vmatprep.mubr.f32.mxu0 0.0
  %513 = vmatmul.mubr.f32.gmra.mrb[0].mxu0 %v232
  %v514 = vpop.f32.mrb[0].mxu0
  %v515 = vadd.f32 %v370, %v514
  %v516 = vpop.f32.mrb[0].mxu0
  %517 = vmatprep.mubr.f32.mxu0 0.0
  %518 = vmatmul.mubr.f32.gmra.mrb[0].mxu0 %v235
  %v519 = vpop.f32.mrb[0].mxu0
  %v520 = vadd.f32 %v375, %v519
  %v521 = vpop.f32.mrb[0].mxu0
  %522 = vmatprep.mubr.f32.mxu0 0.0
  %523 = vmatmul.mubr.f32.gmra.mrb[0].mxu0 %v238
  %v524 = vpop.f32.mrb[0].mxu0
  %v525 = vadd.f32 %v380, %v524
  %v526 = vpop.f32.mrb[0].mxu0
  %527 = vmatprep.mubr.f32.mxu0 0.0
  %528 = vmatmul.mubr.f32.gmra.mrb[0].mxu0 %v241
  %v529 = vpop.f32.mrb[0].mxu0
  %v530 = vadd.f32 %v385, %v529
  %v531 = vpop.f32.mrb[0].mxu0
  %532 = vdwg.mxu0
  %v533 = vmax.f32 %v455, 0.0
  %v534 = vmax.f32 %v460, 0.0
  %v535 = vmax.f32 %v465, 0.0
  %v536 = vmax.f32 %v470, 0.0
  %v537 = vmax.f32 %v475, 0.0
  %v538 = vmax.f32 %v480, 0.0
  %v539 = vmax.f32 %v485, 0.0
  %v540 = vmax.f32 %v490, 0.0
  %v541 = vmax.f32 %v495, 0.0
  %v542 = vmax.f32 %v500, 0.0
  %v543 = vmax.f32 %v505, 0.0
  %v544 = vmax.f32 %v510, 0.0
  %v545 = vmax.f32 %v515, 0.0
  %v546 = vmax.f32 %v520, 0.0
  %v547 = vmax.f32 %v525, 0.0
  %v548 = vmax.f32 %v530, 0.0
  %v549 = vmul.f32 %v533, %v533
  %v550 = vmul.f32 %v534, %v534
  %v551 = vmul.f32 %v535, %v535
  %v552 = vmul.f32 %v536, %v536
  %vm557 = vcmask 1046528
  %v558 = vrot.slane %v549, 1
  %v559 = vrot.slane %v550, 1
  %v560 = vsel %vm557, %v558, %v559
  %v561 = vrot.slane %v551, 1
  %v562 = vsel %vm557, %v559, %v561
  %v563 = vrot.slane %v552, 1
  %v564 = vsel %vm557, %v561, %v563
  %v569 = vsel %vm557, %v563, 0.0
  %v570 = vadd.f32 %v549, %v560
  %v571 = vadd.f32 %v550, %v562
  %v572 = vadd.f32 %v551, %v564
  %v573 = vadd.f32 %v552, %v569
  %vm574 = vcmask 1040384
  %v575 = vrot.slane %v549, 7
  %v576 = vrot.slane %v550, 7
  %v577 = vsel %vm574, %v575, %v576
  %v578 = vrot.slane %v551, 7
  %v579 = vsel %vm574, %v576, %v578
  %v580 = vrot.slane %v552, 7
  %v581 = vsel %vm574, %v578, %v580
  %v586 = vsel %vm574, 0.0, %v575
  %v587 = vadd.f32 %v570, %v586
  %v588 = vadd.f32 %v571, %v577
  %v589 = vadd.f32 %v572, %v579
  %v590 = vadd.f32 %v573, %v581
  %vm591 = vcmask 1045504
  %v592 = vrot.slane %v549, 2
  %v593 = vrot.slane %v550, 2
  %v594 = vsel %vm591, %v592, %v593
  %v595 = vrot.slane %v551, 2
  %v596 = vsel %vm591, %v593, %v595
  %v597 = vrot.slane %v552, 2
  %v598 = vsel %vm591, %v595, %v597
  %v603 = vsel %vm591, %v597, 0.0
  %v604 = vadd.f32 %v587, %v594
  %v605 = vadd.f32 %v588, %v596
  %v606 = vadd.f32 %v589, %v598
  %v607 = vadd.f32 %v590, %v603
  %vm608 = vcmask 1041408
  %v609 = vrot.slane %v549, 6
  %v610 = vrot.slane %v550, 6
  %v611 = vsel %vm608, %v609, %v610
  %v612 = vrot.slane %v551, 6
  %v613 = vsel %vm608, %v610, %v612
  %v614 = vrot.slane %v552, 6
  %v615 = vsel %vm608, %v612, %v614
  %v620 = vsel %vm608, 0.0, %v609
  %v621 = vadd.f32 %v604, %v620
  %v622 = vadd.f32 %v605, %v611
  %v623 = vadd.f32 %v606, %v613
  %v624 = vadd.f32 %v607, %v615
  %v625 = vmul.f32 %v621, 0.0002
  %v626 = vmul.f32 %v622, 0.0002
  %v627 = vmul.f32 %v623, 0.0002
  %v628 = vmul.f32 %v624, 0.0002
  %v629 = vadd.f32 %v625, 1.0
  %v630 = vadd.f32 %v626, 1.0
  %v631 = vadd.f32 %v627, 1.0
  %v632 = vadd.f32 %v628, 1.0
  %v633 = vrsqrt.pop %v629
  %v634 = vrsqrt.pop %v630
  %v635 = vrsqrt.pop %v631
  %v636 = vrsqrt.pop %v632
  %v637 = vmul.f32 %v533, %v633
  %v638 = vmul.f32 %v534, %v634
  %v639 = vmul.f32 %v535, %v635
  %v640 = vmul.f32 %v536, %v636
  %v641 = vmul.f32 %v537, %v537
  %v642 = vmul.f32 %v538, %v538
  %v643 = vmul.f32 %v539, %v539
  %v644 = vmul.f32 %v540, %v540
  %v649 = vrot.slane %v641, 1
  %v650 = vrot.slane %v642, 1
  %v651 = vsel %vm557, %v649, %v650
  %v652 = vrot.slane %v643, 1
  %v653 = vsel %vm557, %v650, %v652
  %v654 = vrot.slane %v644, 1
  %v655 = vsel %vm557, %v652, %v654
  %v660 = vsel %vm557, %v654, 0.0
  %v661 = vadd.f32 %v641, %v651
  %v662 = vadd.f32 %v642, %v653
  %v663 = vadd.f32 %v643, %v655
  %v664 = vadd.f32 %v644, %v660
  %v665 = vrot.slane %v641, 7
  %v666 = vrot.slane %v642, 7
  %v667 = vsel %vm574, %v665, %v666
  %v668 = vrot.slane %v643, 7
  %v669 = vsel %vm574, %v666, %v668
  %v670 = vrot.slane %v644, 7
  %v671 = vsel %vm574, %v668, %v670
  %v676 = vsel %vm574, 0.0, %v665
  %v677 = vadd.f32 %v661, %v676
  %v678 = vadd.f32 %v662, %v667
  %v679 = vadd.f32 %v663, %v669
  %v680 = vadd.f32 %v664, %v671
  %v681 = vrot.slane %v641, 2
  %v682 = vrot.slane %v642, 2
  %v683 = vsel %vm591, %v681, %v682
  %v684 = vrot.slane %v643, 2
  %v685 = vsel %vm591, %v682, %v684
  %v686 = vrot.slane %v644, 2
  %v687 = vsel %vm591, %v684, %v686
  %v692 = vsel %vm591, %v686, 0.0
  %v693 = vadd.f32 %v677, %v683
  %v694 = vadd.f32 %v678, %v685
  %v695 = vadd.f32 %v679, %v687
  %v696 = vadd.f32 %v680, %v692
  %v697 = vrot.slane %v641, 6
  %v698 = vrot.slane %v642, 6
  %v699 = vsel %vm608, %v697, %v698
  %v700 = vrot.slane %v643, 6
  %v701 = vsel %vm608, %v698, %v700
  %v702 = vrot.slane %v644, 6
  %v703 = vsel %vm608, %v700, %v702
  %v708 = vsel %vm608, 0.0, %v697
  %v709 = vadd.f32 %v693, %v708
  %v710 = vadd.f32 %v694, %v699
  %v711 = vadd.f32 %v695, %v701
  %v712 = vadd.f32 %v696, %v703
  %v713 = vmul.f32 %v709, 0.0002
  %v714 = vmul.f32 %v710, 0.0002
  %v715 = vmul.f32 %v711, 0.0002
  %v716 = vmul.f32 %v712, 0.0002
  %v717 = vadd.f32 %v713, 1.0
  %v718 = vadd.f32 %v714, 1.0
  %v719 = vadd.f32 %v715, 1.0
  %v720 = vadd.f32 %v716, 1.0
  %v721 = vrsqrt.pop %v717
  %v722 = vrsqrt.pop %v718
  %v723 = vrsqrt.pop %v719
  %v724 = vrsqrt.pop %v720
  %v725 = vmul.f32 %v537, %v721
  %v726 = vmul.f32 %v538, %v722
  %v727 = vmul.f32 %v539, %v723
  %v728 = vmul.f32 %v540, %v724
  %v729 = vmul.f32 %v541, %v541
  %v730 = vmul.f32 %v542, %v542
  %v731 = vmul.f32 %v543, %v543
  %v732 = vmul.f32 %v544, %v544
  %v737 = vrot.slane %v729, 1
  %v738 = vrot.slane %v730, 1
  %v739 = vsel %vm557, %v737, %v738
  %v740 = vrot.slane %v731, 1
  %v741 = vsel %vm557, %v738, %v740
  %v742 = vrot.slane %v732, 1
  %v743 = vsel %vm557, %v740, %v742
  %v748 = vsel %vm557, %v742, 0.0
  %v749 = vadd.f32 %v729, %v739
  %v750 = vadd.f32 %v730, %v741
  %v751 = vadd.f32 %v731, %v743
  %v752 = vadd.f32 %v732, %v748
  %v753 = vrot.slane %v729, 7
  %v754 = vrot.slane %v730, 7
  %v755 = vsel %vm574, %v753, %v754
  %v756 = vrot.slane %v731, 7
  %v757 = vsel %vm574, %v754, %v756
  %v758 = vrot.slane %v732, 7
  %v759 = vsel %vm574, %v756, %v758
  %v764 = vsel %vm574, 0.0, %v753
  %v765 = vadd.f32 %v749, %v764
  %v766 = vadd.f32 %v750, %v755
  %v767 = vadd.f32 %v751, %v757
  %v768 = vadd.f32 %v752, %v759
  %v769 = vrot.slane %v729, 2
  %v770 = vrot.slane %v730, 2
  %v771 = vsel %vm591, %v769, %v770
  %v772 = vrot.slane %v731, 2
  %v773 = vsel %vm591, %v770, %v772
  %v774 = vrot.slane %v732, 2
  %v775 = vsel %vm591, %v772, %v774
  %v780 = vsel %vm591, %v774, 0.0
  %v781 = vadd.f32 %v765, %v771
  %v782 = vadd.f32 %v766, %v773
  %v783 = vadd.f32 %v767, %v775
  %v784 = vadd.f32 %v768, %v780
  %v785 = vrot.slane %v729, 6
  %v786 = vrot.slane %v730, 6
  %v787 = vsel %vm608, %v785, %v786
  %v788 = vrot.slane %v731, 6
  %v789 = vsel %vm608, %v786, %v788
  %v790 = vrot.slane %v732, 6
  %v791 = vsel %vm608, %v788, %v790
  %v796 = vsel %vm608, 0.0, %v785
  %v797 = vadd.f32 %v781, %v796
  %v798 = vadd.f32 %v782, %v787
  %v799 = vadd.f32 %v783, %v789
  %v800 = vadd.f32 %v784, %v791
  %v801 = vmul.f32 %v797, 0.0002
  %v802 = vmul.f32 %v798, 0.0002
  %v803 = vmul.f32 %v799, 0.0002
  %v804 = vmul.f32 %v800, 0.0002
  %v805 = vadd.f32 %v801, 1.0
  %v806 = vadd.f32 %v802, 1.0
  %v807 = vadd.f32 %v803, 1.0
  %v808 = vadd.f32 %v804, 1.0
  %v809 = vrsqrt.pop %v805
  %v810 = vrsqrt.pop %v806
  %v811 = vrsqrt.pop %v807
  %v812 = vrsqrt.pop %v808
  %v813 = vmul.f32 %v541, %v809
  %v814 = vmul.f32 %v542, %v810
  %v815 = vmul.f32 %v543, %v811
  %v816 = vmul.f32 %v544, %v812
  %v817 = vmul.f32 %v545, %v545
  %v818 = vmul.f32 %v546, %v546
  %v819 = vmul.f32 %v547, %v547
  %v820 = vmul.f32 %v548, %v548
  %v825 = vrot.slane %v817, 1
  %v826 = vrot.slane %v818, 1
  %v827 = vsel %vm557, %v825, %v826
  %v828 = vrot.slane %v819, 1
  %v829 = vsel %vm557, %v826, %v828
  %v830 = vrot.slane %v820, 1
  %v831 = vsel %vm557, %v828, %v830
  %v836 = vsel %vm557, %v830, 0.0
  %v837 = vadd.f32 %v817, %v827
  %v838 = vadd.f32 %v818, %v829
  %v839 = vadd.f32 %v819, %v831
  %v840 = vadd.f32 %v820, %v836
  %v841 = vrot.slane %v817, 7
  %v842 = vrot.slane %v818, 7
  %v843 = vsel %vm574, %v841, %v842
  %v844 = vrot.slane %v819, 7
  %v845 = vsel %vm574, %v842, %v844
  %v846 = vrot.slane %v820, 7
  %v847 = vsel %vm574, %v844, %v846
  %v852 = vsel %vm574, 0.0, %v841
  %v853 = vadd.f32 %v837, %v852
  %v854 = vadd.f32 %v838, %v843
  %v855 = vadd.f32 %v839, %v845
  %v856 = vadd.f32 %v840, %v847
  %v857 = vrot.slane %v817, 2
  %v858 = vrot.slane %v818, 2
  %v859 = vsel %vm591, %v857, %v858
  %v860 = vrot.slane %v819, 2
  %v861 = vsel %vm591, %v858, %v860
  %v862 = vrot.slane %v820, 2
  %v863 = vsel %vm591, %v860, %v862
  %v868 = vsel %vm591, %v862, 0.0
  %v869 = vadd.f32 %v853, %v859
  %v870 = vadd.f32 %v854, %v861
  %v871 = vadd.f32 %v855, %v863
  %v872 = vadd.f32 %v856, %v868
  %v873 = vrot.slane %v817, 6
  %v874 = vrot.slane %v818, 6
  %v875 = vsel %vm608, %v873, %v874
  %v876 = vrot.slane %v819, 6
  %v877 = vsel %vm608, %v874, %v876
  %v878 = vrot.slane %v820, 6
  %v879 = vsel %vm608, %v876, %v878
  %v884 = vsel %vm608, 0.0, %v873
  %v885 = vadd.f32 %v869, %v884
  %v886 = vadd.f32 %v870, %v875
  %v887 = vadd.f32 %v871, %v877
  %v888 = vadd.f32 %v872, %v879
  %v889 = vmul.f32 %v885, 0.0002
  %v890 = vmul.f32 %v886, 0.0002
  %v891 = vmul.f32 %v887, 0.0002
  %v892 = vmul.f32 %v888, 0.0002
  %v893 = vadd.f32 %v889, 1.0
  %v894 = vadd.f32 %v890, 1.0
  %v895 = vadd.f32 %v891, 1.0
  %v896 = vadd.f32 %v892, 1.0
  %v897 = vrsqrt.pop %v893
  %v898 = vrsqrt.pop %v894
  %v899 = vrsqrt.pop %v895
  %v900 = vrsqrt.pop %v896
  %v901 = vmul.f32 %v545, %v897
  %v902 = vmul.f32 %v546, %v898
  %v903 = vmul.f32 %v547, %v899
  %v904 = vmul.f32 %v548, %v900
  %905 = vst.msk [vmem:[%s3] sm:$0xff] %vm194, %v637
  %906 = vst.msk [vmem:[%s3 + $0x8] sm:$0xff] %vm194, %v638
  %907 = vst.msk [vmem:[%s3 + $0x10] sm:$0xff] %vm194, %v639
  %908 = vst.msk [vmem:[%s3 + $0x18] sm:$0xff] %vm194, %v640
  %909 = vst.msk [vmem:[%s3 + $0x20] sm:$0xff] %vm194, %v725
  %910 = vst.msk [vmem:[%s3 + $0x28] sm:$0xff] %vm194, %v726
  %911 = vst.msk [vmem:[%s3 + $0x30] sm:$0xff] %vm194, %v727
  %912 = vst.msk [vmem:[%s3 + $0x38] sm:$0xff] %vm194, %v728
  %913 = vst.msk [vmem:[%s3 + $0x40] sm:$0xff] %vm194, %v813
  %914 = vst.msk [vmem:[%s3 + $0x48] sm:$0xff] %vm194, %v814
  %915 = vst.msk [vmem:[%s3 + $0x50] sm:$0xff] %vm194, %v815
  %916 = vst.msk [vmem:[%s3 + $0x58] sm:$0xff] %vm194, %v816
  %917 = vst.msk [vmem:[%s3 + $0x60] sm:$0xff] %vm194, %v901
  %918 = vst.msk [vmem:[%s3 + $0x68] sm:$0xff] %vm194, %v902
  %919 = vst.msk [vmem:[%s3 + $0x70] sm:$0xff] %vm194, %v903
  %920 = vst.msk [vmem:[%s3 + $0x78] sm:$0xff] %vm194, %v904
  // Predicated region
  $region14: #{ff_gauss_vae_forward.11} parent=0 // pred_check
    _
  $region15: #{ff_gauss_vae_forward.11} parent=0 // pred_check_branch
    %922 = sbr.rel (0) target = $region17
  $region16: #{ff_gauss_vae_forward.11} parent=0 // pred_region
    _
  $region17: #{ff_gauss_vae_forward.11} parent=0 // pred_fallthru
    _
  // Predicated region
  $region18: #{ff_gauss_vae_forward.11} parent=0 // pred_check
    _
  $region19: #{ff_gauss_vae_forward.11} parent=0 // pred_check_branch
    %924 = sbr.rel (0) target = $region21
  $region20: #{ff_gauss_vae_forward.11} parent=0 // pred_region
    _
  $region21: #{ff_gauss_vae_forward.11} parent=0 // pred_fallthru
    _

// kernel: ff_gauss_vae_forward.12
$region0: #{ff_gauss_vae_forward.12}
  #allocation0 [shape = 'u32[]', space=smem, size = 0x4, offset = 0x4, fixed_abs, tag = 'smem constant byte address 0x4 - core index']
  #allocation1 [shape = 'u32[144,128]{1,0:T(1,128)}', space=vmem, size = 0x12000, scoped, tag = 'internal scratch']
  %s0 = inlined_call_operand.vmem [shape: f32[128,288], index: 0, kind: input, shape index: {}]
  %s1 = inlined_call_operand.vmem [shape: f32[288,128], index: 1, kind: input, shape index: {}]
  %s2 = inlined_call_operand.vmem [shape: f32[128,1], index: 2, kind: input, shape index: {}]
  %s3 = inlined_call_operand.vmem [shape: f32[128,128], index: 3, kind: output, shape index: {}]
  %s4 = sld [smem:[#allocation0]]
  $region22: #{ff_gauss_vae_forward.12} parent=0
    _
  %s6 = ssub.s32 1, %s4
  %s7 = scalar_select 0, %s6, %s4
  // Predicated region
  $region2: #{ff_gauss_vae_forward.12} parent=0 // pred_check
    _
  $region3: #{ff_gauss_vae_forward.12} parent=0 // pred_check_branch
    %9 = sbr.rel (0) target = $region5
  $region4: #{ff_gauss_vae_forward.12} parent=0 // pred_region
    _
  $region5: #{ff_gauss_vae_forward.12} parent=0 // pred_fallthru
    _
  // Predicated region
  $region6: #{ff_gauss_vae_forward.12} parent=0 // pred_check
    _
  $region7: #{ff_gauss_vae_forward.12} parent=0 // pred_check_branch
    %11 = sbr.rel (0) target = $region9
  $region8: #{ff_gauss_vae_forward.12} parent=0 // pred_region
    _
  $region9: #{ff_gauss_vae_forward.12} parent=0 // pred_fallthru
    _
  // Predicated region
  $region10: #{ff_gauss_vae_forward.12} parent=0 // pred_check
    _
  $region11: #{ff_gauss_vae_forward.12} parent=0 // pred_check_branch
    %13 = sbr.rel (0) target = $region13
  $region12: #{ff_gauss_vae_forward.12} parent=0 // pred_region
    _
  $region13: #{ff_gauss_vae_forward.12} parent=0 // pred_fallthru
    _
  %v14 = vld [vmem:[%s0] sm:$0xff]
  %v15 = vld [vmem:[%s0 + $0x8] sm:$0xff]
  %v16 = vld [vmem:[%s0 + $0x10] sm:$0xff]
  %v17 = vld [vmem:[%s0 + $0x18] sm:$0xff]
  %v18 = vld [vmem:[%s0 + $0x20] sm:$0xff]
  %v19 = vld [vmem:[%s0 + $0x28] sm:$0xff]
  %v20 = vld [vmem:[%s0 + $0x30] sm:$0xff]
  %v21 = vld [vmem:[%s0 + $0x38] sm:$0xff]
  %v22 = vld [vmem:[%s0 + $0x40] sm:$0xff]
  %v23 = vld [vmem:[%s0 + $0x48] sm:$0xff]
  %v24 = vld [vmem:[%s0 + $0x50] sm:$0xff]
  %v25 = vld [vmem:[%s0 + $0x58] sm:$0xff]
  %v26 = vld [vmem:[%s0 + $0x60] sm:$0xff]
  %v27 = vld [vmem:[%s0 + $0x68] sm:$0xff]
  %v28 = vld [vmem:[%s0 + $0x70] sm:$0xff]
  %v29 = vld [vmem:[%s0 + $0x78] sm:$0xff]
  %v30 = vld [vmem:[%s0 + $0x80] sm:$0xff]
  %v31 = vld [vmem:[%s0 + $0x88] sm:$0xff]
  %v32 = vld [vmem:[%s0 + $0x90] sm:$0xff]
  %v33 = vld [vmem:[%s0 + $0x98] sm:$0xff]
  %v34 = vld [vmem:[%s0 + $0xa0] sm:$0xff]
  %v35 = vld [vmem:[%s0 + $0xa8] sm:$0xff]
  %v36 = vld [vmem:[%s0 + $0xb0] sm:$0xff]
  %v37 = vld [vmem:[%s0 + $0xb8] sm:$0xff]
  %v38 = vld [vmem:[%s0 + $0xc0] sm:$0xff]
  %v39 = vld [vmem:[%s0 + $0xc8] sm:$0xff]
  %v40 = vld [vmem:[%s0 + $0xd0] sm:$0xff]
  %v41 = vld [vmem:[%s0 + $0xd8] sm:$0xff]
  %v42 = vld [vmem:[%s0 + $0xe0] sm:$0xff]
  %v43 = vld [vmem:[%s0 + $0xe8] sm:$0xff]
  %v44 = vld [vmem:[%s0 + $0xf0] sm:$0xff]
  %v45 = vld [vmem:[%s0 + $0xf8] sm:$0xff]
  %v46 = vld [vmem:[%s0 + $0x100] sm:$0xff]
  %v47 = vld [vmem:[%s0 + $0x108] sm:$0xff]
  %v48 = vld [vmem:[%s0 + $0x110] sm:$0xff]
  %v49 = vld [vmem:[%s0 + $0x118] sm:$0xff]
  %v50 = vld [vmem:[%s0 + $0x120] sm:$0xff]
  %v51 = vld [vmem:[%s0 + $0x128] sm:$0xff]
  %v52 = vld [vmem:[%s0 + $0x130] sm:$0xff]
  %v53 = vld [vmem:[%s0 + $0x138] sm:$0xff]
  %v54 = vld [vmem:[%s0 + $0x140] sm:$0xff]
  %v55 = vld [vmem:[%s0 + $0x148] sm:$0xff]
  %v56 = vld [vmem:[%s0 + $0x150] sm:$0xff]
  %v57 = vld [vmem:[%s0 + $0x158] sm:$0xff]
  %v58 = vld [vmem:[%s0 + $0x160] sm:$0xff]
  %v59 = vld [vmem:[%s0 + $0x168] sm:$0xff]
  %v60 = vld [vmem:[%s0 + $0x170] sm:$0xff]
  %v61 = vld [vmem:[%s0 + $0x178] sm:$0xff]
  %v62 = vld [vmem:[%s1] sm:$0xff]
  %v63 = vld [vmem:[%s1 + $0x8] sm:$0xff]
  %v64 = vld [vmem:[%s1 + $0x10] sm:$0xff]
  %v65 = vld [vmem:[%s1 + $0x18] sm:$0xff]
  %v66 = vld [vmem:[%s1 + $0x20] sm:$0xff]
  %v67 = vld [vmem:[%s1 + $0x28] sm:$0xff]
  %v68 = vld [vmem:[%s1 + $0x30] sm:$0xff]
  %v69 = vld [vmem:[%s1 + $0x38] sm:$0xff]
  %v70 = vld [vmem:[%s1 + $0x40] sm:$0xff]
  %v71 = vld [vmem:[%s1 + $0x48] sm:$0xff]
  %v72 = vld [vmem:[%s1 + $0x50] sm:$0xff]
  %v73 = vld [vmem:[%s1 + $0x58] sm:$0xff]
  %v74 = vld [vmem:[%s1 + $0x60] sm:$0xff]
  %v75 = vld [vmem:[%s1 + $0x68] sm:$0xff]
  %v76 = vld [vmem:[%s1 + $0x70] sm:$0xff]
  %v77 = vld [vmem:[%s1 + $0x78] sm:$0xff]
  %v78 = vld [vmem:[%s1 + $0x80] sm:$0xff]
  %v79 = vld [vmem:[%s1 + $0x88] sm:$0xff]
  %v80 = vld [vmem:[%s1 + $0x90] sm:$0xff]
  %v81 = vld [vmem:[%s1 + $0x98] sm:$0xff]
  %v82 = vld [vmem:[%s1 + $0xa0] sm:$0xff]
  %v83 = vld [vmem:[%s1 + $0xa8] sm:$0xff]
  %v84 = vld [vmem:[%s1 + $0xb0] sm:$0xff]
  %v85 = vld [vmem:[%s1 + $0xb8] sm:$0xff]
  %v86 = vld [vmem:[%s1 + $0xc0] sm:$0xff]
  %v87 = vld [vmem:[%s1 + $0xc8] sm:$0xff]
  %v88 = vld [vmem:[%s1 + $0xd0] sm:$0xff]
  %v89 = vld [vmem:[%s1 + $0xd8] sm:$0xff]
  %v90 = vld [vmem:[%s1 + $0xe0] sm:$0xff]
  %v91 = vld [vmem:[%s1 + $0xe8] sm:$0xff]
  %v92 = vld [vmem:[%s1 + $0xf0] sm:$0xff]
  %v93 = vld [vmem:[%s1 + $0xf8] sm:$0xff]
  %v94 = vld [vmem:[%s1 + $0x100] sm:$0xff]
  %v95 = vld [vmem:[%s1 + $0x108] sm:$0xff]
  %v96 = vld [vmem:[%s1 + $0x110] sm:$0xff]
  %v97 = vld [vmem:[%s1 + $0x118] sm:$0xff]
  %v98 = vld [vmem:[%s2] sm:$0xff]
  %v99 = vld [vmem:[%s2 + $0x8] sm:$0xff]
  %v100 = vld [vmem:[%s2 + $0x10] sm:$0xff]
  %v101 = vld [vmem:[%s2 + $0x18] sm:$0xff]
  %v102 = vld [vmem:[%s2 + $0x20] sm:$0xff]
  %v103 = vld [vmem:[%s2 + $0x28] sm:$0xff]
  %v104 = vld [vmem:[%s2 + $0x30] sm:$0xff]
  %v105 = vld [vmem:[%s2 + $0x38] sm:$0xff]
  %v106 = vld [vmem:[%s2 + $0x40] sm:$0xff]
  %v107 = vld [vmem:[%s2 + $0x48] sm:$0xff]
  %v108 = vld [vmem:[%s2 + $0x50] sm:$0xff]
  %v109 = vld [vmem:[%s2 + $0x58] sm:$0xff]
  %v110 = vld [vmem:[%s2 + $0x60] sm:$0xff]
  %v111 = vld [vmem:[%s2 + $0x68] sm:$0xff]
  %v112 = vld [vmem:[%s2 + $0x70] sm:$0xff]
  %v113 = vld [vmem:[%s2 + $0x78] sm:$0xff]
  %115 = vset.pattern.permute.xlu0 0
  %116 = vperm.xlu0 %115, %v98
  %v117 = vpop.permute.xlu0 %116
  %120 = vset.pattern.permute.xlu0 0
  %121 = vperm.xlu0 %120, %v99
  %v122 = vpop.permute.xlu0 %121
  %125 = vset.pattern.permute.xlu0 0
  %126 = vperm.xlu0 %125, %v100
  %v127 = vpop.permute.xlu0 %126
  %130 = vset.pattern.permute.xlu0 0
  %131 = vperm.xlu0 %130, %v101
  %v132 = vpop.permute.xlu0 %131
  %135 = vset.pattern.permute.xlu0 0
  %136 = vperm.xlu0 %135, %v102
  %v137 = vpop.permute.xlu0 %136
  %140 = vset.pattern.permute.xlu0 0
  %141 = vperm.xlu0 %140, %v103
  %v142 = vpop.permute.xlu0 %141
  %145 = vset.pattern.permute.xlu0 0
  %146 = vperm.xlu0 %145, %v104
  %v147 = vpop.permute.xlu0 %146
  %150 = vset.pattern.permute.xlu0 0
  %151 = vperm.xlu0 %150, %v105
  %v152 = vpop.permute.xlu0 %151
  %155 = vset.pattern.permute.xlu0 0
  %156 = vperm.xlu0 %155, %v106
  %v157 = vpop.permute.xlu0 %156
  %160 = vset.pattern.permute.xlu0 0
  %161 = vperm.xlu0 %160, %v107
  %v162 = vpop.permute.xlu0 %161
  %165 = vset.pattern.permute.xlu0 0
  %166 = vperm.xlu0 %165, %v108
  %v167 = vpop.permute.xlu0 %166
  %170 = vset.pattern.permute.xlu0 0
  %171 = vperm.xlu0 %170, %v109
  %v172 = vpop.permute.xlu0 %171
  %175 = vset.pattern.permute.xlu0 0
  %176 = vperm.xlu0 %175, %v110
  %v177 = vpop.permute.xlu0 %176
  %180 = vset.pattern.permute.xlu0 0
  %181 = vperm.xlu0 %180, %v111
  %v182 = vpop.permute.xlu0 %181
  %185 = vset.pattern.permute.xlu0 0
  %186 = vperm.xlu0 %185, %v112
  %v187 = vpop.permute.xlu0 %186
  %190 = vset.pattern.permute.xlu0 0
  %191 = vperm.xlu0 %190, %v113
  %v192 = vpop.permute.xlu0 %191
  %vm194 = vcmask 261120
  %v196 = vsel %vm194, %v16, 0
  %v199 = vsel %vm194, %v19, 0
  %v202 = vsel %vm194, %v22, 0
  %v205 = vsel %vm194, %v25, 0
  %v208 = vsel %vm194, %v28, 0
  %v211 = vsel %vm194, %v31, 0
  %v214 = vsel %vm194, %v34, 0
  %v217 = vsel %vm194, %v37, 0
  %v220 = vsel %vm194, %v40, 0
  %v223 = vsel %vm194, %v43, 0
  %v226 = vsel %vm194, %v46, 0
  %v229 = vsel %vm194, %v49, 0
  %v232 = vsel %vm194, %v52, 0
  %v235 = vsel %vm194, %v55, 0
  %v238 = vsel %vm194, %v58, 0
  %v241 = vsel %vm194, %v61, 0
  %243 = vmatprep.subr.mxu0 0.0
  %244 = vmatpush1.msra.mxu0 %v62
  %245 = vmatprep.subr.mxu0 0.0
  %246 = vmatpush1.msra.mxu0 %v63
  %247 = vmatprep.subr.mxu0 0.0
  %248 = vmatpush1.msra.mxu0 %v64
  %249 = vmatprep.subr.mxu0 0.0
  %250 = vmatpush1.msra.mxu0 %v65
  %251 = vmatprep.subr.mxu0 0.0
  %252 = vmatpush1.msra.mxu0 %v66
  %253 = vmatprep.subr.mxu0 0.0
  %254 = vmatpush1.msra.mxu0 %v67
  %255 = vmatprep.subr.mxu0 0.0
  %256 = vmatpush1.msra.mxu0 %v68
  %257 = vmatprep.subr.mxu0 0.0
  %258 = vmatpush1.msra.mxu0 %v69
  %259 = vmatprep.subr.mxu0 0.0
  %260 = vmatpush1.msra.mxu0 %v70
  %261 = vmatprep.subr.mxu0 0.0
  %262 = vmatpush1.msra.mxu0 %v71
  %263 = vmatprep.subr.mxu0 0.0
  %264 = vmatpush1.msra.mxu0 %v72
  %265 = vmatprep.subr.mxu0 0.0
  %266 = vmatpush1.msra.mxu0 %v73
  %267 = vmatprep.subr.mxu0 0.0
  %268 = vmatpush1.msra.mxu0 %v74
  %269 = vmatprep.subr.mxu0 0.0
  %270 = vmatpush1.msra.mxu0 %v75
  %271 = vmatprep.subr.mxu0 0.0
  %272 = vmatpush1.msra.mxu0 %v76
  %273 = vmatprep.subr.mxu0 0.0
  %274 = vmatpush1.msra.mxu0 %v77
  %275 = vmatprep.subr.mxu0 0.0
  %276 = vmatpush1.msra.mxu0 %v78
  %277 = vmatprep.subr.mxu0 0.0
  %278 = vmatpush1.msra.mxu0 %v79
  %279 = vmatprep.subr.mxu0 0.0
  %280 = vmatpush1.msra.mxu0 %v80
  %281 = vmatprep.subr.mxu0 0.0
  %282 = vmatpush1.msra.mxu0 %v81
  %283 = vmatprep.subr.mxu0 0.0
  %284 = vmatpush1.msra.mxu0 %v82
  %285 = vmatprep.subr.mxu0 0.0
  %286 = vmatpush1.msra.mxu0 %v83
  %287 = vmatprep.subr.mxu0 0.0
  %288 = vmatpush1.msra.mxu0 %v84
  %289 = vmatprep.subr.mxu0 0.0
  %290 = vmatpush1.msra.mxu0 %v85
  %291 = vmatprep.subr.mxu0 0.0
  %292 = vmatpush1.msra.mxu0 %v86
  %293 = vmatprep.subr.mxu0 0.0
  %294 = vmatpush1.msra.mxu0 %v87
  %295 = vmatprep.subr.mxu0 0.0
  %296 = vmatpush1.msra.mxu0 %v88
  %297 = vmatprep.subr.mxu0 0.0
  %298 = vmatpush1.msra.mxu0 %v89
  %299 = vmatprep.subr.mxu0 0.0
  %300 = vmatpush1.msra.mxu0 %v90
  %301 = vmatprep.subr.mxu0 0.0
  %302 = vmatpush1.msra.mxu0 %v91
  %303 = vmatprep.subr.mxu0 0.0
  %304 = vmatpush1.msra.mxu0 %v92
  %305 = vmatprep.subr.mxu0 0.0
  %306 = vmatpush1.msra.mxu0 %v93
  %307 = vmatprep.mubr.f32.mxu0 %v15
  %308 = vmatmul.mubr.f32.gmra.mrb[0].mxu0 %v14
  %v309 = vpop.f32.mrb[0].mxu0
  %v310 = vadd.f32 %v117, %v309
  %v311 = vpop.f32.mrb[0].mxu0
  %312 = vmatprep.mubr.f32.mxu0 %v18
  %313 = vmatmul.mubr.f32.gmra.mrb[0].mxu0 %v17
  %v314 = vpop.f32.mrb[0].mxu0
  %v315 = vadd.f32 %v122, %v314
  %v316 = vpop.f32.mrb[0].mxu0
  %317 = vmatprep.mubr.f32.mxu0 %v21
  %318 = vmatmul.mubr.f32.gmra.mrb[0].mxu0 %v20
  %v319 = vpop.f32.mrb[0].mxu0
  %v320 = vadd.f32 %v127, %v319
  %v321 = vpop.f32.mrb[0].mxu0
  %322 = vmatprep.mubr.f32.mxu0 %v24
  %323 = vmatmul.mubr.f32.gmra.mrb[0].mxu0 %v23
  %v324 = vpop.f32.mrb[0].mxu0
  %v325 = vadd.f32 %v132, %v324
  %v326 = vpop.f32.mrb[0].mxu0
  %327 = vmatprep.mubr.f32.mxu0 %v27
  %328 = vmatmul.mubr.f32.gmra.mrb[0].mxu0 %v26
  %v329 = vpop.f32.mrb[0].mxu0
  %v330 = vadd.f32 %v137, %v329
  %v331 = vpop.f32.mrb[0].mxu0
  %332 = vmatprep.mubr.f32.mxu0 %v30
  %333 = vmatmul.mubr.f32.gmra.mrb[0].mxu0 %v29
  %v334 = vpop.f32.mrb[0].mxu0
  %v335 = vadd.f32 %v142, %v334
  %v336 = vpop.f32.mrb[0].mxu0
  %337 = vmatprep.mubr.f32.mxu0 %v33
  %338 = vmatmul.mubr.f32.gmra.mrb[0].mxu0 %v32
  %v339 = vpop.f32.mrb[0].mxu0
  %v340 = vadd.f32 %v147, %v339
  %v341 = vpop.f32.mrb[0].mxu0
  %342 = vmatprep.mubr.f32.mxu0 %v36
  %343 = vmatmul.mubr.f32.gmra.mrb[0].mxu0 %v35
  %v344 = vpop.f32.mrb[0].mxu0
  %v345 = vadd.f32 %v152, %v344
  %v346 = vpop.f32.mrb[0].mxu0
  %347 = vmatprep.mubr.f32.mxu0 %v39
  %348 = vmatmul.mubr.f32.gmra.mrb[0].mxu0 %v38
  %v349 = vpop.f32.mrb[0].mxu0
  %v350 = vadd.f32 %v157, %v349
  %v351 = vpop.f32.mrb[0].mxu0
  %352 = vmatprep.mubr.f32.mxu0 %v42
  %353 = vmatmul.mubr.f32.gmra.mrb[0].mxu0 %v41
  %v354 = vpop.f32.mrb[0].mxu0
  %v355 = vadd.f32 %v162, %v354
  %v356 = vpop.f32.mrb[0].mxu0
  %357 = vmatprep.mubr.f32.mxu0 %v45
  %358 = vmatmul.mubr.f32.gmra.mrb[0].mxu0 %v44
  %v359 = vpop.f32.mrb[0].mxu0
  %v360 = vadd.f32 %v167, %v359
  %v361 = vpop.f32.mrb[0].mxu0
  %362 = vmatprep.mubr.f32.mxu0 %v48
  %363 = vmatmul.mubr.f32.gmra.mrb[0].mxu0 %v47
  %v364 = vpop.f32.mrb[0].mxu0
  %v365 = vadd.f32 %v172, %v364
  %v366 = vpop.f32.mrb[0].mxu0
  %367 = vmatprep.mubr.f32.mxu0 %v51
  %368 = vmatmul.mubr.f32.gmra.mrb[0].mxu0 %v50
  %v369 = vpop.f32.mrb[0].mxu0
  %v370 = vadd.f32 %v177, %v369
  %v371 = vpop.f32.mrb[0].mxu0
  %372 = vmatprep.mubr.f32.mxu0 %v54
  %373 = vmatmul.mubr.f32.gmra.mrb[0].mxu0 %v53
  %v374 = vpop.f32.mrb[0].mxu0
  %v375 = vadd.f32 %v182, %v374
  %v376 = vpop.f32.mrb[0].mxu0
  %377 = vmatprep.mubr.f32.mxu0 %v57
  %378 = vmatmul.mubr.f32.gmra.mrb[0].mxu0 %v56
  %v379 = vpop.f32.mrb[0].mxu0
  %v380 = vadd.f32 %v187, %v379
  %v381 = vpop.f32.mrb[0].mxu0
  %382 = vmatprep.mubr.f32.mxu0 %v60
  %383 = vmatmul.mubr.f32.gmra.mrb[0].mxu0 %v59
  %v384 = vpop.f32.mrb[0].mxu0
  %v385 = vadd.f32 %v192, %v384
  %v386 = vpop.f32.mrb[0].mxu0
  %387 = vdwg.mxu0
  %388 = vmatprep.subr.mxu0 0.0
  %389 = vmatpush1.msra.mxu0 %v94
  %390 = vmatprep.subr.mxu0 0.0
  %391 = vmatpush1.msra.mxu0 %v95
  %392 = vmatprep.subr.mxu0 0.0
  %393 = vmatpush1.msra.mxu0 %v96
  %394 = vmatprep.subr.mxu0 0.0
  %395 = vmatpush1.msra.mxu0 %v97
  %396 = vmatprep.subr.mxu0 0.0
  %397 = vmatpush1.msra.mxu0 0.0
  %398 = vmatprep.subr.mxu0 0.0
  %399 = vmatpush1.msra.mxu0 0.0
  %400 = vmatprep.subr.mxu0 0.0
  %401 = vmatpush1.msra.mxu0 0.0
  %402 = vmatprep.subr.mxu0 0.0
  %403 = vmatpush1.msra.mxu0 0.0
  %404 = vmatprep.subr.mxu0 0.0
  %405 = vmatpush1.msra.mxu0 0.0
  %406 = vmatprep.subr.mxu0 0.0
  %407 = vmatpush1.msra.mxu0 0.0
  %408 = vmatprep.subr.mxu0 0.0
  %409 = vmatpush1.msra.mxu0 0.0
  %410 = vmatprep.subr.mxu0 0.0
  %411 = vmatpush1.msra.mxu0 0.0
  %412 = vmatprep.subr.mxu0 0.0
  %413 = vmatpush1.msra.mxu0 0.0
  %414 = vmatprep.subr.mxu0 0.0
  %415 = vmatpush1.msra.mxu0 0.0
  %416 = vmatprep.subr.mxu0 0.0
  %417 = vmatpush1.msra.mxu0 0.0
  %418 = vmatprep.subr.mxu0 0.0
  %419 = vmatpush1.msra.mxu0 0.0
  %420 = vmatprep.subr.mxu0 0.0
  %421 = vmatpush1.msra.mxu0 0.0
  %422 = vmatprep.subr.mxu0 0.0
  %423 = vmatpush1.msra.mxu0 0.0
  %424 = vmatprep.subr.mxu0 0.0
  %425 = vmatpush1.msra.mxu0 0.0
  %426 = vmatprep.subr.mxu0 0.0
  %427 = vmatpush1.msra.mxu0 0.0
  %428 = vmatprep.subr.mxu0 0.0
  %429 = vmatpush1.msra.mxu0 0.0
  %430 = vmatprep.subr.mxu0 0.0
  %431 = vmatpush1.msra.mxu0 0.0
  %432 = vmatprep.subr.mxu0 0.0
  %433 = vmatpush1.msra.mxu0 0.0
  %434 = vmatprep.subr.mxu0 0.0
  %435 = vmatpush1.msra.mxu0 0.0
  %436 = vmatprep.subr.mxu0 0.0
  %437 = vmatpush1.msra.mxu0 0.0
  %438 = vmatprep.subr.mxu0 0.0
  %439 = vmatpush1.msra.mxu0 0.0
  %440 = vmatprep.subr.mxu0 0.0
  %441 = vmatpush1.msra.mxu0 0.0
  %442 = vmatprep.subr.mxu0 0.0
  %443 = vmatpush1.msra.mxu0 0.0
  %444 = vmatprep.subr.mxu0 0.0
  %445 = vmatpush1.msra.mxu0 0.0
  %446 = vmatprep.subr.mxu0 0.0
  %447 = vmatpush1.msra.mxu0 0.0
  %448 = vmatprep.subr.mxu0 0.0
  %449 = vmatpush1.msra.mxu0 0.0
  %450 = vmatprep.subr.mxu0 0.0
  %451 = vmatpush1.msra.mxu0 0.0
  %452 = vmatprep.mubr.f32.mxu0 0.0
  %453 = vmatmul.mubr.f32.gmra.mrb[0].mxu0 %v196
  %v454 = vpop.f32.mrb[0].mxu0
  %v455 = vadd.f32 %v310, %v454
  %v456 = vpop.f32.mrb[0].mxu0
  %457 = vmatprep.mubr.f32.mxu0 0.0
  %458 = vmatmul.mubr.f32.gmra.mrb[0].mxu0 %v199
  %v459 = vpop.f32.mrb[0].mxu0
  %v460 = vadd.f32 %v315, %v459
  %v461 = vpop.f32.mrb[0].mxu0
  %462 = vmatprep.mubr.f32.mxu0 0.0
  %463 = vmatmul.mubr.f32.gmra.mrb[0].mxu0 %v202
  %v464 = vpop.f32.mrb[0].mxu0
  %v465 = vadd.f32 %v320, %v464
  %v466 = vpop.f32.mrb[0].mxu0
  %467 = vmatprep.mubr.f32.mxu0 0.0
  %468 = vmatmul.mubr.f32.gmra.mrb[0].mxu0 %v205
  %v469 = vpop.f32.mrb[0].mxu0
  %v470 = vadd.f32 %v325, %v469
  %v471 = vpop.f32.mrb[0].mxu0
  %472 = vmatprep.mubr.f32.mxu0 0.0
  %473 = vmatmul.mubr.f32.gmra.mrb[0].mxu0 %v208
  %v474 = vpop.f32.mrb[0].mxu0
  %v475 = vadd.f32 %v330, %v474
  %v476 = vpop.f32.mrb[0].mxu0
  %477 = vmatprep.mubr.f32.mxu0 0.0
  %478 = vmatmul.mubr.f32.gmra.mrb[0].mxu0 %v211
  %v479 = vpop.f32.mrb[0].mxu0
  %v480 = vadd.f32 %v335, %v479
  %v481 = vpop.f32.mrb[0].mxu0
  %482 = vmatprep.mubr.f32.mxu0 0.0
  %483 = vmatmul.mubr.f32.gmra.mrb[0].mxu0 %v214
  %v484 = vpop.f32.mrb[0].mxu0
  %v485 = vadd.f32 %v340, %v484
  %v486 = vpop.f32.mrb[0].mxu0
  %487 = vmatprep.mubr.f32.mxu0 0.0
  %488 = vmatmul.mubr.f32.gmra.mrb[0].mxu0 %v217
  %v489 = vpop.f32.mrb[0].mxu0
  %v490 = vadd.f32 %v345, %v489
  %v491 = vpop.f32.mrb[0].mxu0
  %492 = vmatprep.mubr.f32.mxu0 0.0
  %493 = vmatmul.mubr.f32.gmra.mrb[0].mxu0 %v220
  %v494 = vpop.f32.mrb[0].mxu0
  %v495 = vadd.f32 %v350, %v494
  %v496 = vpop.f32.mrb[0].mxu0
  %497 = vmatprep.mubr.f32.mxu0 0.0
  %498 = vmatmul.mubr.f32.gmra.mrb[0].mxu0 %v223
  %v499 = vpop.f32.mrb[0].mxu0
  %v500 = vadd.f32 %v355, %v499
  %v501 = vpop.f32.mrb[0].mxu0
  %502 = vmatprep.mubr.f32.mxu0 0.0
  %503 = vmatmul.mubr.f32.gmra.mrb[0].mxu0 %v226
  %v504 = vpop.f32.mrb[0].mxu0
  %v505 = vadd.f32 %v360, %v504
  %v506 = vpop.f32.mrb[0].mxu0
  %507 = vmatprep.mubr.f32.mxu0 0.0
  %508 = vmatmul.mubr.f32.gmra.mrb[0].mxu0 %v229
  %v509 = vpop.f32.mrb[0].mxu0
  %v510 = vadd.f32 %v365, %v509
  %v511 = vpop.f32.mrb[0].mxu0
  %512 = vmatprep.mubr.f32.mxu0 0.0
  %513 = vmatmul.mubr.f32.gmra.mrb[0].mxu0 %v232
  %v514 = vpop.f32.mrb[0].mxu0
  %v515 = vadd.f32 %v370, %v514
  %v516 = vpop.f32.mrb[0].mxu0
  %517 = vmatprep.mubr.f32.mxu0 0.0
  %518 = vmatmul.mubr.f32.gmra.mrb[0].mxu0 %v235
  %v519 = vpop.f32.mrb[0].mxu0
  %v520 = vadd.f32 %v375, %v519
  %v521 = vpop.f32.mrb[0].mxu0
  %522 = vmatprep.mubr.f32.mxu0 0.0
  %523 = vmatmul.mubr.f32.gmra.mrb[0].mxu0 %v238
  %v524 = vpop.f32.mrb[0].mxu0
  %v525 = vadd.f32 %v380, %v524
  %v526 = vpop.f32.mrb[0].mxu0
  %527 = vmatprep.mubr.f32.mxu0 0.0
  %528 = vmatmul.mubr.f32.gmra.mrb[0].mxu0 %v241
  %v529 = vpop.f32.mrb[0].mxu0
  %v530 = vadd.f32 %v385, %v529
  %v531 = vpop.f32.mrb[0].mxu0
  %532 = vdwg.mxu0
  %v533 = vmax.f32 %v455, 0.0
  %v534 = vmax.f32 %v460, 0.0
  %v535 = vmax.f32 %v465, 0.0
  %v536 = vmax.f32 %v470, 0.0
  %v537 = vmax.f32 %v475, 0.0
  %v538 = vmax.f32 %v480, 0.0
  %v539 = vmax.f32 %v485, 0.0
  %v540 = vmax.f32 %v490, 0.0
  %v541 = vmax.f32 %v495, 0.0
  %v542 = vmax.f32 %v500, 0.0
  %v543 = vmax.f32 %v505, 0.0
  %v544 = vmax.f32 %v510, 0.0
  %v545 = vmax.f32 %v515, 0.0
  %v546 = vmax.f32 %v520, 0.0
  %v547 = vmax.f32 %v525, 0.0
  %v548 = vmax.f32 %v530, 0.0
  %v549 = vmul.f32 %v533, %v533
  %v550 = vmul.f32 %v534, %v534
  %v551 = vmul.f32 %v535, %v535
  %v552 = vmul.f32 %v536, %v536
  %vm557 = vcmask 1046528
  %v558 = vrot.slane %v549, 1
  %v559 = vrot.slane %v550, 1
  %v560 = vsel %vm557, %v558, %v559
  %v561 = vrot.slane %v551, 1
  %v562 = vsel %vm557, %v559, %v561
  %v563 = vrot.slane %v552, 1
  %v564 = vsel %vm557, %v561, %v563
  %v569 = vsel %vm557, %v563, 0.0
  %v570 = vadd.f32 %v549, %v560
  %v571 = vadd.f32 %v550, %v562
  %v572 = vadd.f32 %v551, %v564
  %v573 = vadd.f32 %v552, %v569
  %vm574 = vcmask 1040384
  %v575 = vrot.slane %v549, 7
  %v576 = vrot.slane %v550, 7
  %v577 = vsel %vm574, %v575, %v576
  %v578 = vrot.slane %v551, 7
  %v579 = vsel %vm574, %v576, %v578
  %v580 = vrot.slane %v552, 7
  %v581 = vsel %vm574, %v578, %v580
  %v586 = vsel %vm574, 0.0, %v575
  %v587 = vadd.f32 %v570, %v586
  %v588 = vadd.f32 %v571, %v577
  %v589 = vadd.f32 %v572, %v579
  %v590 = vadd.f32 %v573, %v581
  %vm591 = vcmask 1045504
  %v592 = vrot.slane %v549, 2
  %v593 = vrot.slane %v550, 2
  %v594 = vsel %vm591, %v592, %v593
  %v595 = vrot.slane %v551, 2
  %v596 = vsel %vm591, %v593, %v595
  %v597 = vrot.slane %v552, 2
  %v598 = vsel %vm591, %v595, %v597
  %v603 = vsel %vm591, %v597, 0.0
  %v604 = vadd.f32 %v587, %v594
  %v605 = vadd.f32 %v588, %v596
  %v606 = vadd.f32 %v589, %v598
  %v607 = vadd.f32 %v590, %v603
  %vm608 = vcmask 1041408
  %v609 = vrot.slane %v549, 6
  %v610 = vrot.slane %v550, 6
  %v611 = vsel %vm608, %v609, %v610
  %v612 = vrot.slane %v551, 6
  %v613 = vsel %vm608, %v610, %v612
  %v614 = vrot.slane %v552, 6
  %v615 = vsel %vm608, %v612, %v614
  %v620 = vsel %vm608, 0.0, %v609
  %v621 = vadd.f32 %v604, %v620
  %v622 = vadd.f32 %v605, %v611
  %v623 = vadd.f32 %v606, %v613
  %v624 = vadd.f32 %v607, %v615
  %v625 = vmul.f32 %v621, 0.0002
  %v626 = vmul.f32 %v622, 0.0002
  %v627 = vmul.f32 %v623, 0.0002
  %v628 = vmul.f32 %v624, 0.0002
  %v629 = vadd.f32 %v625, 1.0
  %v630 = vadd.f32 %v626, 1.0
  %v631 = vadd.f32 %v627, 1.0
  %v632 = vadd.f32 %v628, 1.0
  %v633 = vrsqrt.pop %v629
  %v634 = vrsqrt.pop %v630
  %v635 = vrsqrt.pop %v631
  %v636 = vrsqrt.pop %v632
  %v637 = vmul.f32 %v533, %v633
  %v638 = vmul.f32 %v534, %v634
  %v639 = vmul.f32 %v535, %v635
  %v640 = vmul.f32 %v536, %v636
  %v641 = vmul.f32 %v537, %v537
  %v642 = vmul.f32 %v538, %v538
  %v643 = vmul.f32 %v539, %v539
  %v644 = vmul.f32 %v540, %v540
  %v649 = vrot.slane %v641, 1
  %v650 = vrot.slane %v642, 1
  %v651 = vsel %vm557, %v649, %v650
  %v652 = vrot.slane %v643, 1
  %v653 = vsel %vm557, %v650, %v652
  %v654 = vrot.slane %v644, 1
  %v655 = vsel %vm557, %v652, %v654
  %v660 = vsel %vm557, %v654, 0.0
  %v661 = vadd.f32 %v641, %v651
  %v662 = vadd.f32 %v642, %v653
  %v663 = vadd.f32 %v643, %v655
  %v664 = vadd.f32 %v644, %v660
  %v665 = vrot.slane %v641, 7
  %v666 = vrot.slane %v642, 7
  %v667 = vsel %vm574, %v665, %v666
  %v668 = vrot.slane %v643, 7
  %v669 = vsel %vm574, %v666, %v668
  %v670 = vrot.slane %v644, 7
  %v671 = vsel %vm574, %v668, %v670
  %v676 = vsel %vm574, 0.0, %v665
  %v677 = vadd.f32 %v661, %v676
  %v678 = vadd.f32 %v662, %v667
  %v679 = vadd.f32 %v663, %v669
  %v680 = vadd.f32 %v664, %v671
  %v681 = vrot.slane %v641, 2
  %v682 = vrot.slane %v642, 2
  %v683 = vsel %vm591, %v681, %v682
  %v684 = vrot.slane %v643, 2
  %v685 = vsel %vm591, %v682, %v684
  %v686 = vrot.slane %v644, 2
  %v687 = vsel %vm591, %v684, %v686
  %v692 = vsel %vm591, %v686, 0.0
  %v693 = vadd.f32 %v677, %v683
  %v694 = vadd.f32 %v678, %v685
  %v695 = vadd.f32 %v679, %v687
  %v696 = vadd.f32 %v680, %v692
  %v697 = vrot.slane %v641, 6
  %v698 = vrot.slane %v642, 6
  %v699 = vsel %vm608, %v697, %v698
  %v700 = vrot.slane %v643, 6
  %v701 = vsel %vm608, %v698, %v700
  %v702 = vrot.slane %v644, 6
  %v703 = vsel %vm608, %v700, %v702
  %v708 = vsel %vm608, 0.0, %v697
  %v709 = vadd.f32 %v693, %v708
  %v710 = vadd.f32 %v694, %v699
  %v711 = vadd.f32 %v695, %v701
  %v712 = vadd.f32 %v696, %v703
  %v713 = vmul.f32 %v709, 0.0002
  %v714 = vmul.f32 %v710, 0.0002
  %v715 = vmul.f32 %v711, 0.0002
  %v716 = vmul.f32 %v712, 0.0002
  %v717 = vadd.f32 %v713, 1.0
  %v718 = vadd.f32 %v714, 1.0
  %v719 = vadd.f32 %v715, 1.0
  %v720 = vadd.f32 %v716, 1.0
  %v721 = vrsqrt.pop %v717
  %v722 = vrsqrt.pop %v718
  %v723 = vrsqrt.pop %v719
  %v724 = vrsqrt.pop %v720
  %v725 = vmul.f32 %v537, %v721
  %v726 = vmul.f32 %v538, %v722
  %v727 = vmul.f32 %v539, %v723
  %v728 = vmul.f32 %v540, %v724
  %v729 = vmul.f32 %v541, %v541
  %v730 = vmul.f32 %v542, %v542
  %v731 = vmul.f32 %v543, %v543
  %v732 = vmul.f32 %v544, %v544
  %v737 = vrot.slane %v729, 1
  %v738 = vrot.slane %v730, 1
  %v739 = vsel %vm557, %v737, %v738
  %v740 = vrot.slane %v731, 1
  %v741 = vsel %vm557, %v738, %v740
  %v742 = vrot.slane %v732, 1
  %v743 = vsel %vm557, %v740, %v742
  %v748 = vsel %vm557, %v742, 0.0
  %v749 = vadd.f32 %v729, %v739
  %v750 = vadd.f32 %v730, %v741
  %v751 = vadd.f32 %v731, %v743
  %v752 = vadd.f32 %v732, %v748
  %v753 = vrot.slane %v729, 7
  %v754 = vrot.slane %v730, 7
  %v755 = vsel %vm574, %v753, %v754
  %v756 = vrot.slane %v731, 7
  %v757 = vsel %vm574, %v754, %v756
  %v758 = vrot.slane %v732, 7
  %v759 = vsel %vm574, %v756, %v758
  %v764 = vsel %vm574, 0.0, %v753
  %v765 = vadd.f32 %v749, %v764
  %v766 = vadd.f32 %v750, %v755
  %v767 = vadd.f32 %v751, %v757
  %v768 = vadd.f32 %v752, %v759
  %v769 = vrot.slane %v729, 2
  %v770 = vrot.slane %v730, 2
  %v771 = vsel %vm591, %v769, %v770
  %v772 = vrot.slane %v731, 2
  %v773 = vsel %vm591, %v770, %v772
  %v774 = vrot.slane %v732, 2
  %v775 = vsel %vm591, %v772, %v774
  %v780 = vsel %vm591, %v774, 0.0
  %v781 = vadd.f32 %v765, %v771
  %v782 = vadd.f32 %v766, %v773
  %v783 = vadd.f32 %v767, %v775
  %v784 = vadd.f32 %v768, %v780
  %v785 = vrot.slane %v729, 6
  %v786 = vrot.slane %v730, 6
  %v787 = vsel %vm608, %v785, %v786
  %v788 = vrot.slane %v731, 6
  %v789 = vsel %vm608, %v786, %v788
  %v790 = vrot.slane %v732, 6
  %v791 = vsel %vm608, %v788, %v790
  %v796 = vsel %vm608, 0.0, %v785
  %v797 = vadd.f32 %v781, %v796
  %v798 = vadd.f32 %v782, %v787
  %v799 = vadd.f32 %v783, %v789
  %v800 = vadd.f32 %v784, %v791
  %v801 = vmul.f32 %v797, 0.0002
  %v802 = vmul.f32 %v798, 0.0002
  %v803 = vmul.f32 %v799, 0.0002
  %v804 = vmul.f32 %v800, 0.0002
  %v805 = vadd.f32 %v801, 1.0
  %v806 = vadd.f32 %v802, 1.0
  %v807 = vadd.f32 %v803, 1.0
  %v808 = vadd.f32 %v804, 1.0
  %v809 = vrsqrt.pop %v805
  %v810 = vrsqrt.pop %v806
  %v811 = vrsqrt.pop %v807
  %v812 = vrsqrt.pop %v808
  %v813 = vmul.f32 %v541, %v809
  %v814 = vmul.f32 %v542, %v810
  %v815 = vmul.f32 %v543, %v811
  %v816 = vmul.f32 %v544, %v812
  %v817 = vmul.f32 %v545, %v545
  %v818 = vmul.f32 %v546, %v546
  %v819 = vmul.f32 %v547, %v547
  %v820 = vmul.f32 %v548, %v548
  %v825 = vrot.slane %v817, 1
  %v826 = vrot.slane %v818, 1
  %v827 = vsel %vm557, %v825, %v826
  %v828 = vrot.slane %v819, 1
  %v829 = vsel %vm557, %v826, %v828
  %v830 = vrot.slane %v820, 1
  %v831 = vsel %vm557, %v828, %v830
  %v836 = vsel %vm557, %v830, 0.0
  %v837 = vadd.f32 %v817, %v827
  %v838 = vadd.f32 %v818, %v829
  %v839 = vadd.f32 %v819, %v831
  %v840 = vadd.f32 %v820, %v836
  %v841 = vrot.slane %v817, 7
  %v842 = vrot.slane %v818, 7
  %v843 = vsel %vm574, %v841, %v842
  %v844 = vrot.slane %v819, 7
  %v845 = vsel %vm574, %v842, %v844
  %v846 = vrot.slane %v820, 7
  %v847 = vsel %vm574, %v844, %v846
  %v852 = vsel %vm574, 0.0, %v841
  %v853 = vadd.f32 %v837, %v852
  %v854 = vadd.f32 %v838, %v843
  %v855 = vadd.f32 %v839, %v845
  %v856 = vadd.f32 %v840, %v847
  %v857 = vrot.slane %v817, 2
  %v858 = vrot.slane %v818, 2
  %v859 = vsel %vm591, %v857, %v858
  %v860 = vrot.slane %v819, 2
  %v861 = vsel %vm591, %v858, %v860
  %v862 = vrot.slane %v820, 2
  %v863 = vsel %vm591, %v860, %v862
  %v868 = vsel %vm591, %v862, 0.0
  %v869 = vadd.f32 %v853, %v859
  %v870 = vadd.f32 %v854, %v861
  %v871 = vadd.f32 %v855, %v863
  %v872 = vadd.f32 %v856, %v868
  %v873 = vrot.slane %v817, 6
  %v874 = vrot.slane %v818, 6
  %v875 = vsel %vm608, %v873, %v874
  %v876 = vrot.slane %v819, 6
  %v877 = vsel %vm608, %v874, %v876
  %v878 = vrot.slane %v820, 6
  %v879 = vsel %vm608, %v876, %v878
  %v884 = vsel %vm608, 0.0, %v873
  %v885 = vadd.f32 %v869, %v884
  %v886 = vadd.f32 %v870, %v875
  %v887 = vadd.f32 %v871, %v877
  %v888 = vadd.f32 %v872, %v879
  %v889 = vmul.f32 %v885, 0.0002
  %v890 = vmul.f32 %v886, 0.0002
  %v891 = vmul.f32 %v887, 0.0002
  %v892 = vmul.f32 %v888, 0.0002
  %v893 = vadd.f32 %v889, 1.0
  %v894 = vadd.f32 %v890, 1.0
  %v895 = vadd.f32 %v891, 1.0
  %v896 = vadd.f32 %v892, 1.0
  %v897 = vrsqrt.pop %v893
  %v898 = vrsqrt.pop %v894
  %v899 = vrsqrt.pop %v895
  %v900 = vrsqrt.pop %v896
  %v901 = vmul.f32 %v545, %v897
  %v902 = vmul.f32 %v546, %v898
  %v903 = vmul.f32 %v547, %v899
  %v904 = vmul.f32 %v548, %v900
  %905 = vst [vmem:[%s3] sm:$0xff] %v637
  %906 = vst [vmem:[%s3 + $0x8] sm:$0xff] %v638
  %907 = vst [vmem:[%s3 + $0x10] sm:$0xff] %v639
  %908 = vst [vmem:[%s3 + $0x18] sm:$0xff] %v640
  %909 = vst [vmem:[%s3 + $0x20] sm:$0xff] %v725
  %910 = vst [vmem:[%s3 + $0x28] sm:$0xff] %v726
  %911 = vst [vmem:[%s3 + $0x30] sm:$0xff] %v727
  %912 = vst [vmem:[%s3 + $0x38] sm:$0xff] %v728
  %913 = vst [vmem:[%s3 + $0x40] sm:$0xff] %v813
  %914 = vst [vmem:[%s3 + $0x48] sm:$0xff] %v814
  %915 = vst [vmem:[%s3 + $0x50] sm:$0xff] %v815
  %916 = vst [vmem:[%s3 + $0x58] sm:$0xff] %v816
  %917 = vst [vmem:[%s3 + $0x60] sm:$0xff] %v901
  %918 = vst [vmem:[%s3 + $0x68] sm:$0xff] %v902
  %919 = vst [vmem:[%s3 + $0x70] sm:$0xff] %v903
  %920 = vst [vmem:[%s3 + $0x78] sm:$0xff] %v904
  // Predicated region
  $region14: #{ff_gauss_vae_forward.12} parent=0 // pred_check
    _
  $region15: #{ff_gauss_vae_forward.12} parent=0 // pred_check_branch
    %922 = sbr.rel (0) target = $region17
  $region16: #{ff_gauss_vae_forward.12} parent=0 // pred_region
    _
  $region17: #{ff_gauss_vae_forward.12} parent=0 // pred_fallthru
    _
  // Predicated region
  $region18: #{ff_gauss_vae_forward.12} parent=0 // pred_check
    _
  $region19: #{ff_gauss_vae_forward.12} parent=0 // pred_check_branch
    %924 = sbr.rel (0) target = $region21
  $region20: #{ff_gauss_vae_forward.12} parent=0 // pred_region
    _
  $region21: #{ff_gauss_vae_forward.12} parent=0 // pred_fallthru
    _

// kernel: ff_gauss_vae_forward.13
$region0: #{ff_gauss_vae_forward.13}
  #allocation0 [shape = 'u32[]', space=smem, size = 0x4, offset = 0x4, fixed_abs, tag = 'smem constant byte address 0x4 - core index']
  #allocation1 [shape = 'u32[144,128]{1,0:T(1,128)}', space=vmem, size = 0x12000, scoped, tag = 'internal scratch']
  %s0 = inlined_call_operand.vmem [shape: f32[4,288], index: 0, kind: input, shape index: {}]
  %s1 = inlined_call_operand.vmem [shape: f32[288,512], index: 1, kind: input, shape index: {}]
  %s2 = inlined_call_operand.vmem [shape: f32[4,1], index: 2, kind: input, shape index: {}]
  %s3 = inlined_call_operand.vmem [shape: f32[4,512], index: 3, kind: output, shape index: {}]
  %s4 = sld [smem:[#allocation0]]
  $region22: #{ff_gauss_vae_forward.13} parent=0
    _
  %s6 = ssub.s32 1, %s4
  %s7 = scalar_select 0, %s6, %s4
  // Predicated region
  $region2: #{ff_gauss_vae_forward.13} parent=0 // pred_check
    _
  $region3: #{ff_gauss_vae_forward.13} parent=0 // pred_check_branch
    %9 = sbr.rel (0) target = $region5
  $region4: #{ff_gauss_vae_forward.13} parent=0 // pred_region
    _
  $region5: #{ff_gauss_vae_forward.13} parent=0 // pred_fallthru
    _
  // Predicated region
  $region6: #{ff_gauss_vae_forward.13} parent=0 // pred_check
    _
  $region7: #{ff_gauss_vae_forward.13} parent=0 // pred_check_branch
    %11 = sbr.rel (0) target = $region9
  $region8: #{ff_gauss_vae_forward.13} parent=0 // pred_region
    _
  $region9: #{ff_gauss_vae_forward.13} parent=0 // pred_fallthru
    _
  // Predicated region
  $region10: #{ff_gauss_vae_forward.13} parent=0 // pred_check
    _
  $region11: #{ff_gauss_vae_forward.13} parent=0 // pred_check_branch
    %13 = sbr.rel (0) target = $region13
  $region12: #{ff_gauss_vae_forward.13} parent=0 // pred_region
    _
  $region13: #{ff_gauss_vae_forward.13} parent=0 // pred_fallthru
    _
  %v14 = vld [vmem:[%s0] sm:$0xff]
  %v15 = vld [vmem:[%s0 + $0x8] sm:$0xf]
  %v16 = vld [vmem:[%s1] sm:$0xff]
  %v17 = vld [vmem:[%s1 + $0x8] sm:$0xff]
  %v18 = vld [vmem:[%s1 + $0x10] sm:$0xff]
  %v19 = vld [vmem:[%s1 + $0x18] sm:$0xff]
  %v20 = vld [vmem:[%s1 + $0x20] sm:$0xff]
  %v21 = vld [vmem:[%s1 + $0x28] sm:$0xff]
  %v22 = vld [vmem:[%s1 + $0x30] sm:$0xff]
  %v23 = vld [vmem:[%s1 + $0x38] sm:$0xff]
  %v24 = vld [vmem:[%s1 + $0x40] sm:$0xff]
  %v25 = vld [vmem:[%s1 + $0x48] sm:$0xff]
  %v26 = vld [vmem:[%s1 + $0x50] sm:$0xff]
  %v27 = vld [vmem:[%s1 + $0x58] sm:$0xff]
  %v28 = vld [vmem:[%s1 + $0x60] sm:$0xff]
  %v29 = vld [vmem:[%s1 + $0x68] sm:$0xff]
  %v30 = vld [vmem:[%s1 + $0x70] sm:$0xff]
  %v31 = vld [vmem:[%s1 + $0x78] sm:$0xff]
  %v32 = vld [vmem:[%s1 + $0x80] sm:$0xff]
  %v33 = vld [vmem:[%s1 + $0x88] sm:$0xff]
  %v34 = vld [vmem:[%s1 + $0x90] sm:$0xff]
  %v35 = vld [vmem:[%s1 + $0x98] sm:$0xff]
  %v36 = vld [vmem:[%s1 + $0xa0] sm:$0xff]
  %v37 = vld [vmem:[%s1 + $0xa8] sm:$0xff]
  %v38 = vld [vmem:[%s1 + $0xb0] sm:$0xff]
  %v39 = vld [vmem:[%s1 + $0xb8] sm:$0xff]
  %v40 = vld [vmem:[%s1 + $0xc0] sm:$0xff]
  %v41 = vld [vmem:[%s1 + $0xc8] sm:$0xff]
  %v42 = vld [vmem:[%s1 + $0xd0] sm:$0xff]
  %v43 = vld [vmem:[%s1 + $0xd8] sm:$0xff]
  %v44 = vld [vmem:[%s1 + $0xe0] sm:$0xff]
  %v45 = vld [vmem:[%s1 + $0xe8] sm:$0xff]
  %v46 = vld [vmem:[%s1 + $0xf0] sm:$0xff]
  %v47 = vld [vmem:[%s1 + $0xf8] sm:$0xff]
  %v48 = vld [vmem:[%s1 + $0x100] sm:$0xff]
  %v49 = vld [vmem:[%s1 + $0x108] sm:$0xff]
  %v50 = vld [vmem:[%s1 + $0x110] sm:$0xff]
  %v51 = vld [vmem:[%s1 + $0x118] sm:$0xff]
  %v52 = vld [vmem:[%s1 + $0x120] sm:$0xff]
  %v53 = vld [vmem:[%s1 + $0x128] sm:$0xff]
  %v54 = vld [vmem:[%s1 + $0x130] sm:$0xff]
  %v55 = vld [vmem:[%s1 + $0x138] sm:$0xff]
  %v56 = vld [vmem:[%s1 + $0x140] sm:$0xff]
  %v57 = vld [vmem:[%s1 + $0x148] sm:$0xff]
  %v58 = vld [vmem:[%s1 + $0x150] sm:$0xff]
  %v59 = vld [vmem:[%s1 + $0x158] sm:$0xff]
  %v60 = vld [vmem:[%s1 + $0x160] sm:$0xff]
  %v61 = vld [vmem:[%s1 + $0x168] sm:$0xff]
  %v62 = vld [vmem:[%s1 + $0x170] sm:$0xff]
  %v63 = vld [vmem:[%s1 + $0x178] sm:$0xff]
  %v64 = vld [vmem:[%s1 + $0x180] sm:$0xff]
  %v65 = vld [vmem:[%s1 + $0x188] sm:$0xff]
  %v66 = vld [vmem:[%s1 + $0x190] sm:$0xff]
  %v67 = vld [vmem:[%s1 + $0x198] sm:$0xff]
  %v68 = vld [vmem:[%s1 + $0x1a0] sm:$0xff]
  %v69 = vld [vmem:[%s1 + $0x1a8] sm:$0xff]
  %v70 = vld [vmem:[%s1 + $0x1b0] sm:$0xff]
  %v71 = vld [vmem:[%s1 + $0x1b8] sm:$0xff]
  %v72 = vld [vmem:[%s1 + $0x1c0] sm:$0xff]
  %v73 = vld [vmem:[%s1 + $0x1c8] sm:$0xff]
  %v74 = vld [vmem:[%s1 + $0x1d0] sm:$0xff]
  %v75 = vld [vmem:[%s1 + $0x1d8] sm:$0xff]
  %v76 = vld [vmem:[%s1 + $0x1e0] sm:$0xff]
  %v77 = vld [vmem:[%s1 + $0x1e8] sm:$0xff]
  %v78 = vld [vmem:[%s1 + $0x1f0] sm:$0xff]
  %v79 = vld [vmem:[%s1 + $0x1f8] sm:$0xff]
  %v80 = vld [vmem:[%s1 + $0x200] sm:$0xff]
  %v81 = vld [vmem:[%s1 + $0x208] sm:$0xff]
  %v82 = vld [vmem:[%s1 + $0x210] sm:$0xff]
  %v83 = vld [vmem:[%s1 + $0x218] sm:$0xff]
  %v84 = vld [vmem:[%s1 + $0x220] sm:$0xff]
  %v85 = vld [vmem:[%s1 + $0x228] sm:$0xff]
  %v86 = vld [vmem:[%s1 + $0x230] sm:$0xff]
  %v87 = vld [vmem:[%s1 + $0x238] sm:$0xff]
  %v88 = vld [vmem:[%s1 + $0x240] sm:$0xff]
  %v89 = vld [vmem:[%s1 + $0x248] sm:$0xff]
  %v90 = vld [vmem:[%s1 + $0x250] sm:$0xff]
  %v91 = vld [vmem:[%s1 + $0x258] sm:$0xff]
  %v92 = vld [vmem:[%s1 + $0x260] sm:$0xff]
  %v93 = vld [vmem:[%s1 + $0x268] sm:$0xff]
  %v94 = vld [vmem:[%s1 + $0x270] sm:$0xff]
  %v95 = vld [vmem:[%s1 + $0x278] sm:$0xff]
  %v96 = vld [vmem:[%s1 + $0x280] sm:$0xff]
  %v97 = vld [vmem:[%s1 + $0x288] sm:$0xff]
  %v98 = vld [vmem:[%s1 + $0x290] sm:$0xff]
  %v99 = vld [vmem:[%s1 + $0x298] sm:$0xff]
  %v100 = vld [vmem:[%s1 + $0x2a0] sm:$0xff]
  %v101 = vld [vmem:[%s1 + $0x2a8] sm:$0xff]
  %v102 = vld [vmem:[%s1 + $0x2b0] sm:$0xff]
  %v103 = vld [vmem:[%s1 + $0x2b8] sm:$0xff]
  %v104 = vld [vmem:[%s1 + $0x2c0] sm:$0xff]
  %v105 = vld [vmem:[%s1 + $0x2c8] sm:$0xff]
  %v106 = vld [vmem:[%s1 + $0x2d0] sm:$0xff]
  %v107 = vld [vmem:[%s1 + $0x2d8] sm:$0xff]
  %v108 = vld [vmem:[%s1 + $0x2e0] sm:$0xff]
  %v109 = vld [vmem:[%s1 + $0x2e8] sm:$0xff]
  %v110 = vld [vmem:[%s1 + $0x2f0] sm:$0xff]
  %v111 = vld [vmem:[%s1 + $0x2f8] sm:$0xff]
  %v112 = vld [vmem:[%s1 + $0x300] sm:$0xff]
  %v113 = vld [vmem:[%s1 + $0x308] sm:$0xff]
  %v114 = vld [vmem:[%s1 + $0x310] sm:$0xff]
  %v115 = vld [vmem:[%s1 + $0x318] sm:$0xff]
  %v116 = vld [vmem:[%s1 + $0x320] sm:$0xff]
  %v117 = vld [vmem:[%s1 + $0x328] sm:$0xff]
  %v118 = vld [vmem:[%s1 + $0x330] sm:$0xff]
  %v119 = vld [vmem:[%s1 + $0x338] sm:$0xff]
  %v120 = vld [vmem:[%s1 + $0x340] sm:$0xff]
  %v121 = vld [vmem:[%s1 + $0x348] sm:$0xff]
  %v122 = vld [vmem:[%s1 + $0x350] sm:$0xff]
  %v123 = vld [vmem:[%s1 + $0x358] sm:$0xff]
  %v124 = vld [vmem:[%s1 + $0x360] sm:$0xff]
  %v125 = vld [vmem:[%s1 + $0x368] sm:$0xff]
  %v126 = vld [vmem:[%s1 + $0x370] sm:$0xff]
  %v127 = vld [vmem:[%s1 + $0x378] sm:$0xff]
  %v128 = vld [vmem:[%s1 + $0x380] sm:$0xff]
  %v129 = vld [vmem:[%s1 + $0x388] sm:$0xff]
  %v130 = vld [vmem:[%s1 + $0x390] sm:$0xff]
  %v131 = vld [vmem:[%s1 + $0x398] sm:$0xff]
  %v132 = vld [vmem:[%s1 + $0x3a0] sm:$0xff]
  %v133 = vld [vmem:[%s1 + $0x3a8] sm:$0xff]
  %v134 = vld [vmem:[%s1 + $0x3b0] sm:$0xff]
  %v135 = vld [vmem:[%s1 + $0x3b8] sm:$0xff]
  %v136 = vld [vmem:[%s1 + $0x3c0] sm:$0xff]
  %v137 = vld [vmem:[%s1 + $0x3c8] sm:$0xff]
  %v138 = vld [vmem:[%s1 + $0x3d0] sm:$0xff]
  %v139 = vld [vmem:[%s1 + $0x3d8] sm:$0xff]
  %v140 = vld [vmem:[%s1 + $0x3e0] sm:$0xff]
  %v141 = vld [vmem:[%s1 + $0x3e8] sm:$0xff]
  %v142 = vld [vmem:[%s1 + $0x3f0] sm:$0xff]
  %v143 = vld [vmem:[%s1 + $0x3f8] sm:$0xff]
  %v144 = vld [vmem:[%s1 + $0x400] sm:$0xff]
  %v145 = vld [vmem:[%s1 + $0x408] sm:$0xff]
  %v146 = vld [vmem:[%s1 + $0x410] sm:$0xff]
  %v147 = vld [vmem:[%s1 + $0x418] sm:$0xff]
  %v148 = vld [vmem:[%s1 + $0x420] sm:$0xff]
  %v149 = vld [vmem:[%s1 + $0x428] sm:$0xff]
  %v150 = vld [vmem:[%s1 + $0x430] sm:$0xff]
  %v151 = vld [vmem:[%s1 + $0x438] sm:$0xff]
  %v152 = vld [vmem:[%s1 + $0x440] sm:$0xff]
  %v153 = vld [vmem:[%s1 + $0x448] sm:$0xff]
  %v154 = vld [vmem:[%s1 + $0x450] sm:$0xff]
  %v155 = vld [vmem:[%s1 + $0x458] sm:$0xff]
  %v156 = vld [vmem:[%s1 + $0x460] sm:$0xff]
  %v157 = vld [vmem:[%s1 + $0x468] sm:$0xff]
  %v158 = vld [vmem:[%s1 + $0x470] sm:$0xff]
  %v159 = vld [vmem:[%s1 + $0x478] sm:$0xff]
  %v160 = vld [vmem:[%s2] sm:$0xf]
  %162 = vset.pattern.permute.xlu0 0
  %163 = vperm.xlu0 %162, %v160
  %v164 = vpop.permute.xlu0 %163
  %v168 = vcombine.high %v14, %v14
  %vm170 = vcmask 261120
  %v171 = vsel %vm170, %v15, 0
  %173 = vmatprep.subr.mxu0 %v17
  %174 = vmatpush1.msra.mxu0 %v16
  %175 = vmatprep.subr.mxu0 %v21
  %176 = vmatpush1.msra.mxu0 %v20
  %177 = vmatprep.subr.mxu0 %v25
  %178 = vmatpush1.msra.mxu0 %v24
  %179 = vmatprep.subr.mxu0 %v29
  %180 = vmatpush1.msra.mxu0 %v28
  %181 = vmatprep.subr.mxu0 %v33
  %182 = vmatpush1.msra.mxu0 %v32
  %183 = vmatprep.subr.mxu0 %v37
  %184 = vmatpush1.msra.mxu0 %v36
  %185 = vmatprep.subr.mxu0 %v41
  %186 = vmatpush1.msra.mxu0 %v40
  %187 = vmatprep.subr.mxu0 %v45
  %188 = vmatpush1.msra.mxu0 %v44
  %189 = vmatprep.subr.mxu0 %v49
  %190 = vmatpush1.msra.mxu0 %v48
  %191 = vmatprep.subr.mxu0 %v53
  %192 = vmatpush1.msra.mxu0 %v52
  %193 = vmatprep.subr.mxu0 %v57
  %194 = vmatpush1.msra.mxu0 %v56
  %195 = vmatprep.subr.mxu0 %v61
  %196 = vmatpush1.msra.mxu0 %v60
  %197 = vmatprep.subr.mxu0 %v65
  %198 = vmatpush1.msra.mxu0 %v64
  %199 = vmatprep.subr.mxu0 %v69
  %200 = vmatpush1.msra.mxu0 %v68
  %201 = vmatprep.subr.mxu0 %v73
  %202 = vmatpush1.msra.mxu0 %v72
  %203 = vmatprep.subr.mxu0 %v77
  %204 = vmatpush1.msra.mxu0 %v76
  %205 = vmatprep.subr.mxu0 %v81
  %206 = vmatpush1.msra.mxu0 %v80
  %207 = vmatprep.subr.mxu0 %v85
  %208 = vmatpush1.msra.mxu0 %v84
  %209 = vmatprep.subr.mxu0 %v89
  %210 = vmatpush1.msra.mxu0 %v88
  %211 = vmatprep.subr.mxu0 %v93
  %212 = vmatpush1.msra.mxu0 %v92
  %213 = vmatprep.subr.mxu0 %v97
  %214 = vmatpush1.msra.mxu0 %v96
  %215 = vmatprep.subr.mxu0 %v101
  %216 = vmatpush1.msra.mxu0 %v100
  %217 = vmatprep.subr.mxu0 %v105
  %218 = vmatpush1.msra.mxu0 %v104
  %219 = vmatprep.subr.mxu0 %v109
  %220 = vmatpush1.msra.mxu0 %v108
  %221 = vmatprep.subr.mxu0 %v113
  %222 = vmatpush1.msra.mxu0 %v112
  %223 = vmatprep.subr.mxu0 %v117
  %224 = vmatpush1.msra.mxu0 %v116
  %225 = vmatprep.subr.mxu0 %v121
  %226 = vmatpush1.msra.mxu0 %v120
  %227 = vmatprep.subr.mxu0 %v125
  %228 = vmatpush1.msra.mxu0 %v124
  %229 = vmatprep.subr.mxu0 %v129
  %230 = vmatpush1.msra.mxu0 %v128
  %231 = vmatprep.subr.mxu0 %v133
  %232 = vmatpush1.msra.mxu0 %v132
  %233 = vmatprep.subr.mxu0 %v137
  %234 = vmatpush1.msra.mxu0 %v136
  %235 = vmatprep.subr.mxu0 %v141
  %236 = vmatpush1.msra.mxu0 %v140
  %237 = vmatprep.mubr.f32.mxu0 %v168
  %238 = vmatmul.mubr.f32.gmra.mrb[0].mxu0 %v14
  %v239 = vpop.f32.mrb[0].mxu0
  %v240 = vadd.f32 %v164, %v239
  %v241 = vpop.f32.mrb[0].mxu0
  %v242 = vadd.f32 %v164, %v241
  %243 = vdwg.mxu0
  %244 = vmatprep.subr.mxu0 %v145
  %245 = vmatpush1.msra.mxu0 %v144
  %246 = vmatprep.subr.mxu0 %v149
  %247 = vmatpush1.msra.mxu0 %v148
  %248 = vmatprep.subr.mxu0 %v153
  %249 = vmatpush1.msra.mxu0 %v152
  %250 = vmatprep.subr.mxu0 %v157
  %251 = vmatpush1.msra.mxu0 %v156
  %252 = vmatprep.subr.mxu0 0.0
  %253 = vmatpush1.msra.mxu0 0.0
  %254 = vmatprep.subr.mxu0 0.0
  %255 = vmatpush1.msra.mxu0 0.0
  %256 = vmatprep.subr.mxu0 0.0
  %257 = vmatpush1.msra.mxu0 0.0
  %258 = vmatprep.subr.mxu0 0.0
  %259 = vmatpush1.msra.mxu0 0.0
  %260 = vmatprep.subr.mxu0 0.0
  %261 = vmatpush1.msra.mxu0 0.0
  %262 = vmatprep.subr.mxu0 0.0
  %263 = vmatpush1.msra.mxu0 0.0
  %264 = vmatprep.subr.mxu0 0.0
  %265 = vmatpush1.msra.mxu0 0.0
  %266 = vmatprep.subr.mxu0 0.0
  %267 = vmatpush1.msra.mxu0 0.0
  %268 = vmatprep.subr.mxu0 0.0
  %269 = vmatpush1.msra.mxu0 0.0
  %270 = vmatprep.subr.mxu0 0.0
  %271 = vmatpush1.msra.mxu0 0.0
  %272 = vmatprep.subr.mxu0 0.0
  %273 = vmatpush1.msra.mxu0 0.0
  %274 = vmatprep.subr.mxu0 0.0
  %275 = vmatpush1.msra.mxu0 0.0
  %276 = vmatprep.subr.mxu0 0.0
  %277 = vmatpush1.msra.mxu0 0.0
  %278 = vmatprep.subr.mxu0 0.0
  %279 = vmatpush1.msra.mxu0 0.0
  %280 = vmatprep.subr.mxu0 0.0
  %281 = vmatpush1.msra.mxu0 0.0
  %282 = vmatprep.subr.mxu0 0.0
  %283 = vmatpush1.msra.mxu0 0.0
  %284 = vmatprep.subr.mxu0 0.0
  %285 = vmatpush1.msra.mxu0 0.0
  %286 = vmatprep.subr.mxu0 0.0
  %287 = vmatpush1.msra.mxu0 0.0
  %288 = vmatprep.subr.mxu0 0.0
  %289 = vmatpush1.msra.mxu0 0.0
  %290 = vmatprep.subr.mxu0 0.0
  %291 = vmatpush1.msra.mxu0 0.0
  %292 = vmatprep.subr.mxu0 0.0
  %293 = vmatpush1.msra.mxu0 0.0
  %294 = vmatprep.subr.mxu0 0.0
  %295 = vmatpush1.msra.mxu0 0.0
  %296 = vmatprep.subr.mxu0 0.0
  %297 = vmatpush1.msra.mxu0 0.0
  %298 = vmatprep.subr.mxu0 0.0
  %299 = vmatpush1.msra.mxu0 0.0
  %300 = vmatprep.subr.mxu0 0.0
  %301 = vmatpush1.msra.mxu0 0.0
  %302 = vmatprep.subr.mxu0 0.0
  %303 = vmatpush1.msra.mxu0 0.0
  %304 = vmatprep.subr.mxu0 0.0
  %305 = vmatpush1.msra.mxu0 0.0
  %306 = vmatprep.subr.mxu0 0.0
  %307 = vmatpush1.msra.mxu0 0.0
  %308 = vmatprep.mubr.f32.mxu0 0.0
  %309 = vmatmul.mubr.f32.gmra.mrb[0].mxu0 %v171
  %v310 = vpop.f32.mrb[0].mxu0
  %v311 = vadd.f32 %v240, %v310
  %v312 = vpop.f32.mrb[0].mxu0
  %v313 = vadd.f32 %v242, %v312
  %314 = vdwg.mxu0
  %315 = vmatprep.subr.mxu0 %v19
  %316 = vmatpush1.msra.mxu0 %v18
  %317 = vmatprep.subr.mxu0 %v23
  %318 = vmatpush1.msra.mxu0 %v22
  %319 = vmatprep.subr.mxu0 %v27
  %320 = vmatpush1.msra.mxu0 %v26
  %321 = vmatprep.subr.mxu0 %v31
  %322 = vmatpush1.msra.mxu0 %v30
  %323 = vmatprep.subr.mxu0 %v35
  %324 = vmatpush1.msra.mxu0 %v34
  %325 = vmatprep.subr.mxu0 %v39
  %326 = vmatpush1.msra.mxu0 %v38
  %327 = vmatprep.subr.mxu0 %v43
  %328 = vmatpush1.msra.mxu0 %v42
  %329 = vmatprep.subr.mxu0 %v47
  %330 = vmatpush1.msra.mxu0 %v46
  %331 = vmatprep.subr.mxu0 %v51
  %332 = vmatpush1.msra.mxu0 %v50
  %333 = vmatprep.subr.mxu0 %v55
  %334 = vmatpush1.msra.mxu0 %v54
  %335 = vmatprep.subr.mxu0 %v59
  %336 = vmatpush1.msra.mxu0 %v58
  %337 = vmatprep.subr.mxu0 %v63
  %338 = vmatpush1.msra.mxu0 %v62
  %339 = vmatprep.subr.mxu0 %v67
  %340 = vmatpush1.msra.mxu0 %v66
  %341 = vmatprep.subr.mxu0 %v71
  %342 = vmatpush1.msra.mxu0 %v70
  %343 = vmatprep.subr.mxu0 %v75
  %344 = vmatpush1.msra.mxu0 %v74
  %345 = vmatprep.subr.mxu0 %v79
  %346 = vmatpush1.msra.mxu0 %v78
  %347 = vmatprep.subr.mxu0 %v83
  %348 = vmatpush1.msra.mxu0 %v82
  %349 = vmatprep.subr.mxu0 %v87
  %350 = vmatpush1.msra.mxu0 %v86
  %351 = vmatprep.subr.mxu0 %v91
  %352 = vmatpush1.msra.mxu0 %v90
  %353 = vmatprep.subr.mxu0 %v95
  %354 = vmatpush1.msra.mxu0 %v94
  %355 = vmatprep.subr.mxu0 %v99
  %356 = vmatpush1.msra.mxu0 %v98
  %357 = vmatprep.subr.mxu0 %v103
  %358 = vmatpush1.msra.mxu0 %v102
  %359 = vmatprep.subr.mxu0 %v107
  %360 = vmatpush1.msra.mxu0 %v106
  %361 = vmatprep.subr.mxu0 %v111
  %362 = vmatpush1.msra.mxu0 %v110
  %363 = vmatprep.subr.mxu0 %v115
  %364 = vmatpush1.msra.mxu0 %v114
  %365 = vmatprep.subr.mxu0 %v119
  %366 = vmatpush1.msra.mxu0 %v118
  %367 = vmatprep.subr.mxu0 %v123
  %368 = vmatpush1.msra.mxu0 %v122
  %369 = vmatprep.subr.mxu0 %v127
  %370 = vmatpush1.msra.mxu0 %v126
  %371 = vmatprep.subr.mxu0 %v131
  %372 = vmatpush1.msra.mxu0 %v130
  %373 = vmatprep.subr.mxu0 %v135
  %374 = vmatpush1.msra.mxu0 %v134
  %375 = vmatprep.subr.mxu0 %v139
  %376 = vmatpush1.msra.mxu0 %v138
  %377 = vmatprep.subr.mxu0 %v143
  %378 = vmatpush1.msra.mxu0 %v142
  %379 = vmatprep.mubr.f32.mxu0 %v168
  %380 = vmatmul.mubr.f32.gmra.mrb[0].mxu0 %v14
  %v381 = vpop.f32.mrb[0].mxu0
  %v382 = vadd.f32 %v164, %v381
  %v383 = vpop.f32.mrb[0].mxu0
  %v384 = vadd.f32 %v164, %v383
  %385 = vdwg.mxu0
  %386 = vmatprep.subr.mxu0 %v147
  %387 = vmatpush1.msra.mxu0 %v146
  %388 = vmatprep.subr.mxu0 %v151
  %389 = vmatpush1.msra.mxu0 %v150
  %390 = vmatprep.subr.mxu0 %v155
  %391 = vmatpush1.msra.mxu0 %v154
  %392 = vmatprep.subr.mxu0 %v159
  %393 = vmatpush1.msra.mxu0 %v158
  %394 = vmatprep.subr.mxu0 0.0
  %395 = vmatpush1.msra.mxu0 0.0
  %396 = vmatprep.subr.mxu0 0.0
  %397 = vmatpush1.msra.mxu0 0.0
  %398 = vmatprep.subr.mxu0 0.0
  %399 = vmatpush1.msra.mxu0 0.0
  %400 = vmatprep.subr.mxu0 0.0
  %401 = vmatpush1.msra.mxu0 0.0
  %402 = vmatprep.subr.mxu0 0.0
  %403 = vmatpush1.msra.mxu0 0.0
  %404 = vmatprep.subr.mxu0 0.0
  %405 = vmatpush1.msra.mxu0 0.0
  %406 = vmatprep.subr.mxu0 0.0
  %407 = vmatpush1.msra.mxu0 0.0
  %408 = vmatprep.subr.mxu0 0.0
  %409 = vmatpush1.msra.mxu0 0.0
  %410 = vmatprep.subr.mxu0 0.0
  %411 = vmatpush1.msra.mxu0 0.0
  %412 = vmatprep.subr.mxu0 0.0
  %413 = vmatpush1.msra.mxu0 0.0
  %414 = vmatprep.subr.mxu0 0.0
  %415 = vmatpush1.msra.mxu0 0.0
  %416 = vmatprep.subr.mxu0 0.0
  %417 = vmatpush1.msra.mxu0 0.0
  %418 = vmatprep.subr.mxu0 0.0
  %419 = vmatpush1.msra.mxu0 0.0
  %420 = vmatprep.subr.mxu0 0.0
  %421 = vmatpush1.msra.mxu0 0.0
  %422 = vmatprep.subr.mxu0 0.0
  %423 = vmatpush1.msra.mxu0 0.0
  %424 = vmatprep.subr.mxu0 0.0
  %425 = vmatpush1.msra.mxu0 0.0
  %426 = vmatprep.subr.mxu0 0.0
  %427 = vmatpush1.msra.mxu0 0.0
  %428 = vmatprep.subr.mxu0 0.0
  %429 = vmatpush1.msra.mxu0 0.0
  %430 = vmatprep.subr.mxu0 0.0
  %431 = vmatpush1.msra.mxu0 0.0
  %432 = vmatprep.subr.mxu0 0.0
  %433 = vmatpush1.msra.mxu0 0.0
  %434 = vmatprep.subr.mxu0 0.0
  %435 = vmatpush1.msra.mxu0 0.0
  %436 = vmatprep.subr.mxu0 0.0
  %437 = vmatpush1.msra.mxu0 0.0
  %438 = vmatprep.subr.mxu0 0.0
  %439 = vmatpush1.msra.mxu0 0.0
  %440 = vmatprep.subr.mxu0 0.0
  %441 = vmatpush1.msra.mxu0 0.0
  %442 = vmatprep.subr.mxu0 0.0
  %443 = vmatpush1.msra.mxu0 0.0
  %444 = vmatprep.subr.mxu0 0.0
  %445 = vmatpush1.msra.mxu0 0.0
  %446 = vmatprep.subr.mxu0 0.0
  %447 = vmatpush1.msra.mxu0 0.0
  %448 = vmatprep.subr.mxu0 0.0
  %449 = vmatpush1.msra.mxu0 0.0
  %450 = vmatprep.mubr.f32.mxu0 0.0
  %451 = vmatmul.mubr.f32.gmra.mrb[0].mxu0 %v171
  %v452 = vpop.f32.mrb[0].mxu0
  %v453 = vadd.f32 %v382, %v452
  %v454 = vpop.f32.mrb[0].mxu0
  %v455 = vadd.f32 %v384, %v454
  %456 = vdwg.mxu0
  %v461 = vcombine.low %v311, %v313
  %v462 = vcombine.low %v453, %v455
  %465 = vst [vmem:[%s3] sm:$0xff] %v461
  %466 = vst [vmem:[%s3 + $0x8] sm:$0xff] %v462
  // Predicated region
  $region14: #{ff_gauss_vae_forward.13} parent=0 // pred_check
    _
  $region15: #{ff_gauss_vae_forward.13} parent=0 // pred_check_branch
    %468 = sbr.rel (0) target = $region17
  $region16: #{ff_gauss_vae_forward.13} parent=0 // pred_region
    _
  $region17: #{ff_gauss_vae_forward.13} parent=0 // pred_fallthru
    _
  // Predicated region
  $region18: #{ff_gauss_vae_forward.13} parent=0 // pred_check
    _
  $region19: #{ff_gauss_vae_forward.13} parent=0 // pred_check_branch
    %470 = sbr.rel (0) target = $region21
  $region20: #{ff_gauss_vae_forward.13} parent=0 // pred_region
    _
  $region21: #{ff_gauss_vae_forward.13} parent=0 // pred_fallthru
    _

</llo_original>
